<compile_context>
chip_gen: v7x
topology: tpu7x:2x2x1
jax: 0.10.0
libtpu: 0.0.40
codegen_flags: <defaults>
</compile_context>

<pallas_src>
import functools

import jax
import jax.numpy as jnp
from jax.experimental import pallas as pl
from jax.experimental.pallas import tpu as pltpu


def _round_up(x, m):
    return ((x + m - 1) // m) * m


# --------------------------------------------------------------------------
# Fused path: everything resident in VMEM, single kernel invocation.
# --------------------------------------------------------------------------
def _fused_attention_kernel(q_ref, keys_ref, w_ref, b_ref, o_ref):
    """q_ref [S, D], keys_ref [K, S, D], w_ref [1, D], b_ref [1, 1] (SMEM),
    o_ref [S, D].  Natural layout; keys are read from HBM exactly once."""
    q = q_ref[...].astype(jnp.float32)                              # [S, D]
    num_keys = keys_ref.shape[0]

    # scores_k[d] = sum_s q[s, d] * key_k[s, d].  Static per-key loop keeps
    # only one [S, D] f32 key copy live at a time.
    score_rows = []
    for k in range(num_keys):
        kt = keys_ref[k].astype(jnp.float32)                        # [S, D]
        score_rows.append(jnp.sum(q * kt, axis=0, keepdims=True))   # [1, D]
    scores = jnp.concatenate(score_rows, axis=0)                    # [K, D]

    # Per-key min/max normalisation over D, nn.Linear(D, 1), softmax over K.
    mx = jnp.max(scores, axis=1, keepdims=True)                     # [K, 1]
    mn = jnp.min(scores, axis=1, keepdims=True)                     # [K, 1]
    norm = (scores - mn) / (mx - mn + 1e-6)                         # [K, D]
    w_row = w_ref[...].astype(jnp.float32)                          # [1, D]
    logits = jnp.sum(norm * w_row, axis=1, keepdims=True) + b_ref[0, 0]   # [K, 1]
    m = jnp.max(logits, axis=0, keepdims=True)
    e = jnp.exp(logits - m)
    wts = e / jnp.sum(e, axis=0, keepdims=True)                     # [K, 1]

    # Weighted sum of (still-resident) keys + residual.
    acc = q
    for k in range(num_keys):
        acc = acc + wts[k:k + 1, 0:1] * keys_ref[k].astype(jnp.float32)
    o_ref[...] = acc.astype(o_ref.dtype)


# --------------------------------------------------------------------------
# Tiled two-pass fallback for S too large to keep keys resident in VMEM.
# --------------------------------------------------------------------------
def _scores_kernel(q_ref, keys_ref, w_ref, b_ref, wts_ref, acc_ref):
    """Pass 1: accumulate per-position partial products over S-tiles into a
    persistent scratch; do the single cross-sublane reduce + Linear + softmax
    once in the final-tile branch."""
    i = pl.program_id(0)

    @pl.when(i == 0)
    def _init():
        acc_ref[...] = jnp.zeros_like(acc_ref)

    q = q_ref[...].astype(jnp.float32)                              # [ts, D]
    num_keys = keys_ref.shape[0]
    # Hot loop: pure VPU mul+add (no per-tile XLU reduce, no 1-lane RMW).
    for k in range(num_keys):
        acc_ref[k] += q * keys_ref[k].astype(jnp.float32)           # [ts, D]

    # NOTE: wts_ref has a constant index_map, so its HBM write-back happens
    # exactly once after the final grid step; it is only assigned here.
    @pl.when(i == pl.num_programs(0) - 1)
    def _finalize():
        rows = []
        for k in range(num_keys):
            rows.append(jnp.sum(acc_ref[k], axis=0, keepdims=True))  # [1, D]
        scores = jnp.concatenate(rows, axis=0)                       # [K, D]
        mx = jnp.max(scores, axis=1, keepdims=True)
        mn = jnp.min(scores, axis=1, keepdims=True)
        norm = (scores - mn) / (mx - mn + 1e-6)                      # [K, D]
        w_row = w_ref[...].astype(jnp.float32)                       # [1, D]
        logits = jnp.sum(norm * w_row, axis=1, keepdims=True) + b_ref[0, 0]  # [K,1]
        m = jnp.max(logits, axis=0, keepdims=True)
        e = jnp.exp(logits - m)
        wts_ref[...] = e / jnp.sum(e, axis=0, keepdims=True)         # [K, 1]


def _weighted_sum_kernel(wts_ref, q_ref, keys_ref, o_ref):
    """Pass 2: out = sum_k w_k * key_k + q, tiled over S ("parallel" axis)."""
    acc = q_ref[...].astype(jnp.float32)                             # [ts, D]
    for k in range(keys_ref.shape[0]):
        acc = acc + wts_ref[k, 0] * keys_ref[k].astype(jnp.float32)
    o_ref[...] = acc.astype(o_ref.dtype)


# --------------------------------------------------------------------------
# Wrapper
# --------------------------------------------------------------------------
_FUSED_VMEM_LIMIT = 48 * 1024 * 1024     # raised scoped VMEM for the fused call
_RESIDENT_BUDGET = 24 * 1024 * 1024      # conservative (fits v7x 64 MiB physical)


def _fused_vmem_estimate(S, D, K, itemsize):
    io = (K + 2) * S * D * itemsize       # q + keys + out in input dtype
    temps = 4 * S * D * 4                 # f32 working copies / accumulator
    return io + temps


def attention_module(query, keys, w, b, *, tile_s=2048, force_tiled=False):
    """AttentionModule forward.

    query: [S, D]    (W_0)
    keys:  [K, S, D] (stacked conv_results)
    w:     [1, D]    (nn.Linear(D, 1).weight)
    b:     [1, 1]    (nn.Linear(D, 1).bias)
    returns [S, D]   (fina_atten_rep)
    """
    S, D = query.shape
    K = keys.shape[0]
    w_row = jnp.reshape(w, (1, D)).astype(jnp.float32)
    b_s = jnp.reshape(b, (1, 1)).astype(jnp.float32)

    use_fused = (not force_tiled) and (
        _fused_vmem_estimate(S, D, K, query.dtype.itemsize) <= _RESIDENT_BUDGET)

    if use_fused:
        # Single fused call, whole arrays resident in VMEM, keys read once.
        # TODO(synk): for very large resident S on v7x, split S across the two
        # TensorCores (core_map) with a tiny cross-core score combine.
        return pl.pallas_call(
            _fused_attention_kernel,
            out_shape=jax.ShapeDtypeStruct((S, D), query.dtype),
            in_specs=[
                pl.BlockSpec(memory_space=pltpu.MemorySpace.VMEM),   # q
                pl.BlockSpec(memory_space=pltpu.MemorySpace.VMEM),   # keys
                pl.BlockSpec(memory_space=pltpu.MemorySpace.VMEM),   # w
                pl.BlockSpec(memory_space=pltpu.MemorySpace.SMEM),   # b
            ],
            out_specs=pl.BlockSpec(memory_space=pltpu.MemorySpace.VMEM),
            compiler_params=pltpu.CompilerParams(
                vmem_limit_bytes=_FUSED_VMEM_LIMIT),
        )(query, keys, w_row, b_s)

    # ---- tiled two-pass fallback (large S), natural [.., S, D] layout ----
    assert tile_s % 8 == 0
    ts = min(tile_s, _round_up(S, 8))
    s_pad = _round_up(S, ts)
    n_tiles = s_pad // ts
    q_p, keys_p = query, keys
    if s_pad != S:
        pad = s_pad - S
        q_p = jnp.pad(query, ((0, pad), (0, 0)))           # zeros: no effect on scores
        keys_p = jnp.pad(keys, ((0, 0), (0, pad), (0, 0)))

    # pass 1: softmax weights [K, 1]
    wts = pl.pallas_call(
        _scores_kernel,
        out_shape=jax.ShapeDtypeStruct((K, 1), jnp.float32),
        grid=(n_tiles,),
        in_specs=[
            pl.BlockSpec((ts, D), lambda i: (i, 0)),
            pl.BlockSpec((K, ts, D), lambda i: (0, i, 0)),
            pl.BlockSpec((1, D), lambda i: (0, 0)),
            pl.BlockSpec(memory_space=pltpu.MemorySpace.SMEM),
        ],
        out_specs=pl.BlockSpec((K, 1), lambda i: (0, 0)),
        scratch_shapes=[pltpu.VMEM((K, ts, D), jnp.float32)],
        compiler_params=pltpu.CompilerParams(
            dimension_semantics=("arbitrary",)),
    )(q_p, keys_p, w_row, b_s)

    # pass 2: weighted sum of keys + residual
    out_p = pl.pallas_call(
        _weighted_sum_kernel,
        out_shape=jax.ShapeDtypeStruct((s_pad, D), query.dtype),
        grid=(n_tiles,),
        in_specs=[
            pl.BlockSpec(memory_space=pltpu.MemorySpace.SMEM),
            pl.BlockSpec((ts, D), lambda i: (i, 0)),
            pl.BlockSpec((K, ts, D), lambda i: (0, i, 0)),
        ],
        out_specs=pl.BlockSpec((ts, D), lambda i: (i, 0)),
        compiler_params=pltpu.CompilerParams(
            dimension_semantics=("parallel",)),
    )(wts, q_p, keys_p)

    return out_p[:S]


def attention_module_ref(query, keys, w, b):
    """Pure-JAX reference mirroring the PyTorch AttentionModule.forward."""
    scores = jnp.sum(query[None] * keys, axis=1)              # [K, D]
    mx = jnp.max(scores, axis=1, keepdims=True)
    mn = jnp.min(scores, axis=1, keepdims=True)
    norm = (scores - mn) / (mx - mn + 1e-6)
    logits = norm @ w[0] + b[0, 0]                            # [K]
    weights = jax.nn.softmax(logits)
    rep = jnp.sum(keys * weights[:, None, None], axis=0)      # [S, D]
    return rep + query


if __name__ == "__main__":
    # S = #nodes, D = hidden_dim (nn.Linear input_dim), K = cutoff-1 conv outputs
    S, D, K = 1000, 32, 4

    key0 = jax.random.PRNGKey(0)
    kq, kk, kw, kb = jax.random.split(key0, 4)

    query = jax.random.normal(kq, (S, D), dtype=jnp.float32)    # W_0
    keys = jax.random.normal(kk, (K, S, D), dtype=jnp.float32)  # conv_results

    # nn.Linear(D, 1) init: U(-1/sqrt(D), 1/sqrt(D)) for weight and bias.
    bound = 1.0 / (D ** 0.5)
    w = jax.random.uniform(kw, (1, D), jnp.float32, -bound, bound)
    b = jax.random.uniform(kb, (1, 1), jnp.float32, -bound, bound)

    ref = attention_module_ref(query, keys, w, b)

    # Default path: fused, keys resident in VMEM.
    attn_fused = jax.jit(attention_module)
    out = jax.block_until_ready(attn_fused(query, keys, w, b))
    assert out.shape == (S, D)
    assert jnp.allclose(out, ref, atol=2e-4, rtol=2e-4), "fused mismatch vs reference"

    # Also exercise the tiled fallback (multi-tile, with S padding).
    attn_tiled = jax.jit(functools.partial(attention_module,
                                           force_tiled=True, tile_s=256))
    out_t = jax.block_until_ready(attn_tiled(query, keys, w, b))
    assert out_t.shape == (S, D)
    assert jnp.allclose(out_t, ref, atol=2e-4, rtol=2e-4), "tiled mismatch vs reference"

    print("KERNEL_OK")
</pallas_src>

<mosaic_0001>
module attributes {stable_mosaic.version = 11 : i64} {
  func.func @_fused_attention_kernel(%arg0: memref<1000x32xf32, #tpu.memory_space<vmem>>, %arg1: memref<4x1000x32xf32, #tpu.memory_space<vmem>>, %arg2: memref<1x32xf32, #tpu.memory_space<vmem>>, %arg3: memref<1x1xf32, #tpu.memory_space<smem>>, %arg4: memref<1000x32xf32, #tpu.memory_space<vmem>>) attributes {dimension_semantics = [], scalar_prefetch = 0 : i64, scratch_operands = 0 : i64, tpu.core_type = #tpu.core_type<tc>} {
    %c0 = arith.constant 0 : index
    %c0_0 = arith.constant 0 : index
    %0 = vector.load %arg0[%c0, %c0_0] : memref<1000x32xf32, #tpu.memory_space<vmem>>, vector<1000x32xf32>
    %c0_1 = arith.constant 0 : index
    %c0_2 = arith.constant 0 : index
    %c0_3 = arith.constant 0 : index
    %1 = vector.load %arg1[%c0_1, %c0_2, %c0_3] : memref<4x1000x32xf32, #tpu.memory_space<vmem>>, vector<1x1000x32xf32>
    %2 = vector.shape_cast %1 : vector<1x1000x32xf32> to vector<1000x32xf32>
    %3 = arith.mulf %0, %2 : vector<1000x32xf32>
    %cst = arith.constant dense<0.000000e+00> : vector<32xf32>
    %4 = vector.multi_reduction <add>, %3, %cst [0] : vector<1000x32xf32> to vector<32xf32>
    %5 = vector.shape_cast %4 : vector<32xf32> to vector<1x32xf32>
    %c1 = arith.constant 1 : index
    %c0_4 = arith.constant 0 : index
    %c0_5 = arith.constant 0 : index
    %6 = vector.load %arg1[%c1, %c0_4, %c0_5] : memref<4x1000x32xf32, #tpu.memory_space<vmem>>, vector<1x1000x32xf32>
    %7 = vector.shape_cast %6 : vector<1x1000x32xf32> to vector<1000x32xf32>
    %8 = arith.mulf %0, %7 : vector<1000x32xf32>
    %cst_6 = arith.constant dense<0.000000e+00> : vector<32xf32>
    %9 = vector.multi_reduction <add>, %8, %cst_6 [0] : vector<1000x32xf32> to vector<32xf32>
    %10 = vector.shape_cast %9 : vector<32xf32> to vector<1x32xf32>
    %c2 = arith.constant 2 : index
    %c0_7 = arith.constant 0 : index
    %c0_8 = arith.constant 0 : index
    %11 = vector.load %arg1[%c2, %c0_7, %c0_8] : memref<4x1000x32xf32, #tpu.memory_space<vmem>>, vector<1x1000x32xf32>
    %12 = vector.shape_cast %11 : vector<1x1000x32xf32> to vector<1000x32xf32>
    %13 = arith.mulf %0, %12 : vector<1000x32xf32>
    %cst_9 = arith.constant dense<0.000000e+00> : vector<32xf32>
    %14 = vector.multi_reduction <add>, %13, %cst_9 [0] : vector<1000x32xf32> to vector<32xf32>
    %15 = vector.shape_cast %14 : vector<32xf32> to vector<1x32xf32>
    %c3 = arith.constant 3 : index
    %c0_10 = arith.constant 0 : index
    %c0_11 = arith.constant 0 : index
    %16 = vector.load %arg1[%c3, %c0_10, %c0_11] : memref<4x1000x32xf32, #tpu.memory_space<vmem>>, vector<1x1000x32xf32>
    %17 = vector.shape_cast %16 : vector<1x1000x32xf32> to vector<1000x32xf32>
    %18 = arith.mulf %0, %17 : vector<1000x32xf32>
    %cst_12 = arith.constant dense<0.000000e+00> : vector<32xf32>
    %19 = vector.multi_reduction <add>, %18, %cst_12 [0] : vector<1000x32xf32> to vector<32xf32>
    %20 = vector.shape_cast %19 : vector<32xf32> to vector<1x32xf32>
    %21 = tpu.concatenate %5, %10, %15, %20 in 0 : vector<1x32xf32>, vector<1x32xf32>, vector<1x32xf32>, vector<1x32xf32> -> vector<4x32xf32>
    %cst_13 = arith.constant dense<0xFF800000> : vector<4xf32>
    %22 = vector.multi_reduction <maximumf>, %21, %cst_13 [1] : vector<4x32xf32> to vector<4xf32>
    %23 = vector.shape_cast %22 : vector<4xf32> to vector<4x1xf32>
    %cst_14 = arith.constant dense<0x7F800000> : vector<4xf32>
    %24 = vector.multi_reduction <minimumf>, %21, %cst_14 [1] : vector<4x32xf32> to vector<4xf32>
    %25 = vector.shape_cast %24 : vector<4xf32> to vector<4x1xf32>
    %26 = vector.broadcast %25 : vector<4x1xf32> to vector<4x32xf32>
    %27 = arith.subf %21, %26 : vector<4x32xf32>
    %28 = arith.subf %23, %25 : vector<4x1xf32>
    %cst_15 = arith.constant 9.99999997E-7 : f32
    %29 = vector.broadcast %cst_15 : f32 to vector<4x1xf32>
    %30 = arith.addf %28, %29 : vector<4x1xf32>
    %31 = vector.broadcast %30 : vector<4x1xf32> to vector<4x32xf32>
    %32 = arith.divf %27, %31 : vector<4x32xf32>
    %c0_16 = arith.constant 0 : index
    %c0_17 = arith.constant 0 : index
    %33 = vector.load %arg2[%c0_16, %c0_17] : memref<1x32xf32, #tpu.memory_space<vmem>>, vector<1x32xf32>
    %34 = vector.broadcast %33 : vector<1x32xf32> to vector<4x32xf32>
    %35 = arith.mulf %32, %34 : vector<4x32xf32>
    %cst_18 = arith.constant dense<0.000000e+00> : vector<4xf32>
    %36 = vector.multi_reduction <add>, %35, %cst_18 [1] : vector<4x32xf32> to vector<4xf32>
    %37 = vector.shape_cast %36 : vector<4xf32> to vector<4x1xf32>
    %c0_19 = arith.constant 0 : index
    %c0_20 = arith.constant 0 : index
    %38 = memref.load %arg3[%c0_19, %c0_20] : memref<1x1xf32, #tpu.memory_space<smem>>
    %39 = vector.broadcast %38 : f32 to vector<4x1xf32>
    %40 = arith.addf %37, %39 : vector<4x1xf32>
    %cst_21 = arith.constant dense<0xFF800000> : vector<1xf32>
    %41 = vector.multi_reduction <maximumf>, %40, %cst_21 [0] : vector<4x1xf32> to vector<1xf32>
    %42 = vector.shape_cast %41 : vector<1xf32> to vector<1x1xf32>
    %43 = vector.broadcast %42 : vector<1x1xf32> to vector<4x1xf32>
    %44 = arith.subf %40, %43 : vector<4x1xf32>
    %45 = math.exp %44 : vector<4x1xf32>
    %cst_22 = arith.constant dense<0.000000e+00> : vector<1xf32>
    %46 = vector.multi_reduction <add>, %45, %cst_22 [0] : vector<4x1xf32> to vector<1xf32>
    %47 = vector.shape_cast %46 : vector<1xf32> to vector<1x1xf32>
    %48 = vector.broadcast %47 : vector<1x1xf32> to vector<4x1xf32>
    %49 = arith.divf %45, %48 : vector<4x1xf32>
    %50 = vector.extract_strided_slice %49 {offsets = [0, 0], sizes = [1, 1], strides = [1, 1]} : vector<4x1xf32> to vector<1x1xf32>
    %c0_23 = arith.constant 0 : index
    %c0_24 = arith.constant 0 : index
    %c0_25 = arith.constant 0 : index
    %51 = vector.load %arg1[%c0_23, %c0_24, %c0_25] : memref<4x1000x32xf32, #tpu.memory_space<vmem>>, vector<1x1000x32xf32>
    %52 = vector.shape_cast %51 : vector<1x1000x32xf32> to vector<1000x32xf32>
    %53 = vector.broadcast %50 : vector<1x1xf32> to vector<1000x32xf32>
    %54 = arith.mulf %53, %52 : vector<1000x32xf32>
    %55 = arith.addf %0, %54 : vector<1000x32xf32>
    %56 = vector.extract_strided_slice %49 {offsets = [1, 0], sizes = [1, 1], strides = [1, 1]} : vector<4x1xf32> to vector<1x1xf32>
    %c1_26 = arith.constant 1 : index
    %c0_27 = arith.constant 0 : index
    %c0_28 = arith.constant 0 : index
    %57 = vector.load %arg1[%c1_26, %c0_27, %c0_28] : memref<4x1000x32xf32, #tpu.memory_space<vmem>>, vector<1x1000x32xf32>
    %58 = vector.shape_cast %57 : vector<1x1000x32xf32> to vector<1000x32xf32>
    %59 = vector.broadcast %56 : vector<1x1xf32> to vector<1000x32xf32>
    %60 = arith.mulf %59, %58 : vector<1000x32xf32>
    %61 = arith.addf %55, %60 : vector<1000x32xf32>
    %62 = vector.extract_strided_slice %49 {offsets = [2, 0], sizes = [1, 1], strides = [1, 1]} : vector<4x1xf32> to vector<1x1xf32>
    %c2_29 = arith.constant 2 : index
    %c0_30 = arith.constant 0 : index
    %c0_31 = arith.constant 0 : index
    %63 = vector.load %arg1[%c2_29, %c0_30, %c0_31] : memref<4x1000x32xf32, #tpu.memory_space<vmem>>, vector<1x1000x32xf32>
    %64 = vector.shape_cast %63 : vector<1x1000x32xf32> to vector<1000x32xf32>
    %65 = vector.broadcast %62 : vector<1x1xf32> to vector<1000x32xf32>
    %66 = arith.mulf %65, %64 : vector<1000x32xf32>
    %67 = arith.addf %61, %66 : vector<1000x32xf32>
    %68 = vector.extract_strided_slice %49 {offsets = [3, 0], sizes = [1, 1], strides = [1, 1]} : vector<4x1xf32> to vector<1x1xf32>
    %c3_32 = arith.constant 3 : index
    %c0_33 = arith.constant 0 : index
    %c0_34 = arith.constant 0 : index
    %69 = vector.load %arg1[%c3_32, %c0_33, %c0_34] : memref<4x1000x32xf32, #tpu.memory_space<vmem>>, vector<1x1000x32xf32>
    %70 = vector.shape_cast %69 : vector<1x1000x32xf32> to vector<1000x32xf32>
    %71 = vector.broadcast %68 : vector<1x1xf32> to vector<1000x32xf32>
    %72 = arith.mulf %71, %70 : vector<1000x32xf32>
    %73 = arith.addf %67, %72 : vector<1000x32xf32>
    %c0_35 = arith.constant 0 : index
    %c0_36 = arith.constant 0 : index
    %74 = vector.load %arg4[%c0_35, %c0_36] : memref<1000x32xf32, #tpu.memory_space<vmem>>, vector<1000x32xf32>
    tpu.vector_store %arg4[%c0_35, %c0_36], %73 {strides = array<i32>} : memref<1000x32xf32, #tpu.memory_space<vmem>>, vector<1000x32xf32>,
    return
  }
}

</mosaic_0001>

<llo_original>
// kernel: attention_module.1
$region0: #{attention_module.1}
  #allocation0 [shape = 'u32[]', space=smem, size = 0x4, offset = 0x4, fixed_abs, tag = 'smem constant byte address 0x4 - core index']
  #allocation1 [shape = 'u32[144,128]{1,0:T(1,128)}', space=vmem, size = 0x12000, scoped, tag = 'internal scratch']
  #allocation2 [shape = 'f32[1,1]{1,0:T(1,128)S(6)}', space=smem, size = 0x200, scoped, tag = 'scoped memory for attention_module.1']
  %s0 = inlined_call_operand.vmem [shape: f32[1000,32], index: 0, kind: input, shape index: {}]
  %s1 = inlined_call_operand.vmem [shape: f32[4,1000,32], index: 1, kind: input, shape index: {}]
  %s2 = inlined_call_operand.vmem [shape: f32[1,32], index: 2, kind: input, shape index: {}]
  %s3 = inlined_call_operand.<no memory space> [shape: f32[1,1], index: 3, kind: input, shape index: {}]
  %s4 = inlined_call_operand.vmem [shape: f32[1000,32], index: 4, kind: output, shape index: {}]
  %s5 = sld [smem:[#allocation0]]
  $region26: #{attention_module.1} parent=0
    _
  %s7 = ssub.s32 1, %s5
  %s8 = scalar_select 0, %s7, %s5
  %9 = sst [smem:[#allocation2]] %s3
  // Predicated region
  $region2: #{attention_module.1} parent=0 // pred_check
    _
  $region3: #{attention_module.1} parent=0 // pred_check_branch
    %11 = sbr.rel (0) target = $region5
  $region4: #{attention_module.1} parent=0 // pred_region
    _
  $region5: #{attention_module.1} parent=0 // pred_fallthru
    _
  // Predicated region
  $region6: #{attention_module.1} parent=0 // pred_check
    _
  $region7: #{attention_module.1} parent=0 // pred_check_branch
    %13 = sbr.rel (0) target = $region9
  $region8: #{attention_module.1} parent=0 // pred_region
    _
  $region9: #{attention_module.1} parent=0 // pred_fallthru
    _
  // Predicated region
  $region10: #{attention_module.1} parent=0 // pred_check
    _
  $region11: #{attention_module.1} parent=0 // pred_check_branch
    %15 = sbr.rel (0) target = $region13
  $region12: #{attention_module.1} parent=0 // pred_region
    _
  $region13: #{attention_module.1} parent=0 // pred_fallthru
    _
  // Predicated region
  $region14: #{attention_module.1} parent=0 // pred_check
    _
  $region15: #{attention_module.1} parent=0 // pred_check_branch
    %17 = sbr.rel (0) target = $region17
  $region16: #{attention_module.1} parent=0 // pred_region
    _
  $region17: #{attention_module.1} parent=0 // pred_fallthru
    _
  %v18 = vld [vmem:[%s0] sm:$0xff]
  %v19 = vld [vmem:[%s0 + $0x8] sm:$0xff]
  %v20 = vld [vmem:[%s0 + $0x10] sm:$0xff]
  %v21 = vld [vmem:[%s0 + $0x18] sm:$0xff]
  %v22 = vld [vmem:[%s0 + $0x20] sm:$0xff]
  %v23 = vld [vmem:[%s0 + $0x28] sm:$0xff]
  %v24 = vld [vmem:[%s0 + $0x30] sm:$0xff]
  %v25 = vld [vmem:[%s0 + $0x38] sm:$0xff]
  %v26 = vld [vmem:[%s0 + $0x40] sm:$0xff]
  %v27 = vld [vmem:[%s0 + $0x48] sm:$0xff]
  %v28 = vld [vmem:[%s0 + $0x50] sm:$0xff]
  %v29 = vld [vmem:[%s0 + $0x58] sm:$0xff]
  %v30 = vld [vmem:[%s0 + $0x60] sm:$0xff]
  %v31 = vld [vmem:[%s0 + $0x68] sm:$0xff]
  %v32 = vld [vmem:[%s0 + $0x70] sm:$0xff]
  %v33 = vld [vmem:[%s0 + $0x78] sm:$0xff]
  %v34 = vld [vmem:[%s0 + $0x80] sm:$0xff]
  %v35 = vld [vmem:[%s0 + $0x88] sm:$0xff]
  %v36 = vld [vmem:[%s0 + $0x90] sm:$0xff]
  %v37 = vld [vmem:[%s0 + $0x98] sm:$0xff]
  %v38 = vld [vmem:[%s0 + $0xa0] sm:$0xff]
  %v39 = vld [vmem:[%s0 + $0xa8] sm:$0xff]
  %v40 = vld [vmem:[%s0 + $0xb0] sm:$0xff]
  %v41 = vld [vmem:[%s0 + $0xb8] sm:$0xff]
  %v42 = vld [vmem:[%s0 + $0xc0] sm:$0xff]
  %v43 = vld [vmem:[%s0 + $0xc8] sm:$0xff]
  %v44 = vld [vmem:[%s0 + $0xd0] sm:$0xff]
  %v45 = vld [vmem:[%s0 + $0xd8] sm:$0xff]
  %v46 = vld [vmem:[%s0 + $0xe0] sm:$0xff]
  %v47 = vld [vmem:[%s0 + $0xe8] sm:$0xff]
  %v48 = vld [vmem:[%s0 + $0xf0] sm:$0xff]
  %v49 = vld [vmem:[%s0 + $0xf8] sm:$0xff]
  %v50 = vld [vmem:[%s0 + $0x100] sm:$0xff]
  %v51 = vld [vmem:[%s0 + $0x108] sm:$0xff]
  %v52 = vld [vmem:[%s0 + $0x110] sm:$0xff]
  %v53 = vld [vmem:[%s0 + $0x118] sm:$0xff]
  %v54 = vld [vmem:[%s0 + $0x120] sm:$0xff]
  %v55 = vld [vmem:[%s0 + $0x128] sm:$0xff]
  %v56 = vld [vmem:[%s0 + $0x130] sm:$0xff]
  %v57 = vld [vmem:[%s0 + $0x138] sm:$0xff]
  %v58 = vld [vmem:[%s0 + $0x140] sm:$0xff]
  %v59 = vld [vmem:[%s0 + $0x148] sm:$0xff]
  %v60 = vld [vmem:[%s0 + $0x150] sm:$0xff]
  %v61 = vld [vmem:[%s0 + $0x158] sm:$0xff]
  %v62 = vld [vmem:[%s0 + $0x160] sm:$0xff]
  %v63 = vld [vmem:[%s0 + $0x168] sm:$0xff]
  %v64 = vld [vmem:[%s0 + $0x170] sm:$0xff]
  %v65 = vld [vmem:[%s0 + $0x178] sm:$0xff]
  %v66 = vld [vmem:[%s0 + $0x180] sm:$0xff]
  %v67 = vld [vmem:[%s0 + $0x188] sm:$0xff]
  %v68 = vld [vmem:[%s0 + $0x190] sm:$0xff]
  %v69 = vld [vmem:[%s0 + $0x198] sm:$0xff]
  %v70 = vld [vmem:[%s0 + $0x1a0] sm:$0xff]
  %v71 = vld [vmem:[%s0 + $0x1a8] sm:$0xff]
  %v72 = vld [vmem:[%s0 + $0x1b0] sm:$0xff]
  %v73 = vld [vmem:[%s0 + $0x1b8] sm:$0xff]
  %v74 = vld [vmem:[%s0 + $0x1c0] sm:$0xff]
  %v75 = vld [vmem:[%s0 + $0x1c8] sm:$0xff]
  %v76 = vld [vmem:[%s0 + $0x1d0] sm:$0xff]
  %v77 = vld [vmem:[%s0 + $0x1d8] sm:$0xff]
  %v78 = vld [vmem:[%s0 + $0x1e0] sm:$0xff]
  %v79 = vld [vmem:[%s0 + $0x1e8] sm:$0xff]
  %v80 = vld [vmem:[%s0 + $0x1f0] sm:$0xff]
  %v81 = vld [vmem:[%s0 + $0x1f8] sm:$0xff]
  %v82 = vld [vmem:[%s0 + $0x200] sm:$0xff]
  %v83 = vld [vmem:[%s0 + $0x208] sm:$0xff]
  %v84 = vld [vmem:[%s0 + $0x210] sm:$0xff]
  %v85 = vld [vmem:[%s0 + $0x218] sm:$0xff]
  %v86 = vld [vmem:[%s0 + $0x220] sm:$0xff]
  %v87 = vld [vmem:[%s0 + $0x228] sm:$0xff]
  %v88 = vld [vmem:[%s0 + $0x230] sm:$0xff]
  %v89 = vld [vmem:[%s0 + $0x238] sm:$0xff]
  %v90 = vld [vmem:[%s0 + $0x240] sm:$0xff]
  %v91 = vld [vmem:[%s0 + $0x248] sm:$0xff]
  %v92 = vld [vmem:[%s0 + $0x250] sm:$0xff]
  %v93 = vld [vmem:[%s0 + $0x258] sm:$0xff]
  %v94 = vld [vmem:[%s0 + $0x260] sm:$0xff]
  %v95 = vld [vmem:[%s0 + $0x268] sm:$0xff]
  %v96 = vld [vmem:[%s0 + $0x270] sm:$0xff]
  %v97 = vld [vmem:[%s0 + $0x278] sm:$0xff]
  %v98 = vld [vmem:[%s0 + $0x280] sm:$0xff]
  %v99 = vld [vmem:[%s0 + $0x288] sm:$0xff]
  %v100 = vld [vmem:[%s0 + $0x290] sm:$0xff]
  %v101 = vld [vmem:[%s0 + $0x298] sm:$0xff]
  %v102 = vld [vmem:[%s0 + $0x2a0] sm:$0xff]
  %v103 = vld [vmem:[%s0 + $0x2a8] sm:$0xff]
  %v104 = vld [vmem:[%s0 + $0x2b0] sm:$0xff]
  %v105 = vld [vmem:[%s0 + $0x2b8] sm:$0xff]
  %v106 = vld [vmem:[%s0 + $0x2c0] sm:$0xff]
  %v107 = vld [vmem:[%s0 + $0x2c8] sm:$0xff]
  %v108 = vld [vmem:[%s0 + $0x2d0] sm:$0xff]
  %v109 = vld [vmem:[%s0 + $0x2d8] sm:$0xff]
  %v110 = vld [vmem:[%s0 + $0x2e0] sm:$0xff]
  %v111 = vld [vmem:[%s0 + $0x2e8] sm:$0xff]
  %v112 = vld [vmem:[%s0 + $0x2f0] sm:$0xff]
  %v113 = vld [vmem:[%s0 + $0x2f8] sm:$0xff]
  %v114 = vld [vmem:[%s0 + $0x300] sm:$0xff]
  %v115 = vld [vmem:[%s0 + $0x308] sm:$0xff]
  %v116 = vld [vmem:[%s0 + $0x310] sm:$0xff]
  %v117 = vld [vmem:[%s0 + $0x318] sm:$0xff]
  %v118 = vld [vmem:[%s0 + $0x320] sm:$0xff]
  %v119 = vld [vmem:[%s0 + $0x328] sm:$0xff]
  %v120 = vld [vmem:[%s0 + $0x330] sm:$0xff]
  %v121 = vld [vmem:[%s0 + $0x338] sm:$0xff]
  %v122 = vld [vmem:[%s0 + $0x340] sm:$0xff]
  %v123 = vld [vmem:[%s0 + $0x348] sm:$0xff]
  %v124 = vld [vmem:[%s0 + $0x350] sm:$0xff]
  %v125 = vld [vmem:[%s0 + $0x358] sm:$0xff]
  %v126 = vld [vmem:[%s0 + $0x360] sm:$0xff]
  %v127 = vld [vmem:[%s0 + $0x368] sm:$0xff]
  %v128 = vld [vmem:[%s0 + $0x370] sm:$0xff]
  %v129 = vld [vmem:[%s0 + $0x378] sm:$0xff]
  %v130 = vld [vmem:[%s0 + $0x380] sm:$0xff]
  %v131 = vld [vmem:[%s0 + $0x388] sm:$0xff]
  %v132 = vld [vmem:[%s0 + $0x390] sm:$0xff]
  %v133 = vld [vmem:[%s0 + $0x398] sm:$0xff]
  %v134 = vld [vmem:[%s0 + $0x3a0] sm:$0xff]
  %v135 = vld [vmem:[%s0 + $0x3a8] sm:$0xff]
  %v136 = vld [vmem:[%s0 + $0x3b0] sm:$0xff]
  %v137 = vld [vmem:[%s0 + $0x3b8] sm:$0xff]
  %v138 = vld [vmem:[%s0 + $0x3c0] sm:$0xff]
  %v139 = vld [vmem:[%s0 + $0x3c8] sm:$0xff]
  %v140 = vld [vmem:[%s0 + $0x3d0] sm:$0xff]
  %v141 = vld [vmem:[%s0 + $0x3d8] sm:$0xff]
  %v142 = vld [vmem:[%s0 + $0x3e0] sm:$0xff]
  %v143 = vld [vmem:[%s1] sm:$0xff]
  %v144 = vld [vmem:[%s1 + $0x8] sm:$0xff]
  %v145 = vld [vmem:[%s1 + $0x10] sm:$0xff]
  %v146 = vld [vmem:[%s1 + $0x18] sm:$0xff]
  %v147 = vld [vmem:[%s1 + $0x20] sm:$0xff]
  %v148 = vld [vmem:[%s1 + $0x28] sm:$0xff]
  %v149 = vld [vmem:[%s1 + $0x30] sm:$0xff]
  %v150 = vld [vmem:[%s1 + $0x38] sm:$0xff]
  %v151 = vld [vmem:[%s1 + $0x40] sm:$0xff]
  %v152 = vld [vmem:[%s1 + $0x48] sm:$0xff]
  %v153 = vld [vmem:[%s1 + $0x50] sm:$0xff]
  %v154 = vld [vmem:[%s1 + $0x58] sm:$0xff]
  %v155 = vld [vmem:[%s1 + $0x60] sm:$0xff]
  %v156 = vld [vmem:[%s1 + $0x68] sm:$0xff]
  %v157 = vld [vmem:[%s1 + $0x70] sm:$0xff]
  %v158 = vld [vmem:[%s1 + $0x78] sm:$0xff]
  %v159 = vld [vmem:[%s1 + $0x80] sm:$0xff]
  %v160 = vld [vmem:[%s1 + $0x88] sm:$0xff]
  %v161 = vld [vmem:[%s1 + $0x90] sm:$0xff]
  %v162 = vld [vmem:[%s1 + $0x98] sm:$0xff]
  %v163 = vld [vmem:[%s1 + $0xa0] sm:$0xff]
  %v164 = vld [vmem:[%s1 + $0xa8] sm:$0xff]
  %v165 = vld [vmem:[%s1 + $0xb0] sm:$0xff]
  %v166 = vld [vmem:[%s1 + $0xb8] sm:$0xff]
  %v167 = vld [vmem:[%s1 + $0xc0] sm:$0xff]
  %v168 = vld [vmem:[%s1 + $0xc8] sm:$0xff]
  %v169 = vld [vmem:[%s1 + $0xd0] sm:$0xff]
  %v170 = vld [vmem:[%s1 + $0xd8] sm:$0xff]
  %v171 = vld [vmem:[%s1 + $0xe0] sm:$0xff]
  %v172 = vld [vmem:[%s1 + $0xe8] sm:$0xff]
  %v173 = vld [vmem:[%s1 + $0xf0] sm:$0xff]
  %v174 = vld [vmem:[%s1 + $0xf8] sm:$0xff]
  %v175 = vld [vmem:[%s1 + $0x100] sm:$0xff]
  %v176 = vld [vmem:[%s1 + $0x108] sm:$0xff]
  %v177 = vld [vmem:[%s1 + $0x110] sm:$0xff]
  %v178 = vld [vmem:[%s1 + $0x118] sm:$0xff]
  %v179 = vld [vmem:[%s1 + $0x120] sm:$0xff]
  %v180 = vld [vmem:[%s1 + $0x128] sm:$0xff]
  %v181 = vld [vmem:[%s1 + $0x130] sm:$0xff]
  %v182 = vld [vmem:[%s1 + $0x138] sm:$0xff]
  %v183 = vld [vmem:[%s1 + $0x140] sm:$0xff]
  %v184 = vld [vmem:[%s1 + $0x148] sm:$0xff]
  %v185 = vld [vmem:[%s1 + $0x150] sm:$0xff]
  %v186 = vld [vmem:[%s1 + $0x158] sm:$0xff]
  %v187 = vld [vmem:[%s1 + $0x160] sm:$0xff]
  %v188 = vld [vmem:[%s1 + $0x168] sm:$0xff]
  %v189 = vld [vmem:[%s1 + $0x170] sm:$0xff]
  %v190 = vld [vmem:[%s1 + $0x178] sm:$0xff]
  %v191 = vld [vmem:[%s1 + $0x180] sm:$0xff]
  %v192 = vld [vmem:[%s1 + $0x188] sm:$0xff]
  %v193 = vld [vmem:[%s1 + $0x190] sm:$0xff]
  %v194 = vld [vmem:[%s1 + $0x198] sm:$0xff]
  %v195 = vld [vmem:[%s1 + $0x1a0] sm:$0xff]
  %v196 = vld [vmem:[%s1 + $0x1a8] sm:$0xff]
  %v197 = vld [vmem:[%s1 + $0x1b0] sm:$0xff]
  %v198 = vld [vmem:[%s1 + $0x1b8] sm:$0xff]
  %v199 = vld [vmem:[%s1 + $0x1c0] sm:$0xff]
  %v200 = vld [vmem:[%s1 + $0x1c8] sm:$0xff]
  %v201 = vld [vmem:[%s1 + $0x1d0] sm:$0xff]
  %v202 = vld [vmem:[%s1 + $0x1d8] sm:$0xff]
  %v203 = vld [vmem:[%s1 + $0x1e0] sm:$0xff]
  %v204 = vld [vmem:[%s1 + $0x1e8] sm:$0xff]
  %v205 = vld [vmem:[%s1 + $0x1f0] sm:$0xff]
  %v206 = vld [vmem:[%s1 + $0x1f8] sm:$0xff]
  %v207 = vld [vmem:[%s1 + $0x200] sm:$0xff]
  %v208 = vld [vmem:[%s1 + $0x208] sm:$0xff]
  %v209 = vld [vmem:[%s1 + $0x210] sm:$0xff]
  %v210 = vld [vmem:[%s1 + $0x218] sm:$0xff]
  %v211 = vld [vmem:[%s1 + $0x220] sm:$0xff]
  %v212 = vld [vmem:[%s1 + $0x228] sm:$0xff]
  %v213 = vld [vmem:[%s1 + $0x230] sm:$0xff]
  %v214 = vld [vmem:[%s1 + $0x238] sm:$0xff]
  %v215 = vld [vmem:[%s1 + $0x240] sm:$0xff]
  %v216 = vld [vmem:[%s1 + $0x248] sm:$0xff]
  %v217 = vld [vmem:[%s1 + $0x250] sm:$0xff]
  %v218 = vld [vmem:[%s1 + $0x258] sm:$0xff]
  %v219 = vld [vmem:[%s1 + $0x260] sm:$0xff]
  %v220 = vld [vmem:[%s1 + $0x268] sm:$0xff]
  %v221 = vld [vmem:[%s1 + $0x270] sm:$0xff]
  %v222 = vld [vmem:[%s1 + $0x278] sm:$0xff]
  %v223 = vld [vmem:[%s1 + $0x280] sm:$0xff]
  %v224 = vld [vmem:[%s1 + $0x288] sm:$0xff]
  %v225 = vld [vmem:[%s1 + $0x290] sm:$0xff]
  %v226 = vld [vmem:[%s1 + $0x298] sm:$0xff]
  %v227 = vld [vmem:[%s1 + $0x2a0] sm:$0xff]
  %v228 = vld [vmem:[%s1 + $0x2a8] sm:$0xff]
  %v229 = vld [vmem:[%s1 + $0x2b0] sm:$0xff]
  %v230 = vld [vmem:[%s1 + $0x2b8] sm:$0xff]
  %v231 = vld [vmem:[%s1 + $0x2c0] sm:$0xff]
  %v232 = vld [vmem:[%s1 + $0x2c8] sm:$0xff]
  %v233 = vld [vmem:[%s1 + $0x2d0] sm:$0xff]
  %v234 = vld [vmem:[%s1 + $0x2d8] sm:$0xff]
  %v235 = vld [vmem:[%s1 + $0x2e0] sm:$0xff]
  %v236 = vld [vmem:[%s1 + $0x2e8] sm:$0xff]
  %v237 = vld [vmem:[%s1 + $0x2f0] sm:$0xff]
  %v238 = vld [vmem:[%s1 + $0x2f8] sm:$0xff]
  %v239 = vld [vmem:[%s1 + $0x300] sm:$0xff]
  %v240 = vld [vmem:[%s1 + $0x308] sm:$0xff]
  %v241 = vld [vmem:[%s1 + $0x310] sm:$0xff]
  %v242 = vld [vmem:[%s1 + $0x318] sm:$0xff]
  %v243 = vld [vmem:[%s1 + $0x320] sm:$0xff]
  %v244 = vld [vmem:[%s1 + $0x328] sm:$0xff]
  %v245 = vld [vmem:[%s1 + $0x330] sm:$0xff]
  %v246 = vld [vmem:[%s1 + $0x338] sm:$0xff]
  %v247 = vld [vmem:[%s1 + $0x340] sm:$0xff]
  %v248 = vld [vmem:[%s1 + $0x348] sm:$0xff]
  %v249 = vld [vmem:[%s1 + $0x350] sm:$0xff]
  %v250 = vld [vmem:[%s1 + $0x358] sm:$0xff]
  %v251 = vld [vmem:[%s1 + $0x360] sm:$0xff]
  %v252 = vld [vmem:[%s1 + $0x368] sm:$0xff]
  %v253 = vld [vmem:[%s1 + $0x370] sm:$0xff]
  %v254 = vld [vmem:[%s1 + $0x378] sm:$0xff]
  %v255 = vld [vmem:[%s1 + $0x380] sm:$0xff]
  %v256 = vld [vmem:[%s1 + $0x388] sm:$0xff]
  %v257 = vld [vmem:[%s1 + $0x390] sm:$0xff]
  %v258 = vld [vmem:[%s1 + $0x398] sm:$0xff]
  %v259 = vld [vmem:[%s1 + $0x3a0] sm:$0xff]
  %v260 = vld [vmem:[%s1 + $0x3a8] sm:$0xff]
  %v261 = vld [vmem:[%s1 + $0x3b0] sm:$0xff]
  %v262 = vld [vmem:[%s1 + $0x3b8] sm:$0xff]
  %v263 = vld [vmem:[%s1 + $0x3c0] sm:$0xff]
  %v264 = vld [vmem:[%s1 + $0x3c8] sm:$0xff]
  %v265 = vld [vmem:[%s1 + $0x3d0] sm:$0xff]
  %v266 = vld [vmem:[%s1 + $0x3d8] sm:$0xff]
  %v267 = vld [vmem:[%s1 + $0x3e0] sm:$0xff]
  %v268 = vmul.f32 %v18, %v143
  %v269 = vmul.f32 %v19, %v144
  %v270 = vmul.f32 %v20, %v145
  %v271 = vmul.f32 %v21, %v146
  %v272 = vmul.f32 %v22, %v147
  %v273 = vmul.f32 %v23, %v148
  %v274 = vmul.f32 %v24, %v149
  %v275 = vmul.f32 %v25, %v150
  %v276 = vmul.f32 %v26, %v151
  %v277 = vmul.f32 %v27, %v152
  %v278 = vmul.f32 %v28, %v153
  %v279 = vmul.f32 %v29, %v154
  %v280 = vmul.f32 %v30, %v155
  %v281 = vmul.f32 %v31, %v156
  %v282 = vmul.f32 %v32, %v157
  %v283 = vmul.f32 %v33, %v158
  %v284 = vmul.f32 %v34, %v159
  %v285 = vmul.f32 %v35, %v160
  %v286 = vmul.f32 %v36, %v161
  %v287 = vmul.f32 %v37, %v162
  %v288 = vmul.f32 %v38, %v163
  %v289 = vmul.f32 %v39, %v164
  %v290 = vmul.f32 %v40, %v165
  %v291 = vmul.f32 %v41, %v166
  %v292 = vmul.f32 %v42, %v167
  %v293 = vmul.f32 %v43, %v168
  %v294 = vmul.f32 %v44, %v169
  %v295 = vmul.f32 %v45, %v170
  %v296 = vmul.f32 %v46, %v171
  %v297 = vmul.f32 %v47, %v172
  %v298 = vmul.f32 %v48, %v173
  %v299 = vmul.f32 %v49, %v174
  %v300 = vmul.f32 %v50, %v175
  %v301 = vmul.f32 %v51, %v176
  %v302 = vmul.f32 %v52, %v177
  %v303 = vmul.f32 %v53, %v178
  %v304 = vmul.f32 %v54, %v179
  %v305 = vmul.f32 %v55, %v180
  %v306 = vmul.f32 %v56, %v181
  %v307 = vmul.f32 %v57, %v182
  %v308 = vmul.f32 %v58, %v183
  %v309 = vmul.f32 %v59, %v184
  %v310 = vmul.f32 %v60, %v185
  %v311 = vmul.f32 %v61, %v186
  %v312 = vmul.f32 %v62, %v187
  %v313 = vmul.f32 %v63, %v188
  %v314 = vmul.f32 %v64, %v189
  %v315 = vmul.f32 %v65, %v190
  %v316 = vmul.f32 %v66, %v191
  %v317 = vmul.f32 %v67, %v192
  %v318 = vmul.f32 %v68, %v193
  %v319 = vmul.f32 %v69, %v194
  %v320 = vmul.f32 %v70, %v195
  %v321 = vmul.f32 %v71, %v196
  %v322 = vmul.f32 %v72, %v197
  %v323 = vmul.f32 %v73, %v198
  %v324 = vmul.f32 %v74, %v199
  %v325 = vmul.f32 %v75, %v200
  %v326 = vmul.f32 %v76, %v201
  %v327 = vmul.f32 %v77, %v202
  %v328 = vmul.f32 %v78, %v203
  %v329 = vmul.f32 %v79, %v204
  %v330 = vmul.f32 %v80, %v205
  %v331 = vmul.f32 %v81, %v206
  %v332 = vmul.f32 %v82, %v207
  %v333 = vmul.f32 %v83, %v208
  %v334 = vmul.f32 %v84, %v209
  %v335 = vmul.f32 %v85, %v210
  %v336 = vmul.f32 %v86, %v211
  %v337 = vmul.f32 %v87, %v212
  %v338 = vmul.f32 %v88, %v213
  %v339 = vmul.f32 %v89, %v214
  %v340 = vmul.f32 %v90, %v215
  %v341 = vmul.f32 %v91, %v216
  %v342 = vmul.f32 %v92, %v217
  %v343 = vmul.f32 %v93, %v218
  %v344 = vmul.f32 %v94, %v219
  %v345 = vmul.f32 %v95, %v220
  %v346 = vmul.f32 %v96, %v221
  %v347 = vmul.f32 %v97, %v222
  %v348 = vmul.f32 %v98, %v223
  %v349 = vmul.f32 %v99, %v224
  %v350 = vmul.f32 %v100, %v225
  %v351 = vmul.f32 %v101, %v226
  %v352 = vmul.f32 %v102, %v227
  %v353 = vmul.f32 %v103, %v228
  %v354 = vmul.f32 %v104, %v229
  %v355 = vmul.f32 %v105, %v230
  %v356 = vmul.f32 %v106, %v231
  %v357 = vmul.f32 %v107, %v232
  %v358 = vmul.f32 %v108, %v233
  %v359 = vmul.f32 %v109, %v234
  %v360 = vmul.f32 %v110, %v235
  %v361 = vmul.f32 %v111, %v236
  %v362 = vmul.f32 %v112, %v237
  %v363 = vmul.f32 %v113, %v238
  %v364 = vmul.f32 %v114, %v239
  %v365 = vmul.f32 %v115, %v240
  %v366 = vmul.f32 %v116, %v241
  %v367 = vmul.f32 %v117, %v242
  %v368 = vmul.f32 %v118, %v243
  %v369 = vmul.f32 %v119, %v244
  %v370 = vmul.f32 %v120, %v245
  %v371 = vmul.f32 %v121, %v246
  %v372 = vmul.f32 %v122, %v247
  %v373 = vmul.f32 %v123, %v248
  %v374 = vmul.f32 %v124, %v249
  %v375 = vmul.f32 %v125, %v250
  %v376 = vmul.f32 %v126, %v251
  %v377 = vmul.f32 %v127, %v252
  %v378 = vmul.f32 %v128, %v253
  %v379 = vmul.f32 %v129, %v254
  %v380 = vmul.f32 %v130, %v255
  %v381 = vmul.f32 %v131, %v256
  %v382 = vmul.f32 %v132, %v257
  %v383 = vmul.f32 %v133, %v258
  %v384 = vmul.f32 %v134, %v259
  %v385 = vmul.f32 %v135, %v260
  %v386 = vmul.f32 %v136, %v261
  %v387 = vmul.f32 %v137, %v262
  %v388 = vmul.f32 %v138, %v263
  %v389 = vmul.f32 %v139, %v264
  %v390 = vmul.f32 %v140, %v265
  %v391 = vmul.f32 %v141, %v266
  %v392 = vmul.f32 %v142, %v267
  %vm393 = vcmask 261120
  %v394 = vsel %vm393, %v268, 0.0
  %v395 = vsel %vm393, %v269, 0.0
  %v396 = vadd.f32 %v394, %v395
  %v397 = vsel %vm393, %v270, 0.0
  %v398 = vadd.f32 %v396, %v397
  %v399 = vsel %vm393, %v271, 0.0
  %v400 = vadd.f32 %v398, %v399
  %v401 = vsel %vm393, %v272, 0.0
  %v402 = vadd.f32 %v400, %v401
  %v403 = vsel %vm393, %v273, 0.0
  %v404 = vadd.f32 %v402, %v403
  %v405 = vsel %vm393, %v274, 0.0
  %v406 = vadd.f32 %v404, %v405
  %v407 = vsel %vm393, %v275, 0.0
  %v408 = vadd.f32 %v406, %v407
  %v409 = vsel %vm393, %v276, 0.0
  %v410 = vadd.f32 %v408, %v409
  %v411 = vsel %vm393, %v277, 0.0
  %v412 = vadd.f32 %v410, %v411
  %v413 = vsel %vm393, %v278, 0.0
  %v414 = vadd.f32 %v412, %v413
  %v415 = vsel %vm393, %v279, 0.0
  %v416 = vadd.f32 %v414, %v415
  %v417 = vsel %vm393, %v280, 0.0
  %v418 = vadd.f32 %v416, %v417
  %v419 = vsel %vm393, %v281, 0.0
  %v420 = vadd.f32 %v418, %v419
  %v421 = vsel %vm393, %v282, 0.0
  %v422 = vadd.f32 %v420, %v421
  %v423 = vsel %vm393, %v283, 0.0
  %v424 = vadd.f32 %v422, %v423
  %v425 = vsel %vm393, %v284, 0.0
  %v426 = vadd.f32 %v424, %v425
  %v427 = vsel %vm393, %v285, 0.0
  %v428 = vadd.f32 %v426, %v427
  %v429 = vsel %vm393, %v286, 0.0
  %v430 = vadd.f32 %v428, %v429
  %v431 = vsel %vm393, %v287, 0.0
  %v432 = vadd.f32 %v430, %v431
  %v433 = vsel %vm393, %v288, 0.0
  %v434 = vadd.f32 %v432, %v433
  %v435 = vsel %vm393, %v289, 0.0
  %v436 = vadd.f32 %v434, %v435
  %v437 = vsel %vm393, %v290, 0.0
  %v438 = vadd.f32 %v436, %v437
  %v439 = vsel %vm393, %v291, 0.0
  %v440 = vadd.f32 %v438, %v439
  %v441 = vsel %vm393, %v292, 0.0
  %v442 = vadd.f32 %v440, %v441
  %v443 = vsel %vm393, %v293, 0.0
  %v444 = vadd.f32 %v442, %v443
  %v445 = vsel %vm393, %v294, 0.0
  %v446 = vadd.f32 %v444, %v445
  %v447 = vsel %vm393, %v295, 0.0
  %v448 = vadd.f32 %v446, %v447
  %v449 = vsel %vm393, %v296, 0.0
  %v450 = vadd.f32 %v448, %v449
  %v451 = vsel %vm393, %v297, 0.0
  %v452 = vadd.f32 %v450, %v451
  %v453 = vsel %vm393, %v298, 0.0
  %v454 = vadd.f32 %v452, %v453
  %v455 = vsel %vm393, %v299, 0.0
  %v456 = vadd.f32 %v454, %v455
  %v457 = vsel %vm393, %v300, 0.0
  %v458 = vadd.f32 %v456, %v457
  %v459 = vsel %vm393, %v301, 0.0
  %v460 = vadd.f32 %v458, %v459
  %v461 = vsel %vm393, %v302, 0.0
  %v462 = vadd.f32 %v460, %v461
  %v463 = vsel %vm393, %v303, 0.0
  %v464 = vadd.f32 %v462, %v463
  %v465 = vsel %vm393, %v304, 0.0
  %v466 = vadd.f32 %v464, %v465
  %v467 = vsel %vm393, %v305, 0.0
  %v468 = vadd.f32 %v466, %v467
  %v469 = vsel %vm393, %v306, 0.0
  %v470 = vadd.f32 %v468, %v469
  %v471 = vsel %vm393, %v307, 0.0
  %v472 = vadd.f32 %v470, %v471
  %v473 = vsel %vm393, %v308, 0.0
  %v474 = vadd.f32 %v472, %v473
  %v475 = vsel %vm393, %v309, 0.0
  %v476 = vadd.f32 %v474, %v475
  %v477 = vsel %vm393, %v310, 0.0
  %v478 = vadd.f32 %v476, %v477
  %v479 = vsel %vm393, %v311, 0.0
  %v480 = vadd.f32 %v478, %v479
  %v481 = vsel %vm393, %v312, 0.0
  %v482 = vadd.f32 %v480, %v481
  %v483 = vsel %vm393, %v313, 0.0
  %v484 = vadd.f32 %v482, %v483
  %v485 = vsel %vm393, %v314, 0.0
  %v486 = vadd.f32 %v484, %v485
  %v487 = vsel %vm393, %v315, 0.0
  %v488 = vadd.f32 %v486, %v487
  %v489 = vsel %vm393, %v316, 0.0
  %v490 = vadd.f32 %v488, %v489
  %v491 = vsel %vm393, %v317, 0.0
  %v492 = vadd.f32 %v490, %v491
  %v493 = vsel %vm393, %v318, 0.0
  %v494 = vadd.f32 %v492, %v493
  %v495 = vsel %vm393, %v319, 0.0
  %v496 = vadd.f32 %v494, %v495
  %v497 = vsel %vm393, %v320, 0.0
  %v498 = vadd.f32 %v496, %v497
  %v499 = vsel %vm393, %v321, 0.0
  %v500 = vadd.f32 %v498, %v499
  %v501 = vsel %vm393, %v322, 0.0
  %v502 = vadd.f32 %v500, %v501
  %v503 = vsel %vm393, %v323, 0.0
  %v504 = vadd.f32 %v502, %v503
  %v505 = vsel %vm393, %v324, 0.0
  %v506 = vadd.f32 %v504, %v505
  %v507 = vsel %vm393, %v325, 0.0
  %v508 = vadd.f32 %v506, %v507
  %v509 = vsel %vm393, %v326, 0.0
  %v510 = vadd.f32 %v508, %v509
  %v511 = vsel %vm393, %v327, 0.0
  %v512 = vadd.f32 %v510, %v511
  %v513 = vsel %vm393, %v328, 0.0
  %v514 = vadd.f32 %v512, %v513
  %v515 = vsel %vm393, %v329, 0.0
  %v516 = vadd.f32 %v514, %v515
  %v517 = vsel %vm393, %v330, 0.0
  %v518 = vadd.f32 %v516, %v517
  %v519 = vsel %vm393, %v331, 0.0
  %v520 = vadd.f32 %v518, %v519
  %v521 = vsel %vm393, %v332, 0.0
  %v522 = vadd.f32 %v520, %v521
  %v523 = vsel %vm393, %v333, 0.0
  %v524 = vadd.f32 %v522, %v523
  %v525 = vsel %vm393, %v334, 0.0
  %v526 = vadd.f32 %v524, %v525
  %v527 = vsel %vm393, %v335, 0.0
  %v528 = vadd.f32 %v526, %v527
  %v529 = vsel %vm393, %v336, 0.0
  %v530 = vadd.f32 %v528, %v529
  %v531 = vsel %vm393, %v337, 0.0
  %v532 = vadd.f32 %v530, %v531
  %v533 = vsel %vm393, %v338, 0.0
  %v534 = vadd.f32 %v532, %v533
  %v535 = vsel %vm393, %v339, 0.0
  %v536 = vadd.f32 %v534, %v535
  %v537 = vsel %vm393, %v340, 0.0
  %v538 = vadd.f32 %v536, %v537
  %v539 = vsel %vm393, %v341, 0.0
  %v540 = vadd.f32 %v538, %v539
  %v541 = vsel %vm393, %v342, 0.0
  %v542 = vadd.f32 %v540, %v541
  %v543 = vsel %vm393, %v343, 0.0
  %v544 = vadd.f32 %v542, %v543
  %v545 = vsel %vm393, %v344, 0.0
  %v546 = vadd.f32 %v544, %v545
  %v547 = vsel %vm393, %v345, 0.0
  %v548 = vadd.f32 %v546, %v547
  %v549 = vsel %vm393, %v346, 0.0
  %v550 = vadd.f32 %v548, %v549
  %v551 = vsel %vm393, %v347, 0.0
  %v552 = vadd.f32 %v550, %v551
  %v553 = vsel %vm393, %v348, 0.0
  %v554 = vadd.f32 %v552, %v553
  %v555 = vsel %vm393, %v349, 0.0
  %v556 = vadd.f32 %v554, %v555
  %v557 = vsel %vm393, %v350, 0.0
  %v558 = vadd.f32 %v556, %v557
  %v559 = vsel %vm393, %v351, 0.0
  %v560 = vadd.f32 %v558, %v559
  %v561 = vsel %vm393, %v352, 0.0
  %v562 = vadd.f32 %v560, %v561
  %v563 = vsel %vm393, %v353, 0.0
  %v564 = vadd.f32 %v562, %v563
  %v565 = vsel %vm393, %v354, 0.0
  %v566 = vadd.f32 %v564, %v565
  %v567 = vsel %vm393, %v355, 0.0
  %v568 = vadd.f32 %v566, %v567
  %v569 = vsel %vm393, %v356, 0.0
  %v570 = vadd.f32 %v568, %v569
  %v571 = vsel %vm393, %v357, 0.0
  %v572 = vadd.f32 %v570, %v571
  %v573 = vsel %vm393, %v358, 0.0
  %v574 = vadd.f32 %v572, %v573
  %v575 = vsel %vm393, %v359, 0.0
  %v576 = vadd.f32 %v574, %v575
  %v577 = vsel %vm393, %v360, 0.0
  %v578 = vadd.f32 %v576, %v577
  %v579 = vsel %vm393, %v361, 0.0
  %v580 = vadd.f32 %v578, %v579
  %v581 = vsel %vm393, %v362, 0.0
  %v582 = vadd.f32 %v580, %v581
  %v583 = vsel %vm393, %v363, 0.0
  %v584 = vadd.f32 %v582, %v583
  %v585 = vsel %vm393, %v364, 0.0
  %v586 = vadd.f32 %v584, %v585
  %v587 = vsel %vm393, %v365, 0.0
  %v588 = vadd.f32 %v586, %v587
  %v589 = vsel %vm393, %v366, 0.0
  %v590 = vadd.f32 %v588, %v589
  %v591 = vsel %vm393, %v367, 0.0
  %v592 = vadd.f32 %v590, %v591
  %v593 = vsel %vm393, %v368, 0.0
  %v594 = vadd.f32 %v592, %v593
  %v595 = vsel %vm393, %v369, 0.0
  %v596 = vadd.f32 %v594, %v595
  %v597 = vsel %vm393, %v370, 0.0
  %v598 = vadd.f32 %v596, %v597
  %v599 = vsel %vm393, %v371, 0.0
  %v600 = vadd.f32 %v598, %v599
  %v601 = vsel %vm393, %v372, 0.0
  %v602 = vadd.f32 %v600, %v601
  %v603 = vsel %vm393, %v373, 0.0
  %v604 = vadd.f32 %v602, %v603
  %v605 = vsel %vm393, %v374, 0.0
  %v606 = vadd.f32 %v604, %v605
  %v607 = vsel %vm393, %v375, 0.0
  %v608 = vadd.f32 %v606, %v607
  %v609 = vsel %vm393, %v376, 0.0
  %v610 = vadd.f32 %v608, %v609
  %v611 = vsel %vm393, %v377, 0.0
  %v612 = vadd.f32 %v610, %v611
  %v613 = vsel %vm393, %v378, 0.0
  %v614 = vadd.f32 %v612, %v613
  %v615 = vsel %vm393, %v379, 0.0
  %v616 = vadd.f32 %v614, %v615
  %v617 = vsel %vm393, %v380, 0.0
  %v618 = vadd.f32 %v616, %v617
  %v619 = vsel %vm393, %v381, 0.0
  %v620 = vadd.f32 %v618, %v619
  %v621 = vsel %vm393, %v382, 0.0
  %v622 = vadd.f32 %v620, %v621
  %v623 = vsel %vm393, %v383, 0.0
  %v624 = vadd.f32 %v622, %v623
  %v625 = vsel %vm393, %v384, 0.0
  %v626 = vadd.f32 %v624, %v625
  %v627 = vsel %vm393, %v385, 0.0
  %v628 = vadd.f32 %v626, %v627
  %v629 = vsel %vm393, %v386, 0.0
  %v630 = vadd.f32 %v628, %v629
  %v631 = vsel %vm393, %v387, 0.0
  %v632 = vadd.f32 %v630, %v631
  %v633 = vsel %vm393, %v388, 0.0
  %v634 = vadd.f32 %v632, %v633
  %v635 = vsel %vm393, %v389, 0.0
  %v636 = vadd.f32 %v634, %v635
  %v637 = vsel %vm393, %v390, 0.0
  %v638 = vadd.f32 %v636, %v637
  %v639 = vsel %vm393, %v391, 0.0
  %v640 = vadd.f32 %v638, %v639
  %v641 = vsel %vm393, %v392, 0.0
  %v642 = vadd.f32 %v640, %v641
  %v643 = vrot.slane %v642, 4
  %v644 = vadd.f32 %v642, %v643
  %v645 = vrot.slane %v644, 2
  %v646 = vadd.f32 %v644, %v645
  %v647 = vrot.slane %v646, 1
  %v648 = vadd.f32 %v646, %v647
  %s649 = scalar_lea.vmem %s1, 1000
  %v650 = vld [vmem:[%s649] sm:$0xff]
  %v651 = vld [vmem:[%s649 + $0x8] sm:$0xff]
  %v652 = vld [vmem:[%s649 + $0x10] sm:$0xff]
  %v653 = vld [vmem:[%s649 + $0x18] sm:$0xff]
  %v654 = vld [vmem:[%s649 + $0x20] sm:$0xff]
  %v655 = vld [vmem:[%s649 + $0x28] sm:$0xff]
  %v656 = vld [vmem:[%s649 + $0x30] sm:$0xff]
  %v657 = vld [vmem:[%s649 + $0x38] sm:$0xff]
  %v658 = vld [vmem:[%s649 + $0x40] sm:$0xff]
  %v659 = vld [vmem:[%s649 + $0x48] sm:$0xff]
  %v660 = vld [vmem:[%s649 + $0x50] sm:$0xff]
  %v661 = vld [vmem:[%s649 + $0x58] sm:$0xff]
  %v662 = vld [vmem:[%s649 + $0x60] sm:$0xff]
  %v663 = vld [vmem:[%s649 + $0x68] sm:$0xff]
  %v664 = vld [vmem:[%s649 + $0x70] sm:$0xff]
  %v665 = vld [vmem:[%s649 + $0x78] sm:$0xff]
  %v666 = vld [vmem:[%s649 + $0x80] sm:$0xff]
  %v667 = vld [vmem:[%s649 + $0x88] sm:$0xff]
  %v668 = vld [vmem:[%s649 + $0x90] sm:$0xff]
  %v669 = vld [vmem:[%s649 + $0x98] sm:$0xff]
  %v670 = vld [vmem:[%s649 + $0xa0] sm:$0xff]
  %v671 = vld [vmem:[%s649 + $0xa8] sm:$0xff]
  %v672 = vld [vmem:[%s649 + $0xb0] sm:$0xff]
  %v673 = vld [vmem:[%s649 + $0xb8] sm:$0xff]
  %v674 = vld [vmem:[%s649 + $0xc0] sm:$0xff]
  %v675 = vld [vmem:[%s649 + $0xc8] sm:$0xff]
  %v676 = vld [vmem:[%s649 + $0xd0] sm:$0xff]
  %v677 = vld [vmem:[%s649 + $0xd8] sm:$0xff]
  %v678 = vld [vmem:[%s649 + $0xe0] sm:$0xff]
  %v679 = vld [vmem:[%s649 + $0xe8] sm:$0xff]
  %v680 = vld [vmem:[%s649 + $0xf0] sm:$0xff]
  %v681 = vld [vmem:[%s649 + $0xf8] sm:$0xff]
  %v682 = vld [vmem:[%s649 + $0x100] sm:$0xff]
  %v683 = vld [vmem:[%s649 + $0x108] sm:$0xff]
  %v684 = vld [vmem:[%s649 + $0x110] sm:$0xff]
  %v685 = vld [vmem:[%s649 + $0x118] sm:$0xff]
  %v686 = vld [vmem:[%s649 + $0x120] sm:$0xff]
  %v687 = vld [vmem:[%s649 + $0x128] sm:$0xff]
  %v688 = vld [vmem:[%s649 + $0x130] sm:$0xff]
  %v689 = vld [vmem:[%s649 + $0x138] sm:$0xff]
  %v690 = vld [vmem:[%s649 + $0x140] sm:$0xff]
  %v691 = vld [vmem:[%s649 + $0x148] sm:$0xff]
  %v692 = vld [vmem:[%s649 + $0x150] sm:$0xff]
  %v693 = vld [vmem:[%s649 + $0x158] sm:$0xff]
  %v694 = vld [vmem:[%s649 + $0x160] sm:$0xff]
  %v695 = vld [vmem:[%s649 + $0x168] sm:$0xff]
  %v696 = vld [vmem:[%s649 + $0x170] sm:$0xff]
  %v697 = vld [vmem:[%s649 + $0x178] sm:$0xff]
  %v698 = vld [vmem:[%s649 + $0x180] sm:$0xff]
  %v699 = vld [vmem:[%s649 + $0x188] sm:$0xff]
  %v700 = vld [vmem:[%s649 + $0x190] sm:$0xff]
  %v701 = vld [vmem:[%s649 + $0x198] sm:$0xff]
  %v702 = vld [vmem:[%s649 + $0x1a0] sm:$0xff]
  %v703 = vld [vmem:[%s649 + $0x1a8] sm:$0xff]
  %v704 = vld [vmem:[%s649 + $0x1b0] sm:$0xff]
  %v705 = vld [vmem:[%s649 + $0x1b8] sm:$0xff]
  %v706 = vld [vmem:[%s649 + $0x1c0] sm:$0xff]
  %v707 = vld [vmem:[%s649 + $0x1c8] sm:$0xff]
  %v708 = vld [vmem:[%s649 + $0x1d0] sm:$0xff]
  %v709 = vld [vmem:[%s649 + $0x1d8] sm:$0xff]
  %v710 = vld [vmem:[%s649 + $0x1e0] sm:$0xff]
  %v711 = vld [vmem:[%s649 + $0x1e8] sm:$0xff]
  %v712 = vld [vmem:[%s649 + $0x1f0] sm:$0xff]
  %v713 = vld [vmem:[%s649 + $0x1f8] sm:$0xff]
  %v714 = vld [vmem:[%s649 + $0x200] sm:$0xff]
  %v715 = vld [vmem:[%s649 + $0x208] sm:$0xff]
  %v716 = vld [vmem:[%s649 + $0x210] sm:$0xff]
  %v717 = vld [vmem:[%s649 + $0x218] sm:$0xff]
  %v718 = vld [vmem:[%s649 + $0x220] sm:$0xff]
  %v719 = vld [vmem:[%s649 + $0x228] sm:$0xff]
  %v720 = vld [vmem:[%s649 + $0x230] sm:$0xff]
  %v721 = vld [vmem:[%s649 + $0x238] sm:$0xff]
  %v722 = vld [vmem:[%s649 + $0x240] sm:$0xff]
  %v723 = vld [vmem:[%s649 + $0x248] sm:$0xff]
  %v724 = vld [vmem:[%s649 + $0x250] sm:$0xff]
  %v725 = vld [vmem:[%s649 + $0x258] sm:$0xff]
  %v726 = vld [vmem:[%s649 + $0x260] sm:$0xff]
  %v727 = vld [vmem:[%s649 + $0x268] sm:$0xff]
  %v728 = vld [vmem:[%s649 + $0x270] sm:$0xff]
  %v729 = vld [vmem:[%s649 + $0x278] sm:$0xff]
  %v730 = vld [vmem:[%s649 + $0x280] sm:$0xff]
  %v731 = vld [vmem:[%s649 + $0x288] sm:$0xff]
  %v732 = vld [vmem:[%s649 + $0x290] sm:$0xff]
  %v733 = vld [vmem:[%s649 + $0x298] sm:$0xff]
  %v734 = vld [vmem:[%s649 + $0x2a0] sm:$0xff]
  %v735 = vld [vmem:[%s649 + $0x2a8] sm:$0xff]
  %v736 = vld [vmem:[%s649 + $0x2b0] sm:$0xff]
  %v737 = vld [vmem:[%s649 + $0x2b8] sm:$0xff]
  %v738 = vld [vmem:[%s649 + $0x2c0] sm:$0xff]
  %v739 = vld [vmem:[%s649 + $0x2c8] sm:$0xff]
  %v740 = vld [vmem:[%s649 + $0x2d0] sm:$0xff]
  %v741 = vld [vmem:[%s649 + $0x2d8] sm:$0xff]
  %v742 = vld [vmem:[%s649 + $0x2e0] sm:$0xff]
  %v743 = vld [vmem:[%s649 + $0x2e8] sm:$0xff]
  %v744 = vld [vmem:[%s649 + $0x2f0] sm:$0xff]
  %v745 = vld [vmem:[%s649 + $0x2f8] sm:$0xff]
  %v746 = vld [vmem:[%s649 + $0x300] sm:$0xff]
  %v747 = vld [vmem:[%s649 + $0x308] sm:$0xff]
  %v748 = vld [vmem:[%s649 + $0x310] sm:$0xff]
  %v749 = vld [vmem:[%s649 + $0x318] sm:$0xff]
  %v750 = vld [vmem:[%s649 + $0x320] sm:$0xff]
  %v751 = vld [vmem:[%s649 + $0x328] sm:$0xff]
  %v752 = vld [vmem:[%s649 + $0x330] sm:$0xff]
  %v753 = vld [vmem:[%s649 + $0x338] sm:$0xff]
  %v754 = vld [vmem:[%s649 + $0x340] sm:$0xff]
  %v755 = vld [vmem:[%s649 + $0x348] sm:$0xff]
  %v756 = vld [vmem:[%s649 + $0x350] sm:$0xff]
  %v757 = vld [vmem:[%s649 + $0x358] sm:$0xff]
  %v758 = vld [vmem:[%s649 + $0x360] sm:$0xff]
  %v759 = vld [vmem:[%s649 + $0x368] sm:$0xff]
  %v760 = vld [vmem:[%s649 + $0x370] sm:$0xff]
  %v761 = vld [vmem:[%s649 + $0x378] sm:$0xff]
  %v762 = vld [vmem:[%s649 + $0x380] sm:$0xff]
  %v763 = vld [vmem:[%s649 + $0x388] sm:$0xff]
  %v764 = vld [vmem:[%s649 + $0x390] sm:$0xff]
  %v765 = vld [vmem:[%s649 + $0x398] sm:$0xff]
  %v766 = vld [vmem:[%s649 + $0x3a0] sm:$0xff]
  %v767 = vld [vmem:[%s649 + $0x3a8] sm:$0xff]
  %v768 = vld [vmem:[%s649 + $0x3b0] sm:$0xff]
  %v769 = vld [vmem:[%s649 + $0x3b8] sm:$0xff]
  %v770 = vld [vmem:[%s649 + $0x3c0] sm:$0xff]
  %v771 = vld [vmem:[%s649 + $0x3c8] sm:$0xff]
  %v772 = vld [vmem:[%s649 + $0x3d0] sm:$0xff]
  %v773 = vld [vmem:[%s649 + $0x3d8] sm:$0xff]
  %v774 = vld [vmem:[%s649 + $0x3e0] sm:$0xff]
  %v775 = vmul.f32 %v18, %v650
  %v776 = vmul.f32 %v19, %v651
  %v777 = vmul.f32 %v20, %v652
  %v778 = vmul.f32 %v21, %v653
  %v779 = vmul.f32 %v22, %v654
  %v780 = vmul.f32 %v23, %v655
  %v781 = vmul.f32 %v24, %v656
  %v782 = vmul.f32 %v25, %v657
  %v783 = vmul.f32 %v26, %v658
  %v784 = vmul.f32 %v27, %v659
  %v785 = vmul.f32 %v28, %v660
  %v786 = vmul.f32 %v29, %v661
  %v787 = vmul.f32 %v30, %v662
  %v788 = vmul.f32 %v31, %v663
  %v789 = vmul.f32 %v32, %v664
  %v790 = vmul.f32 %v33, %v665
  %v791 = vmul.f32 %v34, %v666
  %v792 = vmul.f32 %v35, %v667
  %v793 = vmul.f32 %v36, %v668
  %v794 = vmul.f32 %v37, %v669
  %v795 = vmul.f32 %v38, %v670
  %v796 = vmul.f32 %v39, %v671
  %v797 = vmul.f32 %v40, %v672
  %v798 = vmul.f32 %v41, %v673
  %v799 = vmul.f32 %v42, %v674
  %v800 = vmul.f32 %v43, %v675
  %v801 = vmul.f32 %v44, %v676
  %v802 = vmul.f32 %v45, %v677
  %v803 = vmul.f32 %v46, %v678
  %v804 = vmul.f32 %v47, %v679
  %v805 = vmul.f32 %v48, %v680
  %v806 = vmul.f32 %v49, %v681
  %v807 = vmul.f32 %v50, %v682
  %v808 = vmul.f32 %v51, %v683
  %v809 = vmul.f32 %v52, %v684
  %v810 = vmul.f32 %v53, %v685
  %v811 = vmul.f32 %v54, %v686
  %v812 = vmul.f32 %v55, %v687
  %v813 = vmul.f32 %v56, %v688
  %v814 = vmul.f32 %v57, %v689
  %v815 = vmul.f32 %v58, %v690
  %v816 = vmul.f32 %v59, %v691
  %v817 = vmul.f32 %v60, %v692
  %v818 = vmul.f32 %v61, %v693
  %v819 = vmul.f32 %v62, %v694
  %v820 = vmul.f32 %v63, %v695
  %v821 = vmul.f32 %v64, %v696
  %v822 = vmul.f32 %v65, %v697
  %v823 = vmul.f32 %v66, %v698
  %v824 = vmul.f32 %v67, %v699
  %v825 = vmul.f32 %v68, %v700
  %v826 = vmul.f32 %v69, %v701
  %v827 = vmul.f32 %v70, %v702
  %v828 = vmul.f32 %v71, %v703
  %v829 = vmul.f32 %v72, %v704
  %v830 = vmul.f32 %v73, %v705
  %v831 = vmul.f32 %v74, %v706
  %v832 = vmul.f32 %v75, %v707
  %v833 = vmul.f32 %v76, %v708
  %v834 = vmul.f32 %v77, %v709
  %v835 = vmul.f32 %v78, %v710
  %v836 = vmul.f32 %v79, %v711
  %v837 = vmul.f32 %v80, %v712
  %v838 = vmul.f32 %v81, %v713
  %v839 = vmul.f32 %v82, %v714
  %v840 = vmul.f32 %v83, %v715
  %v841 = vmul.f32 %v84, %v716
  %v842 = vmul.f32 %v85, %v717
  %v843 = vmul.f32 %v86, %v718
  %v844 = vmul.f32 %v87, %v719
  %v845 = vmul.f32 %v88, %v720
  %v846 = vmul.f32 %v89, %v721
  %v847 = vmul.f32 %v90, %v722
  %v848 = vmul.f32 %v91, %v723
  %v849 = vmul.f32 %v92, %v724
  %v850 = vmul.f32 %v93, %v725
  %v851 = vmul.f32 %v94, %v726
  %v852 = vmul.f32 %v95, %v727
  %v853 = vmul.f32 %v96, %v728
  %v854 = vmul.f32 %v97, %v729
  %v855 = vmul.f32 %v98, %v730
  %v856 = vmul.f32 %v99, %v731
  %v857 = vmul.f32 %v100, %v732
  %v858 = vmul.f32 %v101, %v733
  %v859 = vmul.f32 %v102, %v734
  %v860 = vmul.f32 %v103, %v735
  %v861 = vmul.f32 %v104, %v736
  %v862 = vmul.f32 %v105, %v737
  %v863 = vmul.f32 %v106, %v738
  %v864 = vmul.f32 %v107, %v739
  %v865 = vmul.f32 %v108, %v740
  %v866 = vmul.f32 %v109, %v741
  %v867 = vmul.f32 %v110, %v742
  %v868 = vmul.f32 %v111, %v743
  %v869 = vmul.f32 %v112, %v744
  %v870 = vmul.f32 %v113, %v745
  %v871 = vmul.f32 %v114, %v746
  %v872 = vmul.f32 %v115, %v747
  %v873 = vmul.f32 %v116, %v748
  %v874 = vmul.f32 %v117, %v749
  %v875 = vmul.f32 %v118, %v750
  %v876 = vmul.f32 %v119, %v751
  %v877 = vmul.f32 %v120, %v752
  %v878 = vmul.f32 %v121, %v753
  %v879 = vmul.f32 %v122, %v754
  %v880 = vmul.f32 %v123, %v755
  %v881 = vmul.f32 %v124, %v756
  %v882 = vmul.f32 %v125, %v757
  %v883 = vmul.f32 %v126, %v758
  %v884 = vmul.f32 %v127, %v759
  %v885 = vmul.f32 %v128, %v760
  %v886 = vmul.f32 %v129, %v761
  %v887 = vmul.f32 %v130, %v762
  %v888 = vmul.f32 %v131, %v763
  %v889 = vmul.f32 %v132, %v764
  %v890 = vmul.f32 %v133, %v765
  %v891 = vmul.f32 %v134, %v766
  %v892 = vmul.f32 %v135, %v767
  %v893 = vmul.f32 %v136, %v768
  %v894 = vmul.f32 %v137, %v769
  %v895 = vmul.f32 %v138, %v770
  %v896 = vmul.f32 %v139, %v771
  %v897 = vmul.f32 %v140, %v772
  %v898 = vmul.f32 %v141, %v773
  %v899 = vmul.f32 %v142, %v774
  %v900 = vsel %vm393, %v775, 0.0
  %v901 = vsel %vm393, %v776, 0.0
  %v902 = vadd.f32 %v900, %v901
  %v903 = vsel %vm393, %v777, 0.0
  %v904 = vadd.f32 %v902, %v903
  %v905 = vsel %vm393, %v778, 0.0
  %v906 = vadd.f32 %v904, %v905
  %v907 = vsel %vm393, %v779, 0.0
  %v908 = vadd.f32 %v906, %v907
  %v909 = vsel %vm393, %v780, 0.0
  %v910 = vadd.f32 %v908, %v909
  %v911 = vsel %vm393, %v781, 0.0
  %v912 = vadd.f32 %v910, %v911
  %v913 = vsel %vm393, %v782, 0.0
  %v914 = vadd.f32 %v912, %v913
  %v915 = vsel %vm393, %v783, 0.0
  %v916 = vadd.f32 %v914, %v915
  %v917 = vsel %vm393, %v784, 0.0
  %v918 = vadd.f32 %v916, %v917
  %v919 = vsel %vm393, %v785, 0.0
  %v920 = vadd.f32 %v918, %v919
  %v921 = vsel %vm393, %v786, 0.0
  %v922 = vadd.f32 %v920, %v921
  %v923 = vsel %vm393, %v787, 0.0
  %v924 = vadd.f32 %v922, %v923
  %v925 = vsel %vm393, %v788, 0.0
  %v926 = vadd.f32 %v924, %v925
  %v927 = vsel %vm393, %v789, 0.0
  %v928 = vadd.f32 %v926, %v927
  %v929 = vsel %vm393, %v790, 0.0
  %v930 = vadd.f32 %v928, %v929
  %v931 = vsel %vm393, %v791, 0.0
  %v932 = vadd.f32 %v930, %v931
  %v933 = vsel %vm393, %v792, 0.0
  %v934 = vadd.f32 %v932, %v933
  %v935 = vsel %vm393, %v793, 0.0
  %v936 = vadd.f32 %v934, %v935
  %v937 = vsel %vm393, %v794, 0.0
  %v938 = vadd.f32 %v936, %v937
  %v939 = vsel %vm393, %v795, 0.0
  %v940 = vadd.f32 %v938, %v939
  %v941 = vsel %vm393, %v796, 0.0
  %v942 = vadd.f32 %v940, %v941
  %v943 = vsel %vm393, %v797, 0.0
  %v944 = vadd.f32 %v942, %v943
  %v945 = vsel %vm393, %v798, 0.0
  %v946 = vadd.f32 %v944, %v945
  %v947 = vsel %vm393, %v799, 0.0
  %v948 = vadd.f32 %v946, %v947
  %v949 = vsel %vm393, %v800, 0.0
  %v950 = vadd.f32 %v948, %v949
  %v951 = vsel %vm393, %v801, 0.0
  %v952 = vadd.f32 %v950, %v951
  %v953 = vsel %vm393, %v802, 0.0
  %v954 = vadd.f32 %v952, %v953
  %v955 = vsel %vm393, %v803, 0.0
  %v956 = vadd.f32 %v954, %v955
  %v957 = vsel %vm393, %v804, 0.0
  %v958 = vadd.f32 %v956, %v957
  %v959 = vsel %vm393, %v805, 0.0
  %v960 = vadd.f32 %v958, %v959
  %v961 = vsel %vm393, %v806, 0.0
  %v962 = vadd.f32 %v960, %v961
  %v963 = vsel %vm393, %v807, 0.0
  %v964 = vadd.f32 %v962, %v963
  %v965 = vsel %vm393, %v808, 0.0
  %v966 = vadd.f32 %v964, %v965
  %v967 = vsel %vm393, %v809, 0.0
  %v968 = vadd.f32 %v966, %v967
  %v969 = vsel %vm393, %v810, 0.0
  %v970 = vadd.f32 %v968, %v969
  %v971 = vsel %vm393, %v811, 0.0
  %v972 = vadd.f32 %v970, %v971
  %v973 = vsel %vm393, %v812, 0.0
  %v974 = vadd.f32 %v972, %v973
  %v975 = vsel %vm393, %v813, 0.0
  %v976 = vadd.f32 %v974, %v975
  %v977 = vsel %vm393, %v814, 0.0
  %v978 = vadd.f32 %v976, %v977
  %v979 = vsel %vm393, %v815, 0.0
  %v980 = vadd.f32 %v978, %v979
  %v981 = vsel %vm393, %v816, 0.0
  %v982 = vadd.f32 %v980, %v981
  %v983 = vsel %vm393, %v817, 0.0
  %v984 = vadd.f32 %v982, %v983
  %v985 = vsel %vm393, %v818, 0.0
  %v986 = vadd.f32 %v984, %v985
  %v987 = vsel %vm393, %v819, 0.0
  %v988 = vadd.f32 %v986, %v987
  %v989 = vsel %vm393, %v820, 0.0
  %v990 = vadd.f32 %v988, %v989
  %v991 = vsel %vm393, %v821, 0.0
  %v992 = vadd.f32 %v990, %v991
  %v993 = vsel %vm393, %v822, 0.0
  %v994 = vadd.f32 %v992, %v993
  %v995 = vsel %vm393, %v823, 0.0
  %v996 = vadd.f32 %v994, %v995
  %v997 = vsel %vm393, %v824, 0.0
  %v998 = vadd.f32 %v996, %v997
  %v999 = vsel %vm393, %v825, 0.0
  %v1000 = vadd.f32 %v998, %v999
  %v1001 = vsel %vm393, %v826, 0.0
  %v1002 = vadd.f32 %v1000, %v1001
  %v1003 = vsel %vm393, %v827, 0.0
  %v1004 = vadd.f32 %v1002, %v1003
  %v1005 = vsel %vm393, %v828, 0.0
  %v1006 = vadd.f32 %v1004, %v1005
  %v1007 = vsel %vm393, %v829, 0.0
  %v1008 = vadd.f32 %v1006, %v1007
  %v1009 = vsel %vm393, %v830, 0.0
  %v1010 = vadd.f32 %v1008, %v1009
  %v1011 = vsel %vm393, %v831, 0.0
  %v1012 = vadd.f32 %v1010, %v1011
  %v1013 = vsel %vm393, %v832, 0.0
  %v1014 = vadd.f32 %v1012, %v1013
  %v1015 = vsel %vm393, %v833, 0.0
  %v1016 = vadd.f32 %v1014, %v1015
  %v1017 = vsel %vm393, %v834, 0.0
  %v1018 = vadd.f32 %v1016, %v1017
  %v1019 = vsel %vm393, %v835, 0.0
  %v1020 = vadd.f32 %v1018, %v1019
  %v1021 = vsel %vm393, %v836, 0.0
  %v1022 = vadd.f32 %v1020, %v1021
  %v1023 = vsel %vm393, %v837, 0.0
  %v1024 = vadd.f32 %v1022, %v1023
  %v1025 = vsel %vm393, %v838, 0.0
  %v1026 = vadd.f32 %v1024, %v1025
  %v1027 = vsel %vm393, %v839, 0.0
  %v1028 = vadd.f32 %v1026, %v1027
  %v1029 = vsel %vm393, %v840, 0.0
  %v1030 = vadd.f32 %v1028, %v1029
  %v1031 = vsel %vm393, %v841, 0.0
  %v1032 = vadd.f32 %v1030, %v1031
  %v1033 = vsel %vm393, %v842, 0.0
  %v1034 = vadd.f32 %v1032, %v1033
  %v1035 = vsel %vm393, %v843, 0.0
  %v1036 = vadd.f32 %v1034, %v1035
  %v1037 = vsel %vm393, %v844, 0.0
  %v1038 = vadd.f32 %v1036, %v1037
  %v1039 = vsel %vm393, %v845, 0.0
  %v1040 = vadd.f32 %v1038, %v1039
  %v1041 = vsel %vm393, %v846, 0.0
  %v1042 = vadd.f32 %v1040, %v1041
  %v1043 = vsel %vm393, %v847, 0.0
  %v1044 = vadd.f32 %v1042, %v1043
  %v1045 = vsel %vm393, %v848, 0.0
  %v1046 = vadd.f32 %v1044, %v1045
  %v1047 = vsel %vm393, %v849, 0.0
  %v1048 = vadd.f32 %v1046, %v1047
  %v1049 = vsel %vm393, %v850, 0.0
  %v1050 = vadd.f32 %v1048, %v1049
  %v1051 = vsel %vm393, %v851, 0.0
  %v1052 = vadd.f32 %v1050, %v1051
  %v1053 = vsel %vm393, %v852, 0.0
  %v1054 = vadd.f32 %v1052, %v1053
  %v1055 = vsel %vm393, %v853, 0.0
  %v1056 = vadd.f32 %v1054, %v1055
  %v1057 = vsel %vm393, %v854, 0.0
  %v1058 = vadd.f32 %v1056, %v1057
  %v1059 = vsel %vm393, %v855, 0.0
  %v1060 = vadd.f32 %v1058, %v1059
  %v1061 = vsel %vm393, %v856, 0.0
  %v1062 = vadd.f32 %v1060, %v1061
  %v1063 = vsel %vm393, %v857, 0.0
  %v1064 = vadd.f32 %v1062, %v1063
  %v1065 = vsel %vm393, %v858, 0.0
  %v1066 = vadd.f32 %v1064, %v1065
  %v1067 = vsel %vm393, %v859, 0.0
  %v1068 = vadd.f32 %v1066, %v1067
  %v1069 = vsel %vm393, %v860, 0.0
  %v1070 = vadd.f32 %v1068, %v1069
  %v1071 = vsel %vm393, %v861, 0.0
  %v1072 = vadd.f32 %v1070, %v1071
  %v1073 = vsel %vm393, %v862, 0.0
  %v1074 = vadd.f32 %v1072, %v1073
  %v1075 = vsel %vm393, %v863, 0.0
  %v1076 = vadd.f32 %v1074, %v1075
  %v1077 = vsel %vm393, %v864, 0.0
  %v1078 = vadd.f32 %v1076, %v1077
  %v1079 = vsel %vm393, %v865, 0.0
  %v1080 = vadd.f32 %v1078, %v1079
  %v1081 = vsel %vm393, %v866, 0.0
  %v1082 = vadd.f32 %v1080, %v1081
  %v1083 = vsel %vm393, %v867, 0.0
  %v1084 = vadd.f32 %v1082, %v1083
  %v1085 = vsel %vm393, %v868, 0.0
  %v1086 = vadd.f32 %v1084, %v1085
  %v1087 = vsel %vm393, %v869, 0.0
  %v1088 = vadd.f32 %v1086, %v1087
  %v1089 = vsel %vm393, %v870, 0.0
  %v1090 = vadd.f32 %v1088, %v1089
  %v1091 = vsel %vm393, %v871, 0.0
  %v1092 = vadd.f32 %v1090, %v1091
  %v1093 = vsel %vm393, %v872, 0.0
  %v1094 = vadd.f32 %v1092, %v1093
  %v1095 = vsel %vm393, %v873, 0.0
  %v1096 = vadd.f32 %v1094, %v1095
  %v1097 = vsel %vm393, %v874, 0.0
  %v1098 = vadd.f32 %v1096, %v1097
  %v1099 = vsel %vm393, %v875, 0.0
  %v1100 = vadd.f32 %v1098, %v1099
  %v1101 = vsel %vm393, %v876, 0.0
  %v1102 = vadd.f32 %v1100, %v1101
  %v1103 = vsel %vm393, %v877, 0.0
  %v1104 = vadd.f32 %v1102, %v1103
  %v1105 = vsel %vm393, %v878, 0.0
  %v1106 = vadd.f32 %v1104, %v1105
  %v1107 = vsel %vm393, %v879, 0.0
  %v1108 = vadd.f32 %v1106, %v1107
  %v1109 = vsel %vm393, %v880, 0.0
  %v1110 = vadd.f32 %v1108, %v1109
  %v1111 = vsel %vm393, %v881, 0.0
  %v1112 = vadd.f32 %v1110, %v1111
  %v1113 = vsel %vm393, %v882, 0.0
  %v1114 = vadd.f32 %v1112, %v1113
  %v1115 = vsel %vm393, %v883, 0.0
  %v1116 = vadd.f32 %v1114, %v1115
  %v1117 = vsel %vm393, %v884, 0.0
  %v1118 = vadd.f32 %v1116, %v1117
  %v1119 = vsel %vm393, %v885, 0.0
  %v1120 = vadd.f32 %v1118, %v1119
  %v1121 = vsel %vm393, %v886, 0.0
  %v1122 = vadd.f32 %v1120, %v1121
  %v1123 = vsel %vm393, %v887, 0.0
  %v1124 = vadd.f32 %v1122, %v1123
  %v1125 = vsel %vm393, %v888, 0.0
  %v1126 = vadd.f32 %v1124, %v1125
  %v1127 = vsel %vm393, %v889, 0.0
  %v1128 = vadd.f32 %v1126, %v1127
  %v1129 = vsel %vm393, %v890, 0.0
  %v1130 = vadd.f32 %v1128, %v1129
  %v1131 = vsel %vm393, %v891, 0.0
  %v1132 = vadd.f32 %v1130, %v1131
  %v1133 = vsel %vm393, %v892, 0.0
  %v1134 = vadd.f32 %v1132, %v1133
  %v1135 = vsel %vm393, %v893, 0.0
  %v1136 = vadd.f32 %v1134, %v1135
  %v1137 = vsel %vm393, %v894, 0.0
  %v1138 = vadd.f32 %v1136, %v1137
  %v1139 = vsel %vm393, %v895, 0.0
  %v1140 = vadd.f32 %v1138, %v1139
  %v1141 = vsel %vm393, %v896, 0.0
  %v1142 = vadd.f32 %v1140, %v1141
  %v1143 = vsel %vm393, %v897, 0.0
  %v1144 = vadd.f32 %v1142, %v1143
  %v1145 = vsel %vm393, %v898, 0.0
  %v1146 = vadd.f32 %v1144, %v1145
  %v1147 = vsel %vm393, %v899, 0.0
  %v1148 = vadd.f32 %v1146, %v1147
  %v1149 = vrot.slane %v1148, 4
  %v1150 = vadd.f32 %v1148, %v1149
  %v1151 = vrot.slane %v1150, 2
  %v1152 = vadd.f32 %v1150, %v1151
  %v1153 = vrot.slane %v1152, 1
  %v1154 = vadd.f32 %v1152, %v1153
  %s1155 = scalar_lea.vmem %s1, 2000
  %v1156 = vld [vmem:[%s1155] sm:$0xff]
  %v1157 = vld [vmem:[%s1155 + $0x8] sm:$0xff]
  %v1158 = vld [vmem:[%s1155 + $0x10] sm:$0xff]
  %v1159 = vld [vmem:[%s1155 + $0x18] sm:$0xff]
  %v1160 = vld [vmem:[%s1155 + $0x20] sm:$0xff]
  %v1161 = vld [vmem:[%s1155 + $0x28] sm:$0xff]
  %v1162 = vld [vmem:[%s1155 + $0x30] sm:$0xff]
  %v1163 = vld [vmem:[%s1155 + $0x38] sm:$0xff]
  %v1164 = vld [vmem:[%s1155 + $0x40] sm:$0xff]
  %v1165 = vld [vmem:[%s1155 + $0x48] sm:$0xff]
  %v1166 = vld [vmem:[%s1155 + $0x50] sm:$0xff]
  %v1167 = vld [vmem:[%s1155 + $0x58] sm:$0xff]
  %v1168 = vld [vmem:[%s1155 + $0x60] sm:$0xff]
  %v1169 = vld [vmem:[%s1155 + $0x68] sm:$0xff]
  %v1170 = vld [vmem:[%s1155 + $0x70] sm:$0xff]
  %v1171 = vld [vmem:[%s1155 + $0x78] sm:$0xff]
  %v1172 = vld [vmem:[%s1155 + $0x80] sm:$0xff]
  %v1173 = vld [vmem:[%s1155 + $0x88] sm:$0xff]
  %v1174 = vld [vmem:[%s1155 + $0x90] sm:$0xff]
  %v1175 = vld [vmem:[%s1155 + $0x98] sm:$0xff]
  %v1176 = vld [vmem:[%s1155 + $0xa0] sm:$0xff]
  %v1177 = vld [vmem:[%s1155 + $0xa8] sm:$0xff]
  %v1178 = vld [vmem:[%s1155 + $0xb0] sm:$0xff]
  %v1179 = vld [vmem:[%s1155 + $0xb8] sm:$0xff]
  %v1180 = vld [vmem:[%s1155 + $0xc0] sm:$0xff]
  %v1181 = vld [vmem:[%s1155 + $0xc8] sm:$0xff]
  %v1182 = vld [vmem:[%s1155 + $0xd0] sm:$0xff]
  %v1183 = vld [vmem:[%s1155 + $0xd8] sm:$0xff]
  %v1184 = vld [vmem:[%s1155 + $0xe0] sm:$0xff]
  %v1185 = vld [vmem:[%s1155 + $0xe8] sm:$0xff]
  %v1186 = vld [vmem:[%s1155 + $0xf0] sm:$0xff]
  %v1187 = vld [vmem:[%s1155 + $0xf8] sm:$0xff]
  %v1188 = vld [vmem:[%s1155 + $0x100] sm:$0xff]
  %v1189 = vld [vmem:[%s1155 + $0x108] sm:$0xff]
  %v1190 = vld [vmem:[%s1155 + $0x110] sm:$0xff]
  %v1191 = vld [vmem:[%s1155 + $0x118] sm:$0xff]
  %v1192 = vld [vmem:[%s1155 + $0x120] sm:$0xff]
  %v1193 = vld [vmem:[%s1155 + $0x128] sm:$0xff]
  %v1194 = vld [vmem:[%s1155 + $0x130] sm:$0xff]
  %v1195 = vld [vmem:[%s1155 + $0x138] sm:$0xff]
  %v1196 = vld [vmem:[%s1155 + $0x140] sm:$0xff]
  %v1197 = vld [vmem:[%s1155 + $0x148] sm:$0xff]
  %v1198 = vld [vmem:[%s1155 + $0x150] sm:$0xff]
  %v1199 = vld [vmem:[%s1155 + $0x158] sm:$0xff]
  %v1200 = vld [vmem:[%s1155 + $0x160] sm:$0xff]
  %v1201 = vld [vmem:[%s1155 + $0x168] sm:$0xff]
  %v1202 = vld [vmem:[%s1155 + $0x170] sm:$0xff]
  %v1203 = vld [vmem:[%s1155 + $0x178] sm:$0xff]
  %v1204 = vld [vmem:[%s1155 + $0x180] sm:$0xff]
  %v1205 = vld [vmem:[%s1155 + $0x188] sm:$0xff]
  %v1206 = vld [vmem:[%s1155 + $0x190] sm:$0xff]
  %v1207 = vld [vmem:[%s1155 + $0x198] sm:$0xff]
  %v1208 = vld [vmem:[%s1155 + $0x1a0] sm:$0xff]
  %v1209 = vld [vmem:[%s1155 + $0x1a8] sm:$0xff]
  %v1210 = vld [vmem:[%s1155 + $0x1b0] sm:$0xff]
  %v1211 = vld [vmem:[%s1155 + $0x1b8] sm:$0xff]
  %v1212 = vld [vmem:[%s1155 + $0x1c0] sm:$0xff]
  %v1213 = vld [vmem:[%s1155 + $0x1c8] sm:$0xff]
  %v1214 = vld [vmem:[%s1155 + $0x1d0] sm:$0xff]
  %v1215 = vld [vmem:[%s1155 + $0x1d8] sm:$0xff]
  %v1216 = vld [vmem:[%s1155 + $0x1e0] sm:$0xff]
  %v1217 = vld [vmem:[%s1155 + $0x1e8] sm:$0xff]
  %v1218 = vld [vmem:[%s1155 + $0x1f0] sm:$0xff]
  %v1219 = vld [vmem:[%s1155 + $0x1f8] sm:$0xff]
  %v1220 = vld [vmem:[%s1155 + $0x200] sm:$0xff]
  %v1221 = vld [vmem:[%s1155 + $0x208] sm:$0xff]
  %v1222 = vld [vmem:[%s1155 + $0x210] sm:$0xff]
  %v1223 = vld [vmem:[%s1155 + $0x218] sm:$0xff]
  %v1224 = vld [vmem:[%s1155 + $0x220] sm:$0xff]
  %v1225 = vld [vmem:[%s1155 + $0x228] sm:$0xff]
  %v1226 = vld [vmem:[%s1155 + $0x230] sm:$0xff]
  %v1227 = vld [vmem:[%s1155 + $0x238] sm:$0xff]
  %v1228 = vld [vmem:[%s1155 + $0x240] sm:$0xff]
  %v1229 = vld [vmem:[%s1155 + $0x248] sm:$0xff]
  %v1230 = vld [vmem:[%s1155 + $0x250] sm:$0xff]
  %v1231 = vld [vmem:[%s1155 + $0x258] sm:$0xff]
  %v1232 = vld [vmem:[%s1155 + $0x260] sm:$0xff]
  %v1233 = vld [vmem:[%s1155 + $0x268] sm:$0xff]
  %v1234 = vld [vmem:[%s1155 + $0x270] sm:$0xff]
  %v1235 = vld [vmem:[%s1155 + $0x278] sm:$0xff]
  %v1236 = vld [vmem:[%s1155 + $0x280] sm:$0xff]
  %v1237 = vld [vmem:[%s1155 + $0x288] sm:$0xff]
  %v1238 = vld [vmem:[%s1155 + $0x290] sm:$0xff]
  %v1239 = vld [vmem:[%s1155 + $0x298] sm:$0xff]
  %v1240 = vld [vmem:[%s1155 + $0x2a0] sm:$0xff]
  %v1241 = vld [vmem:[%s1155 + $0x2a8] sm:$0xff]
  %v1242 = vld [vmem:[%s1155 + $0x2b0] sm:$0xff]
  %v1243 = vld [vmem:[%s1155 + $0x2b8] sm:$0xff]
  %v1244 = vld [vmem:[%s1155 + $0x2c0] sm:$0xff]
  %v1245 = vld [vmem:[%s1155 + $0x2c8] sm:$0xff]
  %v1246 = vld [vmem:[%s1155 + $0x2d0] sm:$0xff]
  %v1247 = vld [vmem:[%s1155 + $0x2d8] sm:$0xff]
  %v1248 = vld [vmem:[%s1155 + $0x2e0] sm:$0xff]
  %v1249 = vld [vmem:[%s1155 + $0x2e8] sm:$0xff]
  %v1250 = vld [vmem:[%s1155 + $0x2f0] sm:$0xff]
  %v1251 = vld [vmem:[%s1155 + $0x2f8] sm:$0xff]
  %v1252 = vld [vmem:[%s1155 + $0x300] sm:$0xff]
  %v1253 = vld [vmem:[%s1155 + $0x308] sm:$0xff]
  %v1254 = vld [vmem:[%s1155 + $0x310] sm:$0xff]
  %v1255 = vld [vmem:[%s1155 + $0x318] sm:$0xff]
  %v1256 = vld [vmem:[%s1155 + $0x320] sm:$0xff]
  %v1257 = vld [vmem:[%s1155 + $0x328] sm:$0xff]
  %v1258 = vld [vmem:[%s1155 + $0x330] sm:$0xff]
  %v1259 = vld [vmem:[%s1155 + $0x338] sm:$0xff]
  %v1260 = vld [vmem:[%s1155 + $0x340] sm:$0xff]
  %v1261 = vld [vmem:[%s1155 + $0x348] sm:$0xff]
  %v1262 = vld [vmem:[%s1155 + $0x350] sm:$0xff]
  %v1263 = vld [vmem:[%s1155 + $0x358] sm:$0xff]
  %v1264 = vld [vmem:[%s1155 + $0x360] sm:$0xff]
  %v1265 = vld [vmem:[%s1155 + $0x368] sm:$0xff]
  %v1266 = vld [vmem:[%s1155 + $0x370] sm:$0xff]
  %v1267 = vld [vmem:[%s1155 + $0x378] sm:$0xff]
  %v1268 = vld [vmem:[%s1155 + $0x380] sm:$0xff]
  %v1269 = vld [vmem:[%s1155 + $0x388] sm:$0xff]
  %v1270 = vld [vmem:[%s1155 + $0x390] sm:$0xff]
  %v1271 = vld [vmem:[%s1155 + $0x398] sm:$0xff]
  %v1272 = vld [vmem:[%s1155 + $0x3a0] sm:$0xff]
  %v1273 = vld [vmem:[%s1155 + $0x3a8] sm:$0xff]
  %v1274 = vld [vmem:[%s1155 + $0x3b0] sm:$0xff]
  %v1275 = vld [vmem:[%s1155 + $0x3b8] sm:$0xff]
  %v1276 = vld [vmem:[%s1155 + $0x3c0] sm:$0xff]
  %v1277 = vld [vmem:[%s1155 + $0x3c8] sm:$0xff]
  %v1278 = vld [vmem:[%s1155 + $0x3d0] sm:$0xff]
  %v1279 = vld [vmem:[%s1155 + $0x3d8] sm:$0xff]
  %v1280 = vld [vmem:[%s1155 + $0x3e0] sm:$0xff]
  %v1281 = vmul.f32 %v18, %v1156
  %v1282 = vmul.f32 %v19, %v1157
  %v1283 = vmul.f32 %v20, %v1158
  %v1284 = vmul.f32 %v21, %v1159
  %v1285 = vmul.f32 %v22, %v1160
  %v1286 = vmul.f32 %v23, %v1161
  %v1287 = vmul.f32 %v24, %v1162
  %v1288 = vmul.f32 %v25, %v1163
  %v1289 = vmul.f32 %v26, %v1164
  %v1290 = vmul.f32 %v27, %v1165
  %v1291 = vmul.f32 %v28, %v1166
  %v1292 = vmul.f32 %v29, %v1167
  %v1293 = vmul.f32 %v30, %v1168
  %v1294 = vmul.f32 %v31, %v1169
  %v1295 = vmul.f32 %v32, %v1170
  %v1296 = vmul.f32 %v33, %v1171
  %v1297 = vmul.f32 %v34, %v1172
  %v1298 = vmul.f32 %v35, %v1173
  %v1299 = vmul.f32 %v36, %v1174
  %v1300 = vmul.f32 %v37, %v1175
  %v1301 = vmul.f32 %v38, %v1176
  %v1302 = vmul.f32 %v39, %v1177
  %v1303 = vmul.f32 %v40, %v1178
  %v1304 = vmul.f32 %v41, %v1179
  %v1305 = vmul.f32 %v42, %v1180
  %v1306 = vmul.f32 %v43, %v1181
  %v1307 = vmul.f32 %v44, %v1182
  %v1308 = vmul.f32 %v45, %v1183
  %v1309 = vmul.f32 %v46, %v1184
  %v1310 = vmul.f32 %v47, %v1185
  %v1311 = vmul.f32 %v48, %v1186
  %v1312 = vmul.f32 %v49, %v1187
  %v1313 = vmul.f32 %v50, %v1188
  %v1314 = vmul.f32 %v51, %v1189
  %v1315 = vmul.f32 %v52, %v1190
  %v1316 = vmul.f32 %v53, %v1191
  %v1317 = vmul.f32 %v54, %v1192
  %v1318 = vmul.f32 %v55, %v1193
  %v1319 = vmul.f32 %v56, %v1194
  %v1320 = vmul.f32 %v57, %v1195
  %v1321 = vmul.f32 %v58, %v1196
  %v1322 = vmul.f32 %v59, %v1197
  %v1323 = vmul.f32 %v60, %v1198
  %v1324 = vmul.f32 %v61, %v1199
  %v1325 = vmul.f32 %v62, %v1200
  %v1326 = vmul.f32 %v63, %v1201
  %v1327 = vmul.f32 %v64, %v1202
  %v1328 = vmul.f32 %v65, %v1203
  %v1329 = vmul.f32 %v66, %v1204
  %v1330 = vmul.f32 %v67, %v1205
  %v1331 = vmul.f32 %v68, %v1206
  %v1332 = vmul.f32 %v69, %v1207
  %v1333 = vmul.f32 %v70, %v1208
  %v1334 = vmul.f32 %v71, %v1209
  %v1335 = vmul.f32 %v72, %v1210
  %v1336 = vmul.f32 %v73, %v1211
  %v1337 = vmul.f32 %v74, %v1212
  %v1338 = vmul.f32 %v75, %v1213
  %v1339 = vmul.f32 %v76, %v1214
  %v1340 = vmul.f32 %v77, %v1215
  %v1341 = vmul.f32 %v78, %v1216
  %v1342 = vmul.f32 %v79, %v1217
  %v1343 = vmul.f32 %v80, %v1218
  %v1344 = vmul.f32 %v81, %v1219
  %v1345 = vmul.f32 %v82, %v1220
  %v1346 = vmul.f32 %v83, %v1221
  %v1347 = vmul.f32 %v84, %v1222
  %v1348 = vmul.f32 %v85, %v1223
  %v1349 = vmul.f32 %v86, %v1224
  %v1350 = vmul.f32 %v87, %v1225
  %v1351 = vmul.f32 %v88, %v1226
  %v1352 = vmul.f32 %v89, %v1227
  %v1353 = vmul.f32 %v90, %v1228
  %v1354 = vmul.f32 %v91, %v1229
  %v1355 = vmul.f32 %v92, %v1230
  %v1356 = vmul.f32 %v93, %v1231
  %v1357 = vmul.f32 %v94, %v1232
  %v1358 = vmul.f32 %v95, %v1233
  %v1359 = vmul.f32 %v96, %v1234
  %v1360 = vmul.f32 %v97, %v1235
  %v1361 = vmul.f32 %v98, %v1236
  %v1362 = vmul.f32 %v99, %v1237
  %v1363 = vmul.f32 %v100, %v1238
  %v1364 = vmul.f32 %v101, %v1239
  %v1365 = vmul.f32 %v102, %v1240
  %v1366 = vmul.f32 %v103, %v1241
  %v1367 = vmul.f32 %v104, %v1242
  %v1368 = vmul.f32 %v105, %v1243
  %v1369 = vmul.f32 %v106, %v1244
  %v1370 = vmul.f32 %v107, %v1245
  %v1371 = vmul.f32 %v108, %v1246
  %v1372 = vmul.f32 %v109, %v1247
  %v1373 = vmul.f32 %v110, %v1248
  %v1374 = vmul.f32 %v111, %v1249
  %v1375 = vmul.f32 %v112, %v1250
  %v1376 = vmul.f32 %v113, %v1251
  %v1377 = vmul.f32 %v114, %v1252
  %v1378 = vmul.f32 %v115, %v1253
  %v1379 = vmul.f32 %v116, %v1254
  %v1380 = vmul.f32 %v117, %v1255
  %v1381 = vmul.f32 %v118, %v1256
  %v1382 = vmul.f32 %v119, %v1257
  %v1383 = vmul.f32 %v120, %v1258
  %v1384 = vmul.f32 %v121, %v1259
  %v1385 = vmul.f32 %v122, %v1260
  %v1386 = vmul.f32 %v123, %v1261
  %v1387 = vmul.f32 %v124, %v1262
  %v1388 = vmul.f32 %v125, %v1263
  %v1389 = vmul.f32 %v126, %v1264
  %v1390 = vmul.f32 %v127, %v1265
  %v1391 = vmul.f32 %v128, %v1266
  %v1392 = vmul.f32 %v129, %v1267
  %v1393 = vmul.f32 %v130, %v1268
  %v1394 = vmul.f32 %v131, %v1269
  %v1395 = vmul.f32 %v132, %v1270
  %v1396 = vmul.f32 %v133, %v1271
  %v1397 = vmul.f32 %v134, %v1272
  %v1398 = vmul.f32 %v135, %v1273
  %v1399 = vmul.f32 %v136, %v1274
  %v1400 = vmul.f32 %v137, %v1275
  %v1401 = vmul.f32 %v138, %v1276
  %v1402 = vmul.f32 %v139, %v1277
  %v1403 = vmul.f32 %v140, %v1278
  %v1404 = vmul.f32 %v141, %v1279
  %v1405 = vmul.f32 %v142, %v1280
  %v1406 = vsel %vm393, %v1281, 0.0
  %v1407 = vsel %vm393, %v1282, 0.0
  %v1408 = vadd.f32 %v1406, %v1407
  %v1409 = vsel %vm393, %v1283, 0.0
  %v1410 = vadd.f32 %v1408, %v1409
  %v1411 = vsel %vm393, %v1284, 0.0
  %v1412 = vadd.f32 %v1410, %v1411
  %v1413 = vsel %vm393, %v1285, 0.0
  %v1414 = vadd.f32 %v1412, %v1413
  %v1415 = vsel %vm393, %v1286, 0.0
  %v1416 = vadd.f32 %v1414, %v1415
  %v1417 = vsel %vm393, %v1287, 0.0
  %v1418 = vadd.f32 %v1416, %v1417
  %v1419 = vsel %vm393, %v1288, 0.0
  %v1420 = vadd.f32 %v1418, %v1419
  %v1421 = vsel %vm393, %v1289, 0.0
  %v1422 = vadd.f32 %v1420, %v1421
  %v1423 = vsel %vm393, %v1290, 0.0
  %v1424 = vadd.f32 %v1422, %v1423
  %v1425 = vsel %vm393, %v1291, 0.0
  %v1426 = vadd.f32 %v1424, %v1425
  %v1427 = vsel %vm393, %v1292, 0.0
  %v1428 = vadd.f32 %v1426, %v1427
  %v1429 = vsel %vm393, %v1293, 0.0
  %v1430 = vadd.f32 %v1428, %v1429
  %v1431 = vsel %vm393, %v1294, 0.0
  %v1432 = vadd.f32 %v1430, %v1431
  %v1433 = vsel %vm393, %v1295, 0.0
  %v1434 = vadd.f32 %v1432, %v1433
  %v1435 = vsel %vm393, %v1296, 0.0
  %v1436 = vadd.f32 %v1434, %v1435
  %v1437 = vsel %vm393, %v1297, 0.0
  %v1438 = vadd.f32 %v1436, %v1437
  %v1439 = vsel %vm393, %v1298, 0.0
  %v1440 = vadd.f32 %v1438, %v1439
  %v1441 = vsel %vm393, %v1299, 0.0
  %v1442 = vadd.f32 %v1440, %v1441
  %v1443 = vsel %vm393, %v1300, 0.0
  %v1444 = vadd.f32 %v1442, %v1443
  %v1445 = vsel %vm393, %v1301, 0.0
  %v1446 = vadd.f32 %v1444, %v1445
  %v1447 = vsel %vm393, %v1302, 0.0
  %v1448 = vadd.f32 %v1446, %v1447
  %v1449 = vsel %vm393, %v1303, 0.0
  %v1450 = vadd.f32 %v1448, %v1449
  %v1451 = vsel %vm393, %v1304, 0.0
  %v1452 = vadd.f32 %v1450, %v1451
  %v1453 = vsel %vm393, %v1305, 0.0
  %v1454 = vadd.f32 %v1452, %v1453
  %v1455 = vsel %vm393, %v1306, 0.0
  %v1456 = vadd.f32 %v1454, %v1455
  %v1457 = vsel %vm393, %v1307, 0.0
  %v1458 = vadd.f32 %v1456, %v1457
  %v1459 = vsel %vm393, %v1308, 0.0
  %v1460 = vadd.f32 %v1458, %v1459
  %v1461 = vsel %vm393, %v1309, 0.0
  %v1462 = vadd.f32 %v1460, %v1461
  %v1463 = vsel %vm393, %v1310, 0.0
  %v1464 = vadd.f32 %v1462, %v1463
  %v1465 = vsel %vm393, %v1311, 0.0
  %v1466 = vadd.f32 %v1464, %v1465
  %v1467 = vsel %vm393, %v1312, 0.0
  %v1468 = vadd.f32 %v1466, %v1467
  %v1469 = vsel %vm393, %v1313, 0.0
  %v1470 = vadd.f32 %v1468, %v1469
  %v1471 = vsel %vm393, %v1314, 0.0
  %v1472 = vadd.f32 %v1470, %v1471
  %v1473 = vsel %vm393, %v1315, 0.0
  %v1474 = vadd.f32 %v1472, %v1473
  %v1475 = vsel %vm393, %v1316, 0.0
  %v1476 = vadd.f32 %v1474, %v1475
  %v1477 = vsel %vm393, %v1317, 0.0
  %v1478 = vadd.f32 %v1476, %v1477
  %v1479 = vsel %vm393, %v1318, 0.0
  %v1480 = vadd.f32 %v1478, %v1479
  %v1481 = vsel %vm393, %v1319, 0.0
  %v1482 = vadd.f32 %v1480, %v1481
  %v1483 = vsel %vm393, %v1320, 0.0
  %v1484 = vadd.f32 %v1482, %v1483
  %v1485 = vsel %vm393, %v1321, 0.0
  %v1486 = vadd.f32 %v1484, %v1485
  %v1487 = vsel %vm393, %v1322, 0.0
  %v1488 = vadd.f32 %v1486, %v1487
  %v1489 = vsel %vm393, %v1323, 0.0
  %v1490 = vadd.f32 %v1488, %v1489
  %v1491 = vsel %vm393, %v1324, 0.0
  %v1492 = vadd.f32 %v1490, %v1491
  %v1493 = vsel %vm393, %v1325, 0.0
  %v1494 = vadd.f32 %v1492, %v1493
  %v1495 = vsel %vm393, %v1326, 0.0
  %v1496 = vadd.f32 %v1494, %v1495
  %v1497 = vsel %vm393, %v1327, 0.0
  %v1498 = vadd.f32 %v1496, %v1497
  %v1499 = vsel %vm393, %v1328, 0.0
  %v1500 = vadd.f32 %v1498, %v1499
  %v1501 = vsel %vm393, %v1329, 0.0
  %v1502 = vadd.f32 %v1500, %v1501
  %v1503 = vsel %vm393, %v1330, 0.0
  %v1504 = vadd.f32 %v1502, %v1503
  %v1505 = vsel %vm393, %v1331, 0.0
  %v1506 = vadd.f32 %v1504, %v1505
  %v1507 = vsel %vm393, %v1332, 0.0
  %v1508 = vadd.f32 %v1506, %v1507
  %v1509 = vsel %vm393, %v1333, 0.0
  %v1510 = vadd.f32 %v1508, %v1509
  %v1511 = vsel %vm393, %v1334, 0.0
  %v1512 = vadd.f32 %v1510, %v1511
  %v1513 = vsel %vm393, %v1335, 0.0
  %v1514 = vadd.f32 %v1512, %v1513
  %v1515 = vsel %vm393, %v1336, 0.0
  %v1516 = vadd.f32 %v1514, %v1515
  %v1517 = vsel %vm393, %v1337, 0.0
  %v1518 = vadd.f32 %v1516, %v1517
  %v1519 = vsel %vm393, %v1338, 0.0
  %v1520 = vadd.f32 %v1518, %v1519
  %v1521 = vsel %vm393, %v1339, 0.0
  %v1522 = vadd.f32 %v1520, %v1521
  %v1523 = vsel %vm393, %v1340, 0.0
  %v1524 = vadd.f32 %v1522, %v1523
  %v1525 = vsel %vm393, %v1341, 0.0
  %v1526 = vadd.f32 %v1524, %v1525
  %v1527 = vsel %vm393, %v1342, 0.0
  %v1528 = vadd.f32 %v1526, %v1527
  %v1529 = vsel %vm393, %v1343, 0.0
  %v1530 = vadd.f32 %v1528, %v1529
  %v1531 = vsel %vm393, %v1344, 0.0
  %v1532 = vadd.f32 %v1530, %v1531
  %v1533 = vsel %vm393, %v1345, 0.0
  %v1534 = vadd.f32 %v1532, %v1533
  %v1535 = vsel %vm393, %v1346, 0.0
  %v1536 = vadd.f32 %v1534, %v1535
  %v1537 = vsel %vm393, %v1347, 0.0
  %v1538 = vadd.f32 %v1536, %v1537
  %v1539 = vsel %vm393, %v1348, 0.0
  %v1540 = vadd.f32 %v1538, %v1539
  %v1541 = vsel %vm393, %v1349, 0.0
  %v1542 = vadd.f32 %v1540, %v1541
  %v1543 = vsel %vm393, %v1350, 0.0
  %v1544 = vadd.f32 %v1542, %v1543
  %v1545 = vsel %vm393, %v1351, 0.0
  %v1546 = vadd.f32 %v1544, %v1545
  %v1547 = vsel %vm393, %v1352, 0.0
  %v1548 = vadd.f32 %v1546, %v1547
  %v1549 = vsel %vm393, %v1353, 0.0
  %v1550 = vadd.f32 %v1548, %v1549
  %v1551 = vsel %vm393, %v1354, 0.0
  %v1552 = vadd.f32 %v1550, %v1551
  %v1553 = vsel %vm393, %v1355, 0.0
  %v1554 = vadd.f32 %v1552, %v1553
  %v1555 = vsel %vm393, %v1356, 0.0
  %v1556 = vadd.f32 %v1554, %v1555
  %v1557 = vsel %vm393, %v1357, 0.0
  %v1558 = vadd.f32 %v1556, %v1557
  %v1559 = vsel %vm393, %v1358, 0.0
  %v1560 = vadd.f32 %v1558, %v1559
  %v1561 = vsel %vm393, %v1359, 0.0
  %v1562 = vadd.f32 %v1560, %v1561
  %v1563 = vsel %vm393, %v1360, 0.0
  %v1564 = vadd.f32 %v1562, %v1563
  %v1565 = vsel %vm393, %v1361, 0.0
  %v1566 = vadd.f32 %v1564, %v1565
  %v1567 = vsel %vm393, %v1362, 0.0
  %v1568 = vadd.f32 %v1566, %v1567
  %v1569 = vsel %vm393, %v1363, 0.0
  %v1570 = vadd.f32 %v1568, %v1569
  %v1571 = vsel %vm393, %v1364, 0.0
  %v1572 = vadd.f32 %v1570, %v1571
  %v1573 = vsel %vm393, %v1365, 0.0
  %v1574 = vadd.f32 %v1572, %v1573
  %v1575 = vsel %vm393, %v1366, 0.0
  %v1576 = vadd.f32 %v1574, %v1575
  %v1577 = vsel %vm393, %v1367, 0.0
  %v1578 = vadd.f32 %v1576, %v1577
  %v1579 = vsel %vm393, %v1368, 0.0
  %v1580 = vadd.f32 %v1578, %v1579
  %v1581 = vsel %vm393, %v1369, 0.0
  %v1582 = vadd.f32 %v1580, %v1581
  %v1583 = vsel %vm393, %v1370, 0.0
  %v1584 = vadd.f32 %v1582, %v1583
  %v1585 = vsel %vm393, %v1371, 0.0
  %v1586 = vadd.f32 %v1584, %v1585
  %v1587 = vsel %vm393, %v1372, 0.0
  %v1588 = vadd.f32 %v1586, %v1587
  %v1589 = vsel %vm393, %v1373, 0.0
  %v1590 = vadd.f32 %v1588, %v1589
  %v1591 = vsel %vm393, %v1374, 0.0
  %v1592 = vadd.f32 %v1590, %v1591
  %v1593 = vsel %vm393, %v1375, 0.0
  %v1594 = vadd.f32 %v1592, %v1593
  %v1595 = vsel %vm393, %v1376, 0.0
  %v1596 = vadd.f32 %v1594, %v1595
  %v1597 = vsel %vm393, %v1377, 0.0
  %v1598 = vadd.f32 %v1596, %v1597
  %v1599 = vsel %vm393, %v1378, 0.0
  %v1600 = vadd.f32 %v1598, %v1599
  %v1601 = vsel %vm393, %v1379, 0.0
  %v1602 = vadd.f32 %v1600, %v1601
  %v1603 = vsel %vm393, %v1380, 0.0
  %v1604 = vadd.f32 %v1602, %v1603
  %v1605 = vsel %vm393, %v1381, 0.0
  %v1606 = vadd.f32 %v1604, %v1605
  %v1607 = vsel %vm393, %v1382, 0.0
  %v1608 = vadd.f32 %v1606, %v1607
  %v1609 = vsel %vm393, %v1383, 0.0
  %v1610 = vadd.f32 %v1608, %v1609
  %v1611 = vsel %vm393, %v1384, 0.0
  %v1612 = vadd.f32 %v1610, %v1611
  %v1613 = vsel %vm393, %v1385, 0.0
  %v1614 = vadd.f32 %v1612, %v1613
  %v1615 = vsel %vm393, %v1386, 0.0
  %v1616 = vadd.f32 %v1614, %v1615
  %v1617 = vsel %vm393, %v1387, 0.0
  %v1618 = vadd.f32 %v1616, %v1617
  %v1619 = vsel %vm393, %v1388, 0.0
  %v1620 = vadd.f32 %v1618, %v1619
  %v1621 = vsel %vm393, %v1389, 0.0
  %v1622 = vadd.f32 %v1620, %v1621
  %v1623 = vsel %vm393, %v1390, 0.0
  %v1624 = vadd.f32 %v1622, %v1623
  %v1625 = vsel %vm393, %v1391, 0.0
  %v1626 = vadd.f32 %v1624, %v1625
  %v1627 = vsel %vm393, %v1392, 0.0
  %v1628 = vadd.f32 %v1626, %v1627
  %v1629 = vsel %vm393, %v1393, 0.0
  %v1630 = vadd.f32 %v1628, %v1629
  %v1631 = vsel %vm393, %v1394, 0.0
  %v1632 = vadd.f32 %v1630, %v1631
  %v1633 = vsel %vm393, %v1395, 0.0
  %v1634 = vadd.f32 %v1632, %v1633
  %v1635 = vsel %vm393, %v1396, 0.0
  %v1636 = vadd.f32 %v1634, %v1635
  %v1637 = vsel %vm393, %v1397, 0.0
  %v1638 = vadd.f32 %v1636, %v1637
  %v1639 = vsel %vm393, %v1398, 0.0
  %v1640 = vadd.f32 %v1638, %v1639
  %v1641 = vsel %vm393, %v1399, 0.0
  %v1642 = vadd.f32 %v1640, %v1641
  %v1643 = vsel %vm393, %v1400, 0.0
  %v1644 = vadd.f32 %v1642, %v1643
  %v1645 = vsel %vm393, %v1401, 0.0
  %v1646 = vadd.f32 %v1644, %v1645
  %v1647 = vsel %vm393, %v1402, 0.0
  %v1648 = vadd.f32 %v1646, %v1647
  %v1649 = vsel %vm393, %v1403, 0.0
  %v1650 = vadd.f32 %v1648, %v1649
  %v1651 = vsel %vm393, %v1404, 0.0
  %v1652 = vadd.f32 %v1650, %v1651
  %v1653 = vsel %vm393, %v1405, 0.0
  %v1654 = vadd.f32 %v1652, %v1653
  %v1655 = vrot.slane %v1654, 4
  %v1656 = vadd.f32 %v1654, %v1655
  %v1657 = vrot.slane %v1656, 2
  %v1658 = vadd.f32 %v1656, %v1657
  %v1659 = vrot.slane %v1658, 1
  %v1660 = vadd.f32 %v1658, %v1659
  %s1661 = scalar_lea.vmem %s1, 3000
  %v1662 = vld [vmem:[%s1661] sm:$0xff]
  %v1663 = vld [vmem:[%s1661 + $0x8] sm:$0xff]
  %v1664 = vld [vmem:[%s1661 + $0x10] sm:$0xff]
  %v1665 = vld [vmem:[%s1661 + $0x18] sm:$0xff]
  %v1666 = vld [vmem:[%s1661 + $0x20] sm:$0xff]
  %v1667 = vld [vmem:[%s1661 + $0x28] sm:$0xff]
  %v1668 = vld [vmem:[%s1661 + $0x30] sm:$0xff]
  %v1669 = vld [vmem:[%s1661 + $0x38] sm:$0xff]
  %v1670 = vld [vmem:[%s1661 + $0x40] sm:$0xff]
  %v1671 = vld [vmem:[%s1661 + $0x48] sm:$0xff]
  %v1672 = vld [vmem:[%s1661 + $0x50] sm:$0xff]
  %v1673 = vld [vmem:[%s1661 + $0x58] sm:$0xff]
  %v1674 = vld [vmem:[%s1661 + $0x60] sm:$0xff]
  %v1675 = vld [vmem:[%s1661 + $0x68] sm:$0xff]
  %v1676 = vld [vmem:[%s1661 + $0x70] sm:$0xff]
  %v1677 = vld [vmem:[%s1661 + $0x78] sm:$0xff]
  %v1678 = vld [vmem:[%s1661 + $0x80] sm:$0xff]
  %v1679 = vld [vmem:[%s1661 + $0x88] sm:$0xff]
  %v1680 = vld [vmem:[%s1661 + $0x90] sm:$0xff]
  %v1681 = vld [vmem:[%s1661 + $0x98] sm:$0xff]
  %v1682 = vld [vmem:[%s1661 + $0xa0] sm:$0xff]
  %v1683 = vld [vmem:[%s1661 + $0xa8] sm:$0xff]
  %v1684 = vld [vmem:[%s1661 + $0xb0] sm:$0xff]
  %v1685 = vld [vmem:[%s1661 + $0xb8] sm:$0xff]
  %v1686 = vld [vmem:[%s1661 + $0xc0] sm:$0xff]
  %v1687 = vld [vmem:[%s1661 + $0xc8] sm:$0xff]
  %v1688 = vld [vmem:[%s1661 + $0xd0] sm:$0xff]
  %v1689 = vld [vmem:[%s1661 + $0xd8] sm:$0xff]
  %v1690 = vld [vmem:[%s1661 + $0xe0] sm:$0xff]
  %v1691 = vld [vmem:[%s1661 + $0xe8] sm:$0xff]
  %v1692 = vld [vmem:[%s1661 + $0xf0] sm:$0xff]
  %v1693 = vld [vmem:[%s1661 + $0xf8] sm:$0xff]
  %v1694 = vld [vmem:[%s1661 + $0x100] sm:$0xff]
  %v1695 = vld [vmem:[%s1661 + $0x108] sm:$0xff]
  %v1696 = vld [vmem:[%s1661 + $0x110] sm:$0xff]
  %v1697 = vld [vmem:[%s1661 + $0x118] sm:$0xff]
  %v1698 = vld [vmem:[%s1661 + $0x120] sm:$0xff]
  %v1699 = vld [vmem:[%s1661 + $0x128] sm:$0xff]
  %v1700 = vld [vmem:[%s1661 + $0x130] sm:$0xff]
  %v1701 = vld [vmem:[%s1661 + $0x138] sm:$0xff]
  %v1702 = vld [vmem:[%s1661 + $0x140] sm:$0xff]
  %v1703 = vld [vmem:[%s1661 + $0x148] sm:$0xff]
  %v1704 = vld [vmem:[%s1661 + $0x150] sm:$0xff]
  %v1705 = vld [vmem:[%s1661 + $0x158] sm:$0xff]
  %v1706 = vld [vmem:[%s1661 + $0x160] sm:$0xff]
  %v1707 = vld [vmem:[%s1661 + $0x168] sm:$0xff]
  %v1708 = vld [vmem:[%s1661 + $0x170] sm:$0xff]
  %v1709 = vld [vmem:[%s1661 + $0x178] sm:$0xff]
  %v1710 = vld [vmem:[%s1661 + $0x180] sm:$0xff]
  %v1711 = vld [vmem:[%s1661 + $0x188] sm:$0xff]
  %v1712 = vld [vmem:[%s1661 + $0x190] sm:$0xff]
  %v1713 = vld [vmem:[%s1661 + $0x198] sm:$0xff]
  %v1714 = vld [vmem:[%s1661 + $0x1a0] sm:$0xff]
  %v1715 = vld [vmem:[%s1661 + $0x1a8] sm:$0xff]
  %v1716 = vld [vmem:[%s1661 + $0x1b0] sm:$0xff]
  %v1717 = vld [vmem:[%s1661 + $0x1b8] sm:$0xff]
  %v1718 = vld [vmem:[%s1661 + $0x1c0] sm:$0xff]
  %v1719 = vld [vmem:[%s1661 + $0x1c8] sm:$0xff]
  %v1720 = vld [vmem:[%s1661 + $0x1d0] sm:$0xff]
  %v1721 = vld [vmem:[%s1661 + $0x1d8] sm:$0xff]
  %v1722 = vld [vmem:[%s1661 + $0x1e0] sm:$0xff]
  %v1723 = vld [vmem:[%s1661 + $0x1e8] sm:$0xff]
  %v1724 = vld [vmem:[%s1661 + $0x1f0] sm:$0xff]
  %v1725 = vld [vmem:[%s1661 + $0x1f8] sm:$0xff]
  %v1726 = vld [vmem:[%s1661 + $0x200] sm:$0xff]
  %v1727 = vld [vmem:[%s1661 + $0x208] sm:$0xff]
  %v1728 = vld [vmem:[%s1661 + $0x210] sm:$0xff]
  %v1729 = vld [vmem:[%s1661 + $0x218] sm:$0xff]
  %v1730 = vld [vmem:[%s1661 + $0x220] sm:$0xff]
  %v1731 = vld [vmem:[%s1661 + $0x228] sm:$0xff]
  %v1732 = vld [vmem:[%s1661 + $0x230] sm:$0xff]
  %v1733 = vld [vmem:[%s1661 + $0x238] sm:$0xff]
  %v1734 = vld [vmem:[%s1661 + $0x240] sm:$0xff]
  %v1735 = vld [vmem:[%s1661 + $0x248] sm:$0xff]
  %v1736 = vld [vmem:[%s1661 + $0x250] sm:$0xff]
  %v1737 = vld [vmem:[%s1661 + $0x258] sm:$0xff]
  %v1738 = vld [vmem:[%s1661 + $0x260] sm:$0xff]
  %v1739 = vld [vmem:[%s1661 + $0x268] sm:$0xff]
  %v1740 = vld [vmem:[%s1661 + $0x270] sm:$0xff]
  %v1741 = vld [vmem:[%s1661 + $0x278] sm:$0xff]
  %v1742 = vld [vmem:[%s1661 + $0x280] sm:$0xff]
  %v1743 = vld [vmem:[%s1661 + $0x288] sm:$0xff]
  %v1744 = vld [vmem:[%s1661 + $0x290] sm:$0xff]
  %v1745 = vld [vmem:[%s1661 + $0x298] sm:$0xff]
  %v1746 = vld [vmem:[%s1661 + $0x2a0] sm:$0xff]
  %v1747 = vld [vmem:[%s1661 + $0x2a8] sm:$0xff]
  %v1748 = vld [vmem:[%s1661 + $0x2b0] sm:$0xff]
  %v1749 = vld [vmem:[%s1661 + $0x2b8] sm:$0xff]
  %v1750 = vld [vmem:[%s1661 + $0x2c0] sm:$0xff]
  %v1751 = vld [vmem:[%s1661 + $0x2c8] sm:$0xff]
  %v1752 = vld [vmem:[%s1661 + $0x2d0] sm:$0xff]
  %v1753 = vld [vmem:[%s1661 + $0x2d8] sm:$0xff]
  %v1754 = vld [vmem:[%s1661 + $0x2e0] sm:$0xff]
  %v1755 = vld [vmem:[%s1661 + $0x2e8] sm:$0xff]
  %v1756 = vld [vmem:[%s1661 + $0x2f0] sm:$0xff]
  %v1757 = vld [vmem:[%s1661 + $0x2f8] sm:$0xff]
  %v1758 = vld [vmem:[%s1661 + $0x300] sm:$0xff]
  %v1759 = vld [vmem:[%s1661 + $0x308] sm:$0xff]
  %v1760 = vld [vmem:[%s1661 + $0x310] sm:$0xff]
  %v1761 = vld [vmem:[%s1661 + $0x318] sm:$0xff]
  %v1762 = vld [vmem:[%s1661 + $0x320] sm:$0xff]
  %v1763 = vld [vmem:[%s1661 + $0x328] sm:$0xff]
  %v1764 = vld [vmem:[%s1661 + $0x330] sm:$0xff]
  %v1765 = vld [vmem:[%s1661 + $0x338] sm:$0xff]
  %v1766 = vld [vmem:[%s1661 + $0x340] sm:$0xff]
  %v1767 = vld [vmem:[%s1661 + $0x348] sm:$0xff]
  %v1768 = vld [vmem:[%s1661 + $0x350] sm:$0xff]
  %v1769 = vld [vmem:[%s1661 + $0x358] sm:$0xff]
  %v1770 = vld [vmem:[%s1661 + $0x360] sm:$0xff]
  %v1771 = vld [vmem:[%s1661 + $0x368] sm:$0xff]
  %v1772 = vld [vmem:[%s1661 + $0x370] sm:$0xff]
  %v1773 = vld [vmem:[%s1661 + $0x378] sm:$0xff]
  %v1774 = vld [vmem:[%s1661 + $0x380] sm:$0xff]
  %v1775 = vld [vmem:[%s1661 + $0x388] sm:$0xff]
  %v1776 = vld [vmem:[%s1661 + $0x390] sm:$0xff]
  %v1777 = vld [vmem:[%s1661 + $0x398] sm:$0xff]
  %v1778 = vld [vmem:[%s1661 + $0x3a0] sm:$0xff]
  %v1779 = vld [vmem:[%s1661 + $0x3a8] sm:$0xff]
  %v1780 = vld [vmem:[%s1661 + $0x3b0] sm:$0xff]
  %v1781 = vld [vmem:[%s1661 + $0x3b8] sm:$0xff]
  %v1782 = vld [vmem:[%s1661 + $0x3c0] sm:$0xff]
  %v1783 = vld [vmem:[%s1661 + $0x3c8] sm:$0xff]
  %v1784 = vld [vmem:[%s1661 + $0x3d0] sm:$0xff]
  %v1785 = vld [vmem:[%s1661 + $0x3d8] sm:$0xff]
  %v1786 = vld [vmem:[%s1661 + $0x3e0] sm:$0xff]
  %v1787 = vmul.f32 %v18, %v1662
  %v1788 = vmul.f32 %v19, %v1663
  %v1789 = vmul.f32 %v20, %v1664
  %v1790 = vmul.f32 %v21, %v1665
  %v1791 = vmul.f32 %v22, %v1666
  %v1792 = vmul.f32 %v23, %v1667
  %v1793 = vmul.f32 %v24, %v1668
  %v1794 = vmul.f32 %v25, %v1669
  %v1795 = vmul.f32 %v26, %v1670
  %v1796 = vmul.f32 %v27, %v1671
  %v1797 = vmul.f32 %v28, %v1672
  %v1798 = vmul.f32 %v29, %v1673
  %v1799 = vmul.f32 %v30, %v1674
  %v1800 = vmul.f32 %v31, %v1675
  %v1801 = vmul.f32 %v32, %v1676
  %v1802 = vmul.f32 %v33, %v1677
  %v1803 = vmul.f32 %v34, %v1678
  %v1804 = vmul.f32 %v35, %v1679
  %v1805 = vmul.f32 %v36, %v1680
  %v1806 = vmul.f32 %v37, %v1681
  %v1807 = vmul.f32 %v38, %v1682
  %v1808 = vmul.f32 %v39, %v1683
  %v1809 = vmul.f32 %v40, %v1684
  %v1810 = vmul.f32 %v41, %v1685
  %v1811 = vmul.f32 %v42, %v1686
  %v1812 = vmul.f32 %v43, %v1687
  %v1813 = vmul.f32 %v44, %v1688
  %v1814 = vmul.f32 %v45, %v1689
  %v1815 = vmul.f32 %v46, %v1690
  %v1816 = vmul.f32 %v47, %v1691
  %v1817 = vmul.f32 %v48, %v1692
  %v1818 = vmul.f32 %v49, %v1693
  %v1819 = vmul.f32 %v50, %v1694
  %v1820 = vmul.f32 %v51, %v1695
  %v1821 = vmul.f32 %v52, %v1696
  %v1822 = vmul.f32 %v53, %v1697
  %v1823 = vmul.f32 %v54, %v1698
  %v1824 = vmul.f32 %v55, %v1699
  %v1825 = vmul.f32 %v56, %v1700
  %v1826 = vmul.f32 %v57, %v1701
  %v1827 = vmul.f32 %v58, %v1702
  %v1828 = vmul.f32 %v59, %v1703
  %v1829 = vmul.f32 %v60, %v1704
  %v1830 = vmul.f32 %v61, %v1705
  %v1831 = vmul.f32 %v62, %v1706
  %v1832 = vmul.f32 %v63, %v1707
  %v1833 = vmul.f32 %v64, %v1708
  %v1834 = vmul.f32 %v65, %v1709
  %v1835 = vmul.f32 %v66, %v1710
  %v1836 = vmul.f32 %v67, %v1711
  %v1837 = vmul.f32 %v68, %v1712
  %v1838 = vmul.f32 %v69, %v1713
  %v1839 = vmul.f32 %v70, %v1714
  %v1840 = vmul.f32 %v71, %v1715
  %v1841 = vmul.f32 %v72, %v1716
  %v1842 = vmul.f32 %v73, %v1717
  %v1843 = vmul.f32 %v74, %v1718
  %v1844 = vmul.f32 %v75, %v1719
  %v1845 = vmul.f32 %v76, %v1720
  %v1846 = vmul.f32 %v77, %v1721
  %v1847 = vmul.f32 %v78, %v1722
  %v1848 = vmul.f32 %v79, %v1723
  %v1849 = vmul.f32 %v80, %v1724
  %v1850 = vmul.f32 %v81, %v1725
  %v1851 = vmul.f32 %v82, %v1726
  %v1852 = vmul.f32 %v83, %v1727
  %v1853 = vmul.f32 %v84, %v1728
  %v1854 = vmul.f32 %v85, %v1729
  %v1855 = vmul.f32 %v86, %v1730
  %v1856 = vmul.f32 %v87, %v1731
  %v1857 = vmul.f32 %v88, %v1732
  %v1858 = vmul.f32 %v89, %v1733
  %v1859 = vmul.f32 %v90, %v1734
  %v1860 = vmul.f32 %v91, %v1735
  %v1861 = vmul.f32 %v92, %v1736
  %v1862 = vmul.f32 %v93, %v1737
  %v1863 = vmul.f32 %v94, %v1738
  %v1864 = vmul.f32 %v95, %v1739
  %v1865 = vmul.f32 %v96, %v1740
  %v1866 = vmul.f32 %v97, %v1741
  %v1867 = vmul.f32 %v98, %v1742
  %v1868 = vmul.f32 %v99, %v1743
  %v1869 = vmul.f32 %v100, %v1744
  %v1870 = vmul.f32 %v101, %v1745
  %v1871 = vmul.f32 %v102, %v1746
  %v1872 = vmul.f32 %v103, %v1747
  %v1873 = vmul.f32 %v104, %v1748
  %v1874 = vmul.f32 %v105, %v1749
  %v1875 = vmul.f32 %v106, %v1750
  %v1876 = vmul.f32 %v107, %v1751
  %v1877 = vmul.f32 %v108, %v1752
  %v1878 = vmul.f32 %v109, %v1753
  %v1879 = vmul.f32 %v110, %v1754
  %v1880 = vmul.f32 %v111, %v1755
  %v1881 = vmul.f32 %v112, %v1756
  %v1882 = vmul.f32 %v113, %v1757
  %v1883 = vmul.f32 %v114, %v1758
  %v1884 = vmul.f32 %v115, %v1759
  %v1885 = vmul.f32 %v116, %v1760
  %v1886 = vmul.f32 %v117, %v1761
  %v1887 = vmul.f32 %v118, %v1762
  %v1888 = vmul.f32 %v119, %v1763
  %v1889 = vmul.f32 %v120, %v1764
  %v1890 = vmul.f32 %v121, %v1765
  %v1891 = vmul.f32 %v122, %v1766
  %v1892 = vmul.f32 %v123, %v1767
  %v1893 = vmul.f32 %v124, %v1768
  %v1894 = vmul.f32 %v125, %v1769
  %v1895 = vmul.f32 %v126, %v1770
  %v1896 = vmul.f32 %v127, %v1771
  %v1897 = vmul.f32 %v128, %v1772
  %v1898 = vmul.f32 %v129, %v1773
  %v1899 = vmul.f32 %v130, %v1774
  %v1900 = vmul.f32 %v131, %v1775
  %v1901 = vmul.f32 %v132, %v1776
  %v1902 = vmul.f32 %v133, %v1777
  %v1903 = vmul.f32 %v134, %v1778
  %v1904 = vmul.f32 %v135, %v1779
  %v1905 = vmul.f32 %v136, %v1780
  %v1906 = vmul.f32 %v137, %v1781
  %v1907 = vmul.f32 %v138, %v1782
  %v1908 = vmul.f32 %v139, %v1783
  %v1909 = vmul.f32 %v140, %v1784
  %v1910 = vmul.f32 %v141, %v1785
  %v1911 = vmul.f32 %v142, %v1786
  %v1912 = vsel %vm393, %v1787, 0.0
  %v1913 = vsel %vm393, %v1788, 0.0
  %v1914 = vadd.f32 %v1912, %v1913
  %v1915 = vsel %vm393, %v1789, 0.0
  %v1916 = vadd.f32 %v1914, %v1915
  %v1917 = vsel %vm393, %v1790, 0.0
  %v1918 = vadd.f32 %v1916, %v1917
  %v1919 = vsel %vm393, %v1791, 0.0
  %v1920 = vadd.f32 %v1918, %v1919
  %v1921 = vsel %vm393, %v1792, 0.0
  %v1922 = vadd.f32 %v1920, %v1921
  %v1923 = vsel %vm393, %v1793, 0.0
  %v1924 = vadd.f32 %v1922, %v1923
  %v1925 = vsel %vm393, %v1794, 0.0
  %v1926 = vadd.f32 %v1924, %v1925
  %v1927 = vsel %vm393, %v1795, 0.0
  %v1928 = vadd.f32 %v1926, %v1927
  %v1929 = vsel %vm393, %v1796, 0.0
  %v1930 = vadd.f32 %v1928, %v1929
  %v1931 = vsel %vm393, %v1797, 0.0
  %v1932 = vadd.f32 %v1930, %v1931
  %v1933 = vsel %vm393, %v1798, 0.0
  %v1934 = vadd.f32 %v1932, %v1933
  %v1935 = vsel %vm393, %v1799, 0.0
  %v1936 = vadd.f32 %v1934, %v1935
  %v1937 = vsel %vm393, %v1800, 0.0
  %v1938 = vadd.f32 %v1936, %v1937
  %v1939 = vsel %vm393, %v1801, 0.0
  %v1940 = vadd.f32 %v1938, %v1939
  %v1941 = vsel %vm393, %v1802, 0.0
  %v1942 = vadd.f32 %v1940, %v1941
  %v1943 = vsel %vm393, %v1803, 0.0
  %v1944 = vadd.f32 %v1942, %v1943
  %v1945 = vsel %vm393, %v1804, 0.0
  %v1946 = vadd.f32 %v1944, %v1945
  %v1947 = vsel %vm393, %v1805, 0.0
  %v1948 = vadd.f32 %v1946, %v1947
  %v1949 = vsel %vm393, %v1806, 0.0
  %v1950 = vadd.f32 %v1948, %v1949
  %v1951 = vsel %vm393, %v1807, 0.0
  %v1952 = vadd.f32 %v1950, %v1951
  %v1953 = vsel %vm393, %v1808, 0.0
  %v1954 = vadd.f32 %v1952, %v1953
  %v1955 = vsel %vm393, %v1809, 0.0
  %v1956 = vadd.f32 %v1954, %v1955
  %v1957 = vsel %vm393, %v1810, 0.0
  %v1958 = vadd.f32 %v1956, %v1957
  %v1959 = vsel %vm393, %v1811, 0.0
  %v1960 = vadd.f32 %v1958, %v1959
  %v1961 = vsel %vm393, %v1812, 0.0
  %v1962 = vadd.f32 %v1960, %v1961
  %v1963 = vsel %vm393, %v1813, 0.0
  %v1964 = vadd.f32 %v1962, %v1963
  %v1965 = vsel %vm393, %v1814, 0.0
  %v1966 = vadd.f32 %v1964, %v1965
  %v1967 = vsel %vm393, %v1815, 0.0
  %v1968 = vadd.f32 %v1966, %v1967
  %v1969 = vsel %vm393, %v1816, 0.0
  %v1970 = vadd.f32 %v1968, %v1969
  %v1971 = vsel %vm393, %v1817, 0.0
  %v1972 = vadd.f32 %v1970, %v1971
  %v1973 = vsel %vm393, %v1818, 0.0
  %v1974 = vadd.f32 %v1972, %v1973
  %v1975 = vsel %vm393, %v1819, 0.0
  %v1976 = vadd.f32 %v1974, %v1975
  %v1977 = vsel %vm393, %v1820, 0.0
  %v1978 = vadd.f32 %v1976, %v1977
  %v1979 = vsel %vm393, %v1821, 0.0
  %v1980 = vadd.f32 %v1978, %v1979
  %v1981 = vsel %vm393, %v1822, 0.0
  %v1982 = vadd.f32 %v1980, %v1981
  %v1983 = vsel %vm393, %v1823, 0.0
  %v1984 = vadd.f32 %v1982, %v1983
  %v1985 = vsel %vm393, %v1824, 0.0
  %v1986 = vadd.f32 %v1984, %v1985
  %v1987 = vsel %vm393, %v1825, 0.0
  %v1988 = vadd.f32 %v1986, %v1987
  %v1989 = vsel %vm393, %v1826, 0.0
  %v1990 = vadd.f32 %v1988, %v1989
  %v1991 = vsel %vm393, %v1827, 0.0
  %v1992 = vadd.f32 %v1990, %v1991
  %v1993 = vsel %vm393, %v1828, 0.0
  %v1994 = vadd.f32 %v1992, %v1993
  %v1995 = vsel %vm393, %v1829, 0.0
  %v1996 = vadd.f32 %v1994, %v1995
  %v1997 = vsel %vm393, %v1830, 0.0
  %v1998 = vadd.f32 %v1996, %v1997
  %v1999 = vsel %vm393, %v1831, 0.0
  %v2000 = vadd.f32 %v1998, %v1999
  %v2001 = vsel %vm393, %v1832, 0.0
  %v2002 = vadd.f32 %v2000, %v2001
  %v2003 = vsel %vm393, %v1833, 0.0
  %v2004 = vadd.f32 %v2002, %v2003
  %v2005 = vsel %vm393, %v1834, 0.0
  %v2006 = vadd.f32 %v2004, %v2005
  %v2007 = vsel %vm393, %v1835, 0.0
  %v2008 = vadd.f32 %v2006, %v2007
  %v2009 = vsel %vm393, %v1836, 0.0
  %v2010 = vadd.f32 %v2008, %v2009
  %v2011 = vsel %vm393, %v1837, 0.0
  %v2012 = vadd.f32 %v2010, %v2011
  %v2013 = vsel %vm393, %v1838, 0.0
  %v2014 = vadd.f32 %v2012, %v2013
  %v2015 = vsel %vm393, %v1839, 0.0
  %v2016 = vadd.f32 %v2014, %v2015
  %v2017 = vsel %vm393, %v1840, 0.0
  %v2018 = vadd.f32 %v2016, %v2017
  %v2019 = vsel %vm393, %v1841, 0.0
  %v2020 = vadd.f32 %v2018, %v2019
  %v2021 = vsel %vm393, %v1842, 0.0
  %v2022 = vadd.f32 %v2020, %v2021
  %v2023 = vsel %vm393, %v1843, 0.0
  %v2024 = vadd.f32 %v2022, %v2023
  %v2025 = vsel %vm393, %v1844, 0.0
  %v2026 = vadd.f32 %v2024, %v2025
  %v2027 = vsel %vm393, %v1845, 0.0
  %v2028 = vadd.f32 %v2026, %v2027
  %v2029 = vsel %vm393, %v1846, 0.0
  %v2030 = vadd.f32 %v2028, %v2029
  %v2031 = vsel %vm393, %v1847, 0.0
  %v2032 = vadd.f32 %v2030, %v2031
  %v2033 = vsel %vm393, %v1848, 0.0
  %v2034 = vadd.f32 %v2032, %v2033
  %v2035 = vsel %vm393, %v1849, 0.0
  %v2036 = vadd.f32 %v2034, %v2035
  %v2037 = vsel %vm393, %v1850, 0.0
  %v2038 = vadd.f32 %v2036, %v2037
  %v2039 = vsel %vm393, %v1851, 0.0
  %v2040 = vadd.f32 %v2038, %v2039
  %v2041 = vsel %vm393, %v1852, 0.0
  %v2042 = vadd.f32 %v2040, %v2041
  %v2043 = vsel %vm393, %v1853, 0.0
  %v2044 = vadd.f32 %v2042, %v2043
  %v2045 = vsel %vm393, %v1854, 0.0
  %v2046 = vadd.f32 %v2044, %v2045
  %v2047 = vsel %vm393, %v1855, 0.0
  %v2048 = vadd.f32 %v2046, %v2047
  %v2049 = vsel %vm393, %v1856, 0.0
  %v2050 = vadd.f32 %v2048, %v2049
  %v2051 = vsel %vm393, %v1857, 0.0
  %v2052 = vadd.f32 %v2050, %v2051
  %v2053 = vsel %vm393, %v1858, 0.0
  %v2054 = vadd.f32 %v2052, %v2053
  %v2055 = vsel %vm393, %v1859, 0.0
  %v2056 = vadd.f32 %v2054, %v2055
  %v2057 = vsel %vm393, %v1860, 0.0
  %v2058 = vadd.f32 %v2056, %v2057
  %v2059 = vsel %vm393, %v1861, 0.0
  %v2060 = vadd.f32 %v2058, %v2059
  %v2061 = vsel %vm393, %v1862, 0.0
  %v2062 = vadd.f32 %v2060, %v2061
  %v2063 = vsel %vm393, %v1863, 0.0
  %v2064 = vadd.f32 %v2062, %v2063
  %v2065 = vsel %vm393, %v1864, 0.0
  %v2066 = vadd.f32 %v2064, %v2065
  %v2067 = vsel %vm393, %v1865, 0.0
  %v2068 = vadd.f32 %v2066, %v2067
  %v2069 = vsel %vm393, %v1866, 0.0
  %v2070 = vadd.f32 %v2068, %v2069
  %v2071 = vsel %vm393, %v1867, 0.0
  %v2072 = vadd.f32 %v2070, %v2071
  %v2073 = vsel %vm393, %v1868, 0.0
  %v2074 = vadd.f32 %v2072, %v2073
  %v2075 = vsel %vm393, %v1869, 0.0
  %v2076 = vadd.f32 %v2074, %v2075
  %v2077 = vsel %vm393, %v1870, 0.0
  %v2078 = vadd.f32 %v2076, %v2077
  %v2079 = vsel %vm393, %v1871, 0.0
  %v2080 = vadd.f32 %v2078, %v2079
  %v2081 = vsel %vm393, %v1872, 0.0
  %v2082 = vadd.f32 %v2080, %v2081
  %v2083 = vsel %vm393, %v1873, 0.0
  %v2084 = vadd.f32 %v2082, %v2083
  %v2085 = vsel %vm393, %v1874, 0.0
  %v2086 = vadd.f32 %v2084, %v2085
  %v2087 = vsel %vm393, %v1875, 0.0
  %v2088 = vadd.f32 %v2086, %v2087
  %v2089 = vsel %vm393, %v1876, 0.0
  %v2090 = vadd.f32 %v2088, %v2089
  %v2091 = vsel %vm393, %v1877, 0.0
  %v2092 = vadd.f32 %v2090, %v2091
  %v2093 = vsel %vm393, %v1878, 0.0
  %v2094 = vadd.f32 %v2092, %v2093
  %v2095 = vsel %vm393, %v1879, 0.0
  %v2096 = vadd.f32 %v2094, %v2095
  %v2097 = vsel %vm393, %v1880, 0.0
  %v2098 = vadd.f32 %v2096, %v2097
  %v2099 = vsel %vm393, %v1881, 0.0
  %v2100 = vadd.f32 %v2098, %v2099
  %v2101 = vsel %vm393, %v1882, 0.0
  %v2102 = vadd.f32 %v2100, %v2101
  %v2103 = vsel %vm393, %v1883, 0.0
  %v2104 = vadd.f32 %v2102, %v2103
  %v2105 = vsel %vm393, %v1884, 0.0
  %v2106 = vadd.f32 %v2104, %v2105
  %v2107 = vsel %vm393, %v1885, 0.0
  %v2108 = vadd.f32 %v2106, %v2107
  %v2109 = vsel %vm393, %v1886, 0.0
  %v2110 = vadd.f32 %v2108, %v2109
  %v2111 = vsel %vm393, %v1887, 0.0
  %v2112 = vadd.f32 %v2110, %v2111
  %v2113 = vsel %vm393, %v1888, 0.0
  %v2114 = vadd.f32 %v2112, %v2113
  %v2115 = vsel %vm393, %v1889, 0.0
  %v2116 = vadd.f32 %v2114, %v2115
  %v2117 = vsel %vm393, %v1890, 0.0
  %v2118 = vadd.f32 %v2116, %v2117
  %v2119 = vsel %vm393, %v1891, 0.0
  %v2120 = vadd.f32 %v2118, %v2119
  %v2121 = vsel %vm393, %v1892, 0.0
  %v2122 = vadd.f32 %v2120, %v2121
  %v2123 = vsel %vm393, %v1893, 0.0
  %v2124 = vadd.f32 %v2122, %v2123
  %v2125 = vsel %vm393, %v1894, 0.0
  %v2126 = vadd.f32 %v2124, %v2125
  %v2127 = vsel %vm393, %v1895, 0.0
  %v2128 = vadd.f32 %v2126, %v2127
  %v2129 = vsel %vm393, %v1896, 0.0
  %v2130 = vadd.f32 %v2128, %v2129
  %v2131 = vsel %vm393, %v1897, 0.0
  %v2132 = vadd.f32 %v2130, %v2131
  %v2133 = vsel %vm393, %v1898, 0.0
  %v2134 = vadd.f32 %v2132, %v2133
  %v2135 = vsel %vm393, %v1899, 0.0
  %v2136 = vadd.f32 %v2134, %v2135
  %v2137 = vsel %vm393, %v1900, 0.0
  %v2138 = vadd.f32 %v2136, %v2137
  %v2139 = vsel %vm393, %v1901, 0.0
  %v2140 = vadd.f32 %v2138, %v2139
  %v2141 = vsel %vm393, %v1902, 0.0
  %v2142 = vadd.f32 %v2140, %v2141
  %v2143 = vsel %vm393, %v1903, 0.0
  %v2144 = vadd.f32 %v2142, %v2143
  %v2145 = vsel %vm393, %v1904, 0.0
  %v2146 = vadd.f32 %v2144, %v2145
  %v2147 = vsel %vm393, %v1905, 0.0
  %v2148 = vadd.f32 %v2146, %v2147
  %v2149 = vsel %vm393, %v1906, 0.0
  %v2150 = vadd.f32 %v2148, %v2149
  %v2151 = vsel %vm393, %v1907, 0.0
  %v2152 = vadd.f32 %v2150, %v2151
  %v2153 = vsel %vm393, %v1908, 0.0
  %v2154 = vadd.f32 %v2152, %v2153
  %v2155 = vsel %vm393, %v1909, 0.0
  %v2156 = vadd.f32 %v2154, %v2155
  %v2157 = vsel %vm393, %v1910, 0.0
  %v2158 = vadd.f32 %v2156, %v2157
  %v2159 = vsel %vm393, %v1911, 0.0
  %v2160 = vadd.f32 %v2158, %v2159
  %v2161 = vrot.slane %v2160, 4
  %v2162 = vadd.f32 %v2160, %v2161
  %v2163 = vrot.slane %v2162, 2
  %v2164 = vadd.f32 %v2162, %v2163
  %v2165 = vrot.slane %v2164, 1
  %v2166 = vadd.f32 %v2164, %v2165
  %vm2167 = vcmask 1040384
  %v2168 = vsel %vm2167, %v648, %v1154
  %vm2169 = vcmask 1041408
  %v2170 = vsel %vm2169, %v2168, %v1660
  %vm2171 = vcmask 1042432
  %v2172 = vsel %vm2171, %v2170, %v2166
  %vm2173 = vcmask 257024
  %v2174 = vsel %vm2173, %v2172, -inf
  %2175 = vmax.xlane.f32.xlu0 %v2174
  %v2176 = vpop.xlane.xlu0 %2175
  %v2177 = vsel %vm2173, %v2172, inf
  %2178 = vmin.xlane.f32.xlu0 %v2177
  %v2179 = vpop.xlane.xlu0 %2178
  %v2180 = vsub.f32 %v2172, %v2179
  %v2181 = vsub.f32 %v2176, %v2179
  %v2182 = vadd.f32 %v2181, 1e-06
  %v2183 = vrcp.pop %v2182
  %v2184 = vmul.f32 %v2180, %v2183
  %v2185 = vld [vmem:[%s2] sm:$0x1]
  %v2187 = vlaneseq
  %v2188 = vshrl.u32 %v2187, 7
  %v2189 = vsub.s32 0, %v2188
  %v2190 = vrot.slane %v2185, %v2189
  %v2192 = vmul.f32 %v2184, %v2190
  %v2193 = vsel %vm2173, %v2192, 0.0
  %2194 = vadd.xlane.f32.xlu0 %v2193
  %v2195 = vpop.xlane.xlu0 %2194
  %s2196 = sld [smem:[#allocation2]]
  %v2197 = vstv %s2196
  %v2198 = vadd.f32 %v2195, %v2197
  %vm2199 = vcmask 1043456
  %v2200 = vsel %vm2199, %v2198, -inf
  %v2201 = vrot.slane %v2200, 4
  %v2202 = vmax.f32 %v2200, %v2201
  %v2203 = vrot.slane %v2202, 2
  %v2204 = vmax.f32 %v2202, %v2203
  %v2205 = vrot.slane %v2204, 1
  %v2206 = vmax.f32 %v2204, %v2205
  %v2207 = vsub.f32 %v2198, %v2206
  %v2208 = vmul.f32 %v2207, 1.442695
  %v2209 = vpow.pop %v2208
  %v2210 = vsel %vm2199, %v2209, 0.0
  %v2211 = vrot.slane %v2210, 4
  %v2212 = vadd.f32 %v2210, %v2211
  %v2213 = vrot.slane %v2212, 2
  %v2214 = vadd.f32 %v2212, %v2213
  %v2215 = vrot.slane %v2214, 1
  %v2216 = vadd.f32 %v2214, %v2215
  %v2217 = vrcp.pop %v2216
  %v2218 = vmul.f32 %v2209, %v2217
  %v2219 = vlaneseq
  %v2220 = vshrl.u32 %v2219, 7
  %v2221 = vsub.s32 0, %v2220
  %v2222 = vrot.slane %v2218, %v2221
  %v2223 = vmul.f32 %v2222, %v143
  %v2224 = vmul.f32 %v2222, %v144
  %v2225 = vmul.f32 %v2222, %v145
  %v2226 = vmul.f32 %v2222, %v146
  %v2227 = vmul.f32 %v2222, %v147
  %v2228 = vmul.f32 %v2222, %v148
  %v2229 = vmul.f32 %v2222, %v149
  %v2230 = vmul.f32 %v2222, %v150
  %v2231 = vmul.f32 %v2222, %v151
  %v2232 = vmul.f32 %v2222, %v152
  %v2233 = vmul.f32 %v2222, %v153
  %v2234 = vmul.f32 %v2222, %v154
  %v2235 = vmul.f32 %v2222, %v155
  %v2236 = vmul.f32 %v2222, %v156
  %v2237 = vmul.f32 %v2222, %v157
  %v2238 = vmul.f32 %v2222, %v158
  %v2239 = vmul.f32 %v2222, %v159
  %v2240 = vmul.f32 %v2222, %v160
  %v2241 = vmul.f32 %v2222, %v161
  %v2242 = vmul.f32 %v2222, %v162
  %v2243 = vmul.f32 %v2222, %v163
  %v2244 = vmul.f32 %v2222, %v164
  %v2245 = vmul.f32 %v2222, %v165
  %v2246 = vmul.f32 %v2222, %v166
  %v2247 = vmul.f32 %v2222, %v167
  %v2248 = vmul.f32 %v2222, %v168
  %v2249 = vmul.f32 %v2222, %v169
  %v2250 = vmul.f32 %v2222, %v170
  %v2251 = vmul.f32 %v2222, %v171
  %v2252 = vmul.f32 %v2222, %v172
  %v2253 = vmul.f32 %v2222, %v173
  %v2254 = vmul.f32 %v2222, %v174
  %v2255 = vmul.f32 %v2222, %v175
  %v2256 = vmul.f32 %v2222, %v176
  %v2257 = vmul.f32 %v2222, %v177
  %v2258 = vmul.f32 %v2222, %v178
  %v2259 = vmul.f32 %v2222, %v179
  %v2260 = vmul.f32 %v2222, %v180
  %v2261 = vmul.f32 %v2222, %v181
  %v2262 = vmul.f32 %v2222, %v182
  %v2263 = vmul.f32 %v2222, %v183
  %v2264 = vmul.f32 %v2222, %v184
  %v2265 = vmul.f32 %v2222, %v185
  %v2266 = vmul.f32 %v2222, %v186
  %v2267 = vmul.f32 %v2222, %v187
  %v2268 = vmul.f32 %v2222, %v188
  %v2269 = vmul.f32 %v2222, %v189
  %v2270 = vmul.f32 %v2222, %v190
  %v2271 = vmul.f32 %v2222, %v191
  %v2272 = vmul.f32 %v2222, %v192
  %v2273 = vmul.f32 %v2222, %v193
  %v2274 = vmul.f32 %v2222, %v194
  %v2275 = vmul.f32 %v2222, %v195
  %v2276 = vmul.f32 %v2222, %v196
  %v2277 = vmul.f32 %v2222, %v197
  %v2278 = vmul.f32 %v2222, %v198
  %v2279 = vmul.f32 %v2222, %v199
  %v2280 = vmul.f32 %v2222, %v200
  %v2281 = vmul.f32 %v2222, %v201
  %v2282 = vmul.f32 %v2222, %v202
  %v2283 = vmul.f32 %v2222, %v203
  %v2284 = vmul.f32 %v2222, %v204
  %v2285 = vmul.f32 %v2222, %v205
  %v2286 = vmul.f32 %v2222, %v206
  %v2287 = vmul.f32 %v2222, %v207
  %v2288 = vmul.f32 %v2222, %v208
  %v2289 = vmul.f32 %v2222, %v209
  %v2290 = vmul.f32 %v2222, %v210
  %v2291 = vmul.f32 %v2222, %v211
  %v2292 = vmul.f32 %v2222, %v212
  %v2293 = vmul.f32 %v2222, %v213
  %v2294 = vmul.f32 %v2222, %v214
  %v2295 = vmul.f32 %v2222, %v215
  %v2296 = vmul.f32 %v2222, %v216
  %v2297 = vmul.f32 %v2222, %v217
  %v2298 = vmul.f32 %v2222, %v218
  %v2299 = vmul.f32 %v2222, %v219
  %v2300 = vmul.f32 %v2222, %v220
  %v2301 = vmul.f32 %v2222, %v221
  %v2302 = vmul.f32 %v2222, %v222
  %v2303 = vmul.f32 %v2222, %v223
  %v2304 = vmul.f32 %v2222, %v224
  %v2305 = vmul.f32 %v2222, %v225
  %v2306 = vmul.f32 %v2222, %v226
  %v2307 = vmul.f32 %v2222, %v227
  %v2308 = vmul.f32 %v2222, %v228
  %v2309 = vmul.f32 %v2222, %v229
  %v2310 = vmul.f32 %v2222, %v230
  %v2311 = vmul.f32 %v2222, %v231
  %v2312 = vmul.f32 %v2222, %v232
  %v2313 = vmul.f32 %v2222, %v233
  %v2314 = vmul.f32 %v2222, %v234
  %v2315 = vmul.f32 %v2222, %v235
  %v2316 = vmul.f32 %v2222, %v236
  %v2317 = vmul.f32 %v2222, %v237
  %v2318 = vmul.f32 %v2222, %v238
  %v2319 = vmul.f32 %v2222, %v239
  %v2320 = vmul.f32 %v2222, %v240
  %v2321 = vmul.f32 %v2222, %v241
  %v2322 = vmul.f32 %v2222, %v242
  %v2323 = vmul.f32 %v2222, %v243
  %v2324 = vmul.f32 %v2222, %v244
  %v2325 = vmul.f32 %v2222, %v245
  %v2326 = vmul.f32 %v2222, %v246
  %v2327 = vmul.f32 %v2222, %v247
  %v2328 = vmul.f32 %v2222, %v248
  %v2329 = vmul.f32 %v2222, %v249
  %v2330 = vmul.f32 %v2222, %v250
  %v2331 = vmul.f32 %v2222, %v251
  %v2332 = vmul.f32 %v2222, %v252
  %v2333 = vmul.f32 %v2222, %v253
  %v2334 = vmul.f32 %v2222, %v254
  %v2335 = vmul.f32 %v2222, %v255
  %v2336 = vmul.f32 %v2222, %v256
  %v2337 = vmul.f32 %v2222, %v257
  %v2338 = vmul.f32 %v2222, %v258
  %v2339 = vmul.f32 %v2222, %v259
  %v2340 = vmul.f32 %v2222, %v260
  %v2341 = vmul.f32 %v2222, %v261
  %v2342 = vmul.f32 %v2222, %v262
  %v2343 = vmul.f32 %v2222, %v263
  %v2344 = vmul.f32 %v2222, %v264
  %v2345 = vmul.f32 %v2222, %v265
  %v2346 = vmul.f32 %v2222, %v266
  %v2347 = vmul.f32 %v2222, %v267
  %v2348 = vadd.f32 %v18, %v2223
  %v2349 = vadd.f32 %v19, %v2224
  %v2350 = vadd.f32 %v20, %v2225
  %v2351 = vadd.f32 %v21, %v2226
  %v2352 = vadd.f32 %v22, %v2227
  %v2353 = vadd.f32 %v23, %v2228
  %v2354 = vadd.f32 %v24, %v2229
  %v2355 = vadd.f32 %v25, %v2230
  %v2356 = vadd.f32 %v26, %v2231
  %v2357 = vadd.f32 %v27, %v2232
  %v2358 = vadd.f32 %v28, %v2233
  %v2359 = vadd.f32 %v29, %v2234
  %v2360 = vadd.f32 %v30, %v2235
  %v2361 = vadd.f32 %v31, %v2236
  %v2362 = vadd.f32 %v32, %v2237
  %v2363 = vadd.f32 %v33, %v2238
  %v2364 = vadd.f32 %v34, %v2239
  %v2365 = vadd.f32 %v35, %v2240
  %v2366 = vadd.f32 %v36, %v2241
  %v2367 = vadd.f32 %v37, %v2242
  %v2368 = vadd.f32 %v38, %v2243
  %v2369 = vadd.f32 %v39, %v2244
  %v2370 = vadd.f32 %v40, %v2245
  %v2371 = vadd.f32 %v41, %v2246
  %v2372 = vadd.f32 %v42, %v2247
  %v2373 = vadd.f32 %v43, %v2248
  %v2374 = vadd.f32 %v44, %v2249
  %v2375 = vadd.f32 %v45, %v2250
  %v2376 = vadd.f32 %v46, %v2251
  %v2377 = vadd.f32 %v47, %v2252
  %v2378 = vadd.f32 %v48, %v2253
  %v2379 = vadd.f32 %v49, %v2254
  %v2380 = vadd.f32 %v50, %v2255
  %v2381 = vadd.f32 %v51, %v2256
  %v2382 = vadd.f32 %v52, %v2257
  %v2383 = vadd.f32 %v53, %v2258
  %v2384 = vadd.f32 %v54, %v2259
  %v2385 = vadd.f32 %v55, %v2260
  %v2386 = vadd.f32 %v56, %v2261
  %v2387 = vadd.f32 %v57, %v2262
  %v2388 = vadd.f32 %v58, %v2263
  %v2389 = vadd.f32 %v59, %v2264
  %v2390 = vadd.f32 %v60, %v2265
  %v2391 = vadd.f32 %v61, %v2266
  %v2392 = vadd.f32 %v62, %v2267
  %v2393 = vadd.f32 %v63, %v2268
  %v2394 = vadd.f32 %v64, %v2269
  %v2395 = vadd.f32 %v65, %v2270
  %v2396 = vadd.f32 %v66, %v2271
  %v2397 = vadd.f32 %v67, %v2272
  %v2398 = vadd.f32 %v68, %v2273
  %v2399 = vadd.f32 %v69, %v2274
  %v2400 = vadd.f32 %v70, %v2275
  %v2401 = vadd.f32 %v71, %v2276
  %v2402 = vadd.f32 %v72, %v2277
  %v2403 = vadd.f32 %v73, %v2278
  %v2404 = vadd.f32 %v74, %v2279
  %v2405 = vadd.f32 %v75, %v2280
  %v2406 = vadd.f32 %v76, %v2281
  %v2407 = vadd.f32 %v77, %v2282
  %v2408 = vadd.f32 %v78, %v2283
  %v2409 = vadd.f32 %v79, %v2284
  %v2410 = vadd.f32 %v80, %v2285
  %v2411 = vadd.f32 %v81, %v2286
  %v2412 = vadd.f32 %v82, %v2287
  %v2413 = vadd.f32 %v83, %v2288
  %v2414 = vadd.f32 %v84, %v2289
  %v2415 = vadd.f32 %v85, %v2290
  %v2416 = vadd.f32 %v86, %v2291
  %v2417 = vadd.f32 %v87, %v2292
  %v2418 = vadd.f32 %v88, %v2293
  %v2419 = vadd.f32 %v89, %v2294
  %v2420 = vadd.f32 %v90, %v2295
  %v2421 = vadd.f32 %v91, %v2296
  %v2422 = vadd.f32 %v92, %v2297
  %v2423 = vadd.f32 %v93, %v2298
  %v2424 = vadd.f32 %v94, %v2299
  %v2425 = vadd.f32 %v95, %v2300
  %v2426 = vadd.f32 %v96, %v2301
  %v2427 = vadd.f32 %v97, %v2302
  %v2428 = vadd.f32 %v98, %v2303
  %v2429 = vadd.f32 %v99, %v2304
  %v2430 = vadd.f32 %v100, %v2305
  %v2431 = vadd.f32 %v101, %v2306
  %v2432 = vadd.f32 %v102, %v2307
  %v2433 = vadd.f32 %v103, %v2308
  %v2434 = vadd.f32 %v104, %v2309
  %v2435 = vadd.f32 %v105, %v2310
  %v2436 = vadd.f32 %v106, %v2311
  %v2437 = vadd.f32 %v107, %v2312
  %v2438 = vadd.f32 %v108, %v2313
  %v2439 = vadd.f32 %v109, %v2314
  %v2440 = vadd.f32 %v110, %v2315
  %v2441 = vadd.f32 %v111, %v2316
  %v2442 = vadd.f32 %v112, %v2317
  %v2443 = vadd.f32 %v113, %v2318
  %v2444 = vadd.f32 %v114, %v2319
  %v2445 = vadd.f32 %v115, %v2320
  %v2446 = vadd.f32 %v116, %v2321
  %v2447 = vadd.f32 %v117, %v2322
  %v2448 = vadd.f32 %v118, %v2323
  %v2449 = vadd.f32 %v119, %v2324
  %v2450 = vadd.f32 %v120, %v2325
  %v2451 = vadd.f32 %v121, %v2326
  %v2452 = vadd.f32 %v122, %v2327
  %v2453 = vadd.f32 %v123, %v2328
  %v2454 = vadd.f32 %v124, %v2329
  %v2455 = vadd.f32 %v125, %v2330
  %v2456 = vadd.f32 %v126, %v2331
  %v2457 = vadd.f32 %v127, %v2332
  %v2458 = vadd.f32 %v128, %v2333
  %v2459 = vadd.f32 %v129, %v2334
  %v2460 = vadd.f32 %v130, %v2335
  %v2461 = vadd.f32 %v131, %v2336
  %v2462 = vadd.f32 %v132, %v2337
  %v2463 = vadd.f32 %v133, %v2338
  %v2464 = vadd.f32 %v134, %v2339
  %v2465 = vadd.f32 %v135, %v2340
  %v2466 = vadd.f32 %v136, %v2341
  %v2467 = vadd.f32 %v137, %v2342
  %v2468 = vadd.f32 %v138, %v2343
  %v2469 = vadd.f32 %v139, %v2344
  %v2470 = vadd.f32 %v140, %v2345
  %v2471 = vadd.f32 %v141, %v2346
  %v2472 = vadd.f32 %v142, %v2347
  %v2473 = vlaneseq
  %v2474 = vshrl.u32 %v2473, 7
  %v2475 = vsub.s32 1, %v2474
  %v2476 = vrot.slane %v2218, %v2475
  %v2477 = vmul.f32 %v2476, %v650
  %v2478 = vmul.f32 %v2476, %v651
  %v2479 = vmul.f32 %v2476, %v652
  %v2480 = vmul.f32 %v2476, %v653
  %v2481 = vmul.f32 %v2476, %v654
  %v2482 = vmul.f32 %v2476, %v655
  %v2483 = vmul.f32 %v2476, %v656
  %v2484 = vmul.f32 %v2476, %v657
  %v2485 = vmul.f32 %v2476, %v658
  %v2486 = vmul.f32 %v2476, %v659
  %v2487 = vmul.f32 %v2476, %v660
  %v2488 = vmul.f32 %v2476, %v661
  %v2489 = vmul.f32 %v2476, %v662
  %v2490 = vmul.f32 %v2476, %v663
  %v2491 = vmul.f32 %v2476, %v664
  %v2492 = vmul.f32 %v2476, %v665
  %v2493 = vmul.f32 %v2476, %v666
  %v2494 = vmul.f32 %v2476, %v667
  %v2495 = vmul.f32 %v2476, %v668
  %v2496 = vmul.f32 %v2476, %v669
  %v2497 = vmul.f32 %v2476, %v670
  %v2498 = vmul.f32 %v2476, %v671
  %v2499 = vmul.f32 %v2476, %v672
  %v2500 = vmul.f32 %v2476, %v673
  %v2501 = vmul.f32 %v2476, %v674
  %v2502 = vmul.f32 %v2476, %v675
  %v2503 = vmul.f32 %v2476, %v676
  %v2504 = vmul.f32 %v2476, %v677
  %v2505 = vmul.f32 %v2476, %v678
  %v2506 = vmul.f32 %v2476, %v679
  %v2507 = vmul.f32 %v2476, %v680
  %v2508 = vmul.f32 %v2476, %v681
  %v2509 = vmul.f32 %v2476, %v682
  %v2510 = vmul.f32 %v2476, %v683
  %v2511 = vmul.f32 %v2476, %v684
  %v2512 = vmul.f32 %v2476, %v685
  %v2513 = vmul.f32 %v2476, %v686
  %v2514 = vmul.f32 %v2476, %v687
  %v2515 = vmul.f32 %v2476, %v688
  %v2516 = vmul.f32 %v2476, %v689
  %v2517 = vmul.f32 %v2476, %v690
  %v2518 = vmul.f32 %v2476, %v691
  %v2519 = vmul.f32 %v2476, %v692
  %v2520 = vmul.f32 %v2476, %v693
  %v2521 = vmul.f32 %v2476, %v694
  %v2522 = vmul.f32 %v2476, %v695
  %v2523 = vmul.f32 %v2476, %v696
  %v2524 = vmul.f32 %v2476, %v697
  %v2525 = vmul.f32 %v2476, %v698
  %v2526 = vmul.f32 %v2476, %v699
  %v2527 = vmul.f32 %v2476, %v700
  %v2528 = vmul.f32 %v2476, %v701
  %v2529 = vmul.f32 %v2476, %v702
  %v2530 = vmul.f32 %v2476, %v703
  %v2531 = vmul.f32 %v2476, %v704
  %v2532 = vmul.f32 %v2476, %v705
  %v2533 = vmul.f32 %v2476, %v706
  %v2534 = vmul.f32 %v2476, %v707
  %v2535 = vmul.f32 %v2476, %v708
  %v2536 = vmul.f32 %v2476, %v709
  %v2537 = vmul.f32 %v2476, %v710
  %v2538 = vmul.f32 %v2476, %v711
  %v2539 = vmul.f32 %v2476, %v712
  %v2540 = vmul.f32 %v2476, %v713
  %v2541 = vmul.f32 %v2476, %v714
  %v2542 = vmul.f32 %v2476, %v715
  %v2543 = vmul.f32 %v2476, %v716
  %v2544 = vmul.f32 %v2476, %v717
  %v2545 = vmul.f32 %v2476, %v718
  %v2546 = vmul.f32 %v2476, %v719
  %v2547 = vmul.f32 %v2476, %v720
  %v2548 = vmul.f32 %v2476, %v721
  %v2549 = vmul.f32 %v2476, %v722
  %v2550 = vmul.f32 %v2476, %v723
  %v2551 = vmul.f32 %v2476, %v724
  %v2552 = vmul.f32 %v2476, %v725
  %v2553 = vmul.f32 %v2476, %v726
  %v2554 = vmul.f32 %v2476, %v727
  %v2555 = vmul.f32 %v2476, %v728
  %v2556 = vmul.f32 %v2476, %v729
  %v2557 = vmul.f32 %v2476, %v730
  %v2558 = vmul.f32 %v2476, %v731
  %v2559 = vmul.f32 %v2476, %v732
  %v2560 = vmul.f32 %v2476, %v733
  %v2561 = vmul.f32 %v2476, %v734
  %v2562 = vmul.f32 %v2476, %v735
  %v2563 = vmul.f32 %v2476, %v736
  %v2564 = vmul.f32 %v2476, %v737
  %v2565 = vmul.f32 %v2476, %v738
  %v2566 = vmul.f32 %v2476, %v739
  %v2567 = vmul.f32 %v2476, %v740
  %v2568 = vmul.f32 %v2476, %v741
  %v2569 = vmul.f32 %v2476, %v742
  %v2570 = vmul.f32 %v2476, %v743
  %v2571 = vmul.f32 %v2476, %v744
  %v2572 = vmul.f32 %v2476, %v745
  %v2573 = vmul.f32 %v2476, %v746
  %v2574 = vmul.f32 %v2476, %v747
  %v2575 = vmul.f32 %v2476, %v748
  %v2576 = vmul.f32 %v2476, %v749
  %v2577 = vmul.f32 %v2476, %v750
  %v2578 = vmul.f32 %v2476, %v751
  %v2579 = vmul.f32 %v2476, %v752
  %v2580 = vmul.f32 %v2476, %v753
  %v2581 = vmul.f32 %v2476, %v754
  %v2582 = vmul.f32 %v2476, %v755
  %v2583 = vmul.f32 %v2476, %v756
  %v2584 = vmul.f32 %v2476, %v757
  %v2585 = vmul.f32 %v2476, %v758
  %v2586 = vmul.f32 %v2476, %v759
  %v2587 = vmul.f32 %v2476, %v760
  %v2588 = vmul.f32 %v2476, %v761
  %v2589 = vmul.f32 %v2476, %v762
  %v2590 = vmul.f32 %v2476, %v763
  %v2591 = vmul.f32 %v2476, %v764
  %v2592 = vmul.f32 %v2476, %v765
  %v2593 = vmul.f32 %v2476, %v766
  %v2594 = vmul.f32 %v2476, %v767
  %v2595 = vmul.f32 %v2476, %v768
  %v2596 = vmul.f32 %v2476, %v769
  %v2597 = vmul.f32 %v2476, %v770
  %v2598 = vmul.f32 %v2476, %v771
  %v2599 = vmul.f32 %v2476, %v772
  %v2600 = vmul.f32 %v2476, %v773
  %v2601 = vmul.f32 %v2476, %v774
  %v2602 = vadd.f32 %v2348, %v2477
  %v2603 = vadd.f32 %v2349, %v2478
  %v2604 = vadd.f32 %v2350, %v2479
  %v2605 = vadd.f32 %v2351, %v2480
  %v2606 = vadd.f32 %v2352, %v2481
  %v2607 = vadd.f32 %v2353, %v2482
  %v2608 = vadd.f32 %v2354, %v2483
  %v2609 = vadd.f32 %v2355, %v2484
  %v2610 = vadd.f32 %v2356, %v2485
  %v2611 = vadd.f32 %v2357, %v2486
  %v2612 = vadd.f32 %v2358, %v2487
  %v2613 = vadd.f32 %v2359, %v2488
  %v2614 = vadd.f32 %v2360, %v2489
  %v2615 = vadd.f32 %v2361, %v2490
  %v2616 = vadd.f32 %v2362, %v2491
  %v2617 = vadd.f32 %v2363, %v2492
  %v2618 = vadd.f32 %v2364, %v2493
  %v2619 = vadd.f32 %v2365, %v2494
  %v2620 = vadd.f32 %v2366, %v2495
  %v2621 = vadd.f32 %v2367, %v2496
  %v2622 = vadd.f32 %v2368, %v2497
  %v2623 = vadd.f32 %v2369, %v2498
  %v2624 = vadd.f32 %v2370, %v2499
  %v2625 = vadd.f32 %v2371, %v2500
  %v2626 = vadd.f32 %v2372, %v2501
  %v2627 = vadd.f32 %v2373, %v2502
  %v2628 = vadd.f32 %v2374, %v2503
  %v2629 = vadd.f32 %v2375, %v2504
  %v2630 = vadd.f32 %v2376, %v2505
  %v2631 = vadd.f32 %v2377, %v2506
  %v2632 = vadd.f32 %v2378, %v2507
  %v2633 = vadd.f32 %v2379, %v2508
  %v2634 = vadd.f32 %v2380, %v2509
  %v2635 = vadd.f32 %v2381, %v2510
  %v2636 = vadd.f32 %v2382, %v2511
  %v2637 = vadd.f32 %v2383, %v2512
  %v2638 = vadd.f32 %v2384, %v2513
  %v2639 = vadd.f32 %v2385, %v2514
  %v2640 = vadd.f32 %v2386, %v2515
  %v2641 = vadd.f32 %v2387, %v2516
  %v2642 = vadd.f32 %v2388, %v2517
  %v2643 = vadd.f32 %v2389, %v2518
  %v2644 = vadd.f32 %v2390, %v2519
  %v2645 = vadd.f32 %v2391, %v2520
  %v2646 = vadd.f32 %v2392, %v2521
  %v2647 = vadd.f32 %v2393, %v2522
  %v2648 = vadd.f32 %v2394, %v2523
  %v2649 = vadd.f32 %v2395, %v2524
  %v2650 = vadd.f32 %v2396, %v2525
  %v2651 = vadd.f32 %v2397, %v2526
  %v2652 = vadd.f32 %v2398, %v2527
  %v2653 = vadd.f32 %v2399, %v2528
  %v2654 = vadd.f32 %v2400, %v2529
  %v2655 = vadd.f32 %v2401, %v2530
  %v2656 = vadd.f32 %v2402, %v2531
  %v2657 = vadd.f32 %v2403, %v2532
  %v2658 = vadd.f32 %v2404, %v2533
  %v2659 = vadd.f32 %v2405, %v2534
  %v2660 = vadd.f32 %v2406, %v2535
  %v2661 = vadd.f32 %v2407, %v2536
  %v2662 = vadd.f32 %v2408, %v2537
  %v2663 = vadd.f32 %v2409, %v2538
  %v2664 = vadd.f32 %v2410, %v2539
  %v2665 = vadd.f32 %v2411, %v2540
  %v2666 = vadd.f32 %v2412, %v2541
  %v2667 = vadd.f32 %v2413, %v2542
  %v2668 = vadd.f32 %v2414, %v2543
  %v2669 = vadd.f32 %v2415, %v2544
  %v2670 = vadd.f32 %v2416, %v2545
  %v2671 = vadd.f32 %v2417, %v2546
  %v2672 = vadd.f32 %v2418, %v2547
  %v2673 = vadd.f32 %v2419, %v2548
  %v2674 = vadd.f32 %v2420, %v2549
  %v2675 = vadd.f32 %v2421, %v2550
  %v2676 = vadd.f32 %v2422, %v2551
  %v2677 = vadd.f32 %v2423, %v2552
  %v2678 = vadd.f32 %v2424, %v2553
  %v2679 = vadd.f32 %v2425, %v2554
  %v2680 = vadd.f32 %v2426, %v2555
  %v2681 = vadd.f32 %v2427, %v2556
  %v2682 = vadd.f32 %v2428, %v2557
  %v2683 = vadd.f32 %v2429, %v2558
  %v2684 = vadd.f32 %v2430, %v2559
  %v2685 = vadd.f32 %v2431, %v2560
  %v2686 = vadd.f32 %v2432, %v2561
  %v2687 = vadd.f32 %v2433, %v2562
  %v2688 = vadd.f32 %v2434, %v2563
  %v2689 = vadd.f32 %v2435, %v2564
  %v2690 = vadd.f32 %v2436, %v2565
  %v2691 = vadd.f32 %v2437, %v2566
  %v2692 = vadd.f32 %v2438, %v2567
  %v2693 = vadd.f32 %v2439, %v2568
  %v2694 = vadd.f32 %v2440, %v2569
  %v2695 = vadd.f32 %v2441, %v2570
  %v2696 = vadd.f32 %v2442, %v2571
  %v2697 = vadd.f32 %v2443, %v2572
  %v2698 = vadd.f32 %v2444, %v2573
  %v2699 = vadd.f32 %v2445, %v2574
  %v2700 = vadd.f32 %v2446, %v2575
  %v2701 = vadd.f32 %v2447, %v2576
  %v2702 = vadd.f32 %v2448, %v2577
  %v2703 = vadd.f32 %v2449, %v2578
  %v2704 = vadd.f32 %v2450, %v2579
  %v2705 = vadd.f32 %v2451, %v2580
  %v2706 = vadd.f32 %v2452, %v2581
  %v2707 = vadd.f32 %v2453, %v2582
  %v2708 = vadd.f32 %v2454, %v2583
  %v2709 = vadd.f32 %v2455, %v2584
  %v2710 = vadd.f32 %v2456, %v2585
  %v2711 = vadd.f32 %v2457, %v2586
  %v2712 = vadd.f32 %v2458, %v2587
  %v2713 = vadd.f32 %v2459, %v2588
  %v2714 = vadd.f32 %v2460, %v2589
  %v2715 = vadd.f32 %v2461, %v2590
  %v2716 = vadd.f32 %v2462, %v2591
  %v2717 = vadd.f32 %v2463, %v2592
  %v2718 = vadd.f32 %v2464, %v2593
  %v2719 = vadd.f32 %v2465, %v2594
  %v2720 = vadd.f32 %v2466, %v2595
  %v2721 = vadd.f32 %v2467, %v2596
  %v2722 = vadd.f32 %v2468, %v2597
  %v2723 = vadd.f32 %v2469, %v2598
  %v2724 = vadd.f32 %v2470, %v2599
  %v2725 = vadd.f32 %v2471, %v2600
  %v2726 = vadd.f32 %v2472, %v2601
  %v2727 = vlaneseq
  %v2728 = vshrl.u32 %v2727, 7
  %v2729 = vsub.s32 2, %v2728
  %v2730 = vrot.slane %v2218, %v2729
  %v2731 = vmul.f32 %v2730, %v1156
  %v2732 = vmul.f32 %v2730, %v1157
  %v2733 = vmul.f32 %v2730, %v1158
  %v2734 = vmul.f32 %v2730, %v1159
  %v2735 = vmul.f32 %v2730, %v1160
  %v2736 = vmul.f32 %v2730, %v1161
  %v2737 = vmul.f32 %v2730, %v1162
  %v2738 = vmul.f32 %v2730, %v1163
  %v2739 = vmul.f32 %v2730, %v1164
  %v2740 = vmul.f32 %v2730, %v1165
  %v2741 = vmul.f32 %v2730, %v1166
  %v2742 = vmul.f32 %v2730, %v1167
  %v2743 = vmul.f32 %v2730, %v1168
  %v2744 = vmul.f32 %v2730, %v1169
  %v2745 = vmul.f32 %v2730, %v1170
  %v2746 = vmul.f32 %v2730, %v1171
  %v2747 = vmul.f32 %v2730, %v1172
  %v2748 = vmul.f32 %v2730, %v1173
  %v2749 = vmul.f32 %v2730, %v1174
  %v2750 = vmul.f32 %v2730, %v1175
  %v2751 = vmul.f32 %v2730, %v1176
  %v2752 = vmul.f32 %v2730, %v1177
  %v2753 = vmul.f32 %v2730, %v1178
  %v2754 = vmul.f32 %v2730, %v1179
  %v2755 = vmul.f32 %v2730, %v1180
  %v2756 = vmul.f32 %v2730, %v1181
  %v2757 = vmul.f32 %v2730, %v1182
  %v2758 = vmul.f32 %v2730, %v1183
  %v2759 = vmul.f32 %v2730, %v1184
  %v2760 = vmul.f32 %v2730, %v1185
  %v2761 = vmul.f32 %v2730, %v1186
  %v2762 = vmul.f32 %v2730, %v1187
  %v2763 = vmul.f32 %v2730, %v1188
  %v2764 = vmul.f32 %v2730, %v1189
  %v2765 = vmul.f32 %v2730, %v1190
  %v2766 = vmul.f32 %v2730, %v1191
  %v2767 = vmul.f32 %v2730, %v1192
  %v2768 = vmul.f32 %v2730, %v1193
  %v2769 = vmul.f32 %v2730, %v1194
  %v2770 = vmul.f32 %v2730, %v1195
  %v2771 = vmul.f32 %v2730, %v1196
  %v2772 = vmul.f32 %v2730, %v1197
  %v2773 = vmul.f32 %v2730, %v1198
  %v2774 = vmul.f32 %v2730, %v1199
  %v2775 = vmul.f32 %v2730, %v1200
  %v2776 = vmul.f32 %v2730, %v1201
  %v2777 = vmul.f32 %v2730, %v1202
  %v2778 = vmul.f32 %v2730, %v1203
  %v2779 = vmul.f32 %v2730, %v1204
  %v2780 = vmul.f32 %v2730, %v1205
  %v2781 = vmul.f32 %v2730, %v1206
  %v2782 = vmul.f32 %v2730, %v1207
  %v2783 = vmul.f32 %v2730, %v1208
  %v2784 = vmul.f32 %v2730, %v1209
  %v2785 = vmul.f32 %v2730, %v1210
  %v2786 = vmul.f32 %v2730, %v1211
  %v2787 = vmul.f32 %v2730, %v1212
  %v2788 = vmul.f32 %v2730, %v1213
  %v2789 = vmul.f32 %v2730, %v1214
  %v2790 = vmul.f32 %v2730, %v1215
  %v2791 = vmul.f32 %v2730, %v1216
  %v2792 = vmul.f32 %v2730, %v1217
  %v2793 = vmul.f32 %v2730, %v1218
  %v2794 = vmul.f32 %v2730, %v1219
  %v2795 = vmul.f32 %v2730, %v1220
  %v2796 = vmul.f32 %v2730, %v1221
  %v2797 = vmul.f32 %v2730, %v1222
  %v2798 = vmul.f32 %v2730, %v1223
  %v2799 = vmul.f32 %v2730, %v1224
  %v2800 = vmul.f32 %v2730, %v1225
  %v2801 = vmul.f32 %v2730, %v1226
  %v2802 = vmul.f32 %v2730, %v1227
  %v2803 = vmul.f32 %v2730, %v1228
  %v2804 = vmul.f32 %v2730, %v1229
  %v2805 = vmul.f32 %v2730, %v1230
  %v2806 = vmul.f32 %v2730, %v1231
  %v2807 = vmul.f32 %v2730, %v1232
  %v2808 = vmul.f32 %v2730, %v1233
  %v2809 = vmul.f32 %v2730, %v1234
  %v2810 = vmul.f32 %v2730, %v1235
  %v2811 = vmul.f32 %v2730, %v1236
  %v2812 = vmul.f32 %v2730, %v1237
  %v2813 = vmul.f32 %v2730, %v1238
  %v2814 = vmul.f32 %v2730, %v1239
  %v2815 = vmul.f32 %v2730, %v1240
  %v2816 = vmul.f32 %v2730, %v1241
  %v2817 = vmul.f32 %v2730, %v1242
  %v2818 = vmul.f32 %v2730, %v1243
  %v2819 = vmul.f32 %v2730, %v1244
  %v2820 = vmul.f32 %v2730, %v1245
  %v2821 = vmul.f32 %v2730, %v1246
  %v2822 = vmul.f32 %v2730, %v1247
  %v2823 = vmul.f32 %v2730, %v1248
  %v2824 = vmul.f32 %v2730, %v1249
  %v2825 = vmul.f32 %v2730, %v1250
  %v2826 = vmul.f32 %v2730, %v1251
  %v2827 = vmul.f32 %v2730, %v1252
  %v2828 = vmul.f32 %v2730, %v1253
  %v2829 = vmul.f32 %v2730, %v1254
  %v2830 = vmul.f32 %v2730, %v1255
  %v2831 = vmul.f32 %v2730, %v1256
  %v2832 = vmul.f32 %v2730, %v1257
  %v2833 = vmul.f32 %v2730, %v1258
  %v2834 = vmul.f32 %v2730, %v1259
  %v2835 = vmul.f32 %v2730, %v1260
  %v2836 = vmul.f32 %v2730, %v1261
  %v2837 = vmul.f32 %v2730, %v1262
  %v2838 = vmul.f32 %v2730, %v1263
  %v2839 = vmul.f32 %v2730, %v1264
  %v2840 = vmul.f32 %v2730, %v1265
  %v2841 = vmul.f32 %v2730, %v1266
  %v2842 = vmul.f32 %v2730, %v1267
  %v2843 = vmul.f32 %v2730, %v1268
  %v2844 = vmul.f32 %v2730, %v1269
  %v2845 = vmul.f32 %v2730, %v1270
  %v2846 = vmul.f32 %v2730, %v1271
  %v2847 = vmul.f32 %v2730, %v1272
  %v2848 = vmul.f32 %v2730, %v1273
  %v2849 = vmul.f32 %v2730, %v1274
  %v2850 = vmul.f32 %v2730, %v1275
  %v2851 = vmul.f32 %v2730, %v1276
  %v2852 = vmul.f32 %v2730, %v1277
  %v2853 = vmul.f32 %v2730, %v1278
  %v2854 = vmul.f32 %v2730, %v1279
  %v2855 = vmul.f32 %v2730, %v1280
  %v2856 = vadd.f32 %v2602, %v2731
  %v2857 = vadd.f32 %v2603, %v2732
  %v2858 = vadd.f32 %v2604, %v2733
  %v2859 = vadd.f32 %v2605, %v2734
  %v2860 = vadd.f32 %v2606, %v2735
  %v2861 = vadd.f32 %v2607, %v2736
  %v2862 = vadd.f32 %v2608, %v2737
  %v2863 = vadd.f32 %v2609, %v2738
  %v2864 = vadd.f32 %v2610, %v2739
  %v2865 = vadd.f32 %v2611, %v2740
  %v2866 = vadd.f32 %v2612, %v2741
  %v2867 = vadd.f32 %v2613, %v2742
  %v2868 = vadd.f32 %v2614, %v2743
  %v2869 = vadd.f32 %v2615, %v2744
  %v2870 = vadd.f32 %v2616, %v2745
  %v2871 = vadd.f32 %v2617, %v2746
  %v2872 = vadd.f32 %v2618, %v2747
  %v2873 = vadd.f32 %v2619, %v2748
  %v2874 = vadd.f32 %v2620, %v2749
  %v2875 = vadd.f32 %v2621, %v2750
  %v2876 = vadd.f32 %v2622, %v2751
  %v2877 = vadd.f32 %v2623, %v2752
  %v2878 = vadd.f32 %v2624, %v2753
  %v2879 = vadd.f32 %v2625, %v2754
  %v2880 = vadd.f32 %v2626, %v2755
  %v2881 = vadd.f32 %v2627, %v2756
  %v2882 = vadd.f32 %v2628, %v2757
  %v2883 = vadd.f32 %v2629, %v2758
  %v2884 = vadd.f32 %v2630, %v2759
  %v2885 = vadd.f32 %v2631, %v2760
  %v2886 = vadd.f32 %v2632, %v2761
  %v2887 = vadd.f32 %v2633, %v2762
  %v2888 = vadd.f32 %v2634, %v2763
  %v2889 = vadd.f32 %v2635, %v2764
  %v2890 = vadd.f32 %v2636, %v2765
  %v2891 = vadd.f32 %v2637, %v2766
  %v2892 = vadd.f32 %v2638, %v2767
  %v2893 = vadd.f32 %v2639, %v2768
  %v2894 = vadd.f32 %v2640, %v2769
  %v2895 = vadd.f32 %v2641, %v2770
  %v2896 = vadd.f32 %v2642, %v2771
  %v2897 = vadd.f32 %v2643, %v2772
  %v2898 = vadd.f32 %v2644, %v2773
  %v2899 = vadd.f32 %v2645, %v2774
  %v2900 = vadd.f32 %v2646, %v2775
  %v2901 = vadd.f32 %v2647, %v2776
  %v2902 = vadd.f32 %v2648, %v2777
  %v2903 = vadd.f32 %v2649, %v2778
  %v2904 = vadd.f32 %v2650, %v2779
  %v2905 = vadd.f32 %v2651, %v2780
  %v2906 = vadd.f32 %v2652, %v2781
  %v2907 = vadd.f32 %v2653, %v2782
  %v2908 = vadd.f32 %v2654, %v2783
  %v2909 = vadd.f32 %v2655, %v2784
  %v2910 = vadd.f32 %v2656, %v2785
  %v2911 = vadd.f32 %v2657, %v2786
  %v2912 = vadd.f32 %v2658, %v2787
  %v2913 = vadd.f32 %v2659, %v2788
  %v2914 = vadd.f32 %v2660, %v2789
  %v2915 = vadd.f32 %v2661, %v2790
  %v2916 = vadd.f32 %v2662, %v2791
  %v2917 = vadd.f32 %v2663, %v2792
  %v2918 = vadd.f32 %v2664, %v2793
  %v2919 = vadd.f32 %v2665, %v2794
  %v2920 = vadd.f32 %v2666, %v2795
  %v2921 = vadd.f32 %v2667, %v2796
  %v2922 = vadd.f32 %v2668, %v2797
  %v2923 = vadd.f32 %v2669, %v2798
  %v2924 = vadd.f32 %v2670, %v2799
  %v2925 = vadd.f32 %v2671, %v2800
  %v2926 = vadd.f32 %v2672, %v2801
  %v2927 = vadd.f32 %v2673, %v2802
  %v2928 = vadd.f32 %v2674, %v2803
  %v2929 = vadd.f32 %v2675, %v2804
  %v2930 = vadd.f32 %v2676, %v2805
  %v2931 = vadd.f32 %v2677, %v2806
  %v2932 = vadd.f32 %v2678, %v2807
  %v2933 = vadd.f32 %v2679, %v2808
  %v2934 = vadd.f32 %v2680, %v2809
  %v2935 = vadd.f32 %v2681, %v2810
  %v2936 = vadd.f32 %v2682, %v2811
  %v2937 = vadd.f32 %v2683, %v2812
  %v2938 = vadd.f32 %v2684, %v2813
  %v2939 = vadd.f32 %v2685, %v2814
  %v2940 = vadd.f32 %v2686, %v2815
  %v2941 = vadd.f32 %v2687, %v2816
  %v2942 = vadd.f32 %v2688, %v2817
  %v2943 = vadd.f32 %v2689, %v2818
  %v2944 = vadd.f32 %v2690, %v2819
  %v2945 = vadd.f32 %v2691, %v2820
  %v2946 = vadd.f32 %v2692, %v2821
  %v2947 = vadd.f32 %v2693, %v2822
  %v2948 = vadd.f32 %v2694, %v2823
  %v2949 = vadd.f32 %v2695, %v2824
  %v2950 = vadd.f32 %v2696, %v2825
  %v2951 = vadd.f32 %v2697, %v2826
  %v2952 = vadd.f32 %v2698, %v2827
  %v2953 = vadd.f32 %v2699, %v2828
  %v2954 = vadd.f32 %v2700, %v2829
  %v2955 = vadd.f32 %v2701, %v2830
  %v2956 = vadd.f32 %v2702, %v2831
  %v2957 = vadd.f32 %v2703, %v2832
  %v2958 = vadd.f32 %v2704, %v2833
  %v2959 = vadd.f32 %v2705, %v2834
  %v2960 = vadd.f32 %v2706, %v2835
  %v2961 = vadd.f32 %v2707, %v2836
  %v2962 = vadd.f32 %v2708, %v2837
  %v2963 = vadd.f32 %v2709, %v2838
  %v2964 = vadd.f32 %v2710, %v2839
  %v2965 = vadd.f32 %v2711, %v2840
  %v2966 = vadd.f32 %v2712, %v2841
  %v2967 = vadd.f32 %v2713, %v2842
  %v2968 = vadd.f32 %v2714, %v2843
  %v2969 = vadd.f32 %v2715, %v2844
  %v2970 = vadd.f32 %v2716, %v2845
  %v2971 = vadd.f32 %v2717, %v2846
  %v2972 = vadd.f32 %v2718, %v2847
  %v2973 = vadd.f32 %v2719, %v2848
  %v2974 = vadd.f32 %v2720, %v2849
  %v2975 = vadd.f32 %v2721, %v2850
  %v2976 = vadd.f32 %v2722, %v2851
  %v2977 = vadd.f32 %v2723, %v2852
  %v2978 = vadd.f32 %v2724, %v2853
  %v2979 = vadd.f32 %v2725, %v2854
  %v2980 = vadd.f32 %v2726, %v2855
  %v2981 = vlaneseq
  %v2982 = vshrl.u32 %v2981, 7
  %v2983 = vsub.s32 3, %v2982
  %v2984 = vrot.slane %v2218, %v2983
  %v2985 = vmul.f32 %v2984, %v1662
  %v2986 = vmul.f32 %v2984, %v1663
  %v2987 = vmul.f32 %v2984, %v1664
  %v2988 = vmul.f32 %v2984, %v1665
  %v2989 = vmul.f32 %v2984, %v1666
  %v2990 = vmul.f32 %v2984, %v1667
  %v2991 = vmul.f32 %v2984, %v1668
  %v2992 = vmul.f32 %v2984, %v1669
  %v2993 = vmul.f32 %v2984, %v1670
  %v2994 = vmul.f32 %v2984, %v1671
  %v2995 = vmul.f32 %v2984, %v1672
  %v2996 = vmul.f32 %v2984, %v1673
  %v2997 = vmul.f32 %v2984, %v1674
  %v2998 = vmul.f32 %v2984, %v1675
  %v2999 = vmul.f32 %v2984, %v1676
  %v3000 = vmul.f32 %v2984, %v1677
  %v3001 = vmul.f32 %v2984, %v1678
  %v3002 = vmul.f32 %v2984, %v1679
  %v3003 = vmul.f32 %v2984, %v1680
  %v3004 = vmul.f32 %v2984, %v1681
  %v3005 = vmul.f32 %v2984, %v1682
  %v3006 = vmul.f32 %v2984, %v1683
  %v3007 = vmul.f32 %v2984, %v1684
  %v3008 = vmul.f32 %v2984, %v1685
  %v3009 = vmul.f32 %v2984, %v1686
  %v3010 = vmul.f32 %v2984, %v1687
  %v3011 = vmul.f32 %v2984, %v1688
  %v3012 = vmul.f32 %v2984, %v1689
  %v3013 = vmul.f32 %v2984, %v1690
  %v3014 = vmul.f32 %v2984, %v1691
  %v3015 = vmul.f32 %v2984, %v1692
  %v3016 = vmul.f32 %v2984, %v1693
  %v3017 = vmul.f32 %v2984, %v1694
  %v3018 = vmul.f32 %v2984, %v1695
  %v3019 = vmul.f32 %v2984, %v1696
  %v3020 = vmul.f32 %v2984, %v1697
  %v3021 = vmul.f32 %v2984, %v1698
  %v3022 = vmul.f32 %v2984, %v1699
  %v3023 = vmul.f32 %v2984, %v1700
  %v3024 = vmul.f32 %v2984, %v1701
  %v3025 = vmul.f32 %v2984, %v1702
  %v3026 = vmul.f32 %v2984, %v1703
  %v3027 = vmul.f32 %v2984, %v1704
  %v3028 = vmul.f32 %v2984, %v1705
  %v3029 = vmul.f32 %v2984, %v1706
  %v3030 = vmul.f32 %v2984, %v1707
  %v3031 = vmul.f32 %v2984, %v1708
  %v3032 = vmul.f32 %v2984, %v1709
  %v3033 = vmul.f32 %v2984, %v1710
  %v3034 = vmul.f32 %v2984, %v1711
  %v3035 = vmul.f32 %v2984, %v1712
  %v3036 = vmul.f32 %v2984, %v1713
  %v3037 = vmul.f32 %v2984, %v1714
  %v3038 = vmul.f32 %v2984, %v1715
  %v3039 = vmul.f32 %v2984, %v1716
  %v3040 = vmul.f32 %v2984, %v1717
  %v3041 = vmul.f32 %v2984, %v1718
  %v3042 = vmul.f32 %v2984, %v1719
  %v3043 = vmul.f32 %v2984, %v1720
  %v3044 = vmul.f32 %v2984, %v1721
  %v3045 = vmul.f32 %v2984, %v1722
  %v3046 = vmul.f32 %v2984, %v1723
  %v3047 = vmul.f32 %v2984, %v1724
  %v3048 = vmul.f32 %v2984, %v1725
  %v3049 = vmul.f32 %v2984, %v1726
  %v3050 = vmul.f32 %v2984, %v1727
  %v3051 = vmul.f32 %v2984, %v1728
  %v3052 = vmul.f32 %v2984, %v1729
  %v3053 = vmul.f32 %v2984, %v1730
  %v3054 = vmul.f32 %v2984, %v1731
  %v3055 = vmul.f32 %v2984, %v1732
  %v3056 = vmul.f32 %v2984, %v1733
  %v3057 = vmul.f32 %v2984, %v1734
  %v3058 = vmul.f32 %v2984, %v1735
  %v3059 = vmul.f32 %v2984, %v1736
  %v3060 = vmul.f32 %v2984, %v1737
  %v3061 = vmul.f32 %v2984, %v1738
  %v3062 = vmul.f32 %v2984, %v1739
  %v3063 = vmul.f32 %v2984, %v1740
  %v3064 = vmul.f32 %v2984, %v1741
  %v3065 = vmul.f32 %v2984, %v1742
  %v3066 = vmul.f32 %v2984, %v1743
  %v3067 = vmul.f32 %v2984, %v1744
  %v3068 = vmul.f32 %v2984, %v1745
  %v3069 = vmul.f32 %v2984, %v1746
  %v3070 = vmul.f32 %v2984, %v1747
  %v3071 = vmul.f32 %v2984, %v1748
  %v3072 = vmul.f32 %v2984, %v1749
  %v3073 = vmul.f32 %v2984, %v1750
  %v3074 = vmul.f32 %v2984, %v1751
  %v3075 = vmul.f32 %v2984, %v1752
  %v3076 = vmul.f32 %v2984, %v1753
  %v3077 = vmul.f32 %v2984, %v1754
  %v3078 = vmul.f32 %v2984, %v1755
  %v3079 = vmul.f32 %v2984, %v1756
  %v3080 = vmul.f32 %v2984, %v1757
  %v3081 = vmul.f32 %v2984, %v1758
  %v3082 = vmul.f32 %v2984, %v1759
  %v3083 = vmul.f32 %v2984, %v1760
  %v3084 = vmul.f32 %v2984, %v1761
  %v3085 = vmul.f32 %v2984, %v1762
  %v3086 = vmul.f32 %v2984, %v1763
  %v3087 = vmul.f32 %v2984, %v1764
  %v3088 = vmul.f32 %v2984, %v1765
  %v3089 = vmul.f32 %v2984, %v1766
  %v3090 = vmul.f32 %v2984, %v1767
  %v3091 = vmul.f32 %v2984, %v1768
  %v3092 = vmul.f32 %v2984, %v1769
  %v3093 = vmul.f32 %v2984, %v1770
  %v3094 = vmul.f32 %v2984, %v1771
  %v3095 = vmul.f32 %v2984, %v1772
  %v3096 = vmul.f32 %v2984, %v1773
  %v3097 = vmul.f32 %v2984, %v1774
  %v3098 = vmul.f32 %v2984, %v1775
  %v3099 = vmul.f32 %v2984, %v1776
  %v3100 = vmul.f32 %v2984, %v1777
  %v3101 = vmul.f32 %v2984, %v1778
  %v3102 = vmul.f32 %v2984, %v1779
  %v3103 = vmul.f32 %v2984, %v1780
  %v3104 = vmul.f32 %v2984, %v1781
  %v3105 = vmul.f32 %v2984, %v1782
  %v3106 = vmul.f32 %v2984, %v1783
  %v3107 = vmul.f32 %v2984, %v1784
  %v3108 = vmul.f32 %v2984, %v1785
  %v3109 = vmul.f32 %v2984, %v1786
  %v3110 = vadd.f32 %v2856, %v2985
  %v3111 = vadd.f32 %v2857, %v2986
  %v3112 = vadd.f32 %v2858, %v2987
  %v3113 = vadd.f32 %v2859, %v2988
  %v3114 = vadd.f32 %v2860, %v2989
  %v3115 = vadd.f32 %v2861, %v2990
  %v3116 = vadd.f32 %v2862, %v2991
  %v3117 = vadd.f32 %v2863, %v2992
  %v3118 = vadd.f32 %v2864, %v2993
  %v3119 = vadd.f32 %v2865, %v2994
  %v3120 = vadd.f32 %v2866, %v2995
  %v3121 = vadd.f32 %v2867, %v2996
  %v3122 = vadd.f32 %v2868, %v2997
  %v3123 = vadd.f32 %v2869, %v2998
  %v3124 = vadd.f32 %v2870, %v2999
  %v3125 = vadd.f32 %v2871, %v3000
  %v3126 = vadd.f32 %v2872, %v3001
  %v3127 = vadd.f32 %v2873, %v3002
  %v3128 = vadd.f32 %v2874, %v3003
  %v3129 = vadd.f32 %v2875, %v3004
  %v3130 = vadd.f32 %v2876, %v3005
  %v3131 = vadd.f32 %v2877, %v3006
  %v3132 = vadd.f32 %v2878, %v3007
  %v3133 = vadd.f32 %v2879, %v3008
  %v3134 = vadd.f32 %v2880, %v3009
  %v3135 = vadd.f32 %v2881, %v3010
  %v3136 = vadd.f32 %v2882, %v3011
  %v3137 = vadd.f32 %v2883, %v3012
  %v3138 = vadd.f32 %v2884, %v3013
  %v3139 = vadd.f32 %v2885, %v3014
  %v3140 = vadd.f32 %v2886, %v3015
  %v3141 = vadd.f32 %v2887, %v3016
  %v3142 = vadd.f32 %v2888, %v3017
  %v3143 = vadd.f32 %v2889, %v3018
  %v3144 = vadd.f32 %v2890, %v3019
  %v3145 = vadd.f32 %v2891, %v3020
  %v3146 = vadd.f32 %v2892, %v3021
  %v3147 = vadd.f32 %v2893, %v3022
  %v3148 = vadd.f32 %v2894, %v3023
  %v3149 = vadd.f32 %v2895, %v3024
  %v3150 = vadd.f32 %v2896, %v3025
  %v3151 = vadd.f32 %v2897, %v3026
  %v3152 = vadd.f32 %v2898, %v3027
  %v3153 = vadd.f32 %v2899, %v3028
  %v3154 = vadd.f32 %v2900, %v3029
  %v3155 = vadd.f32 %v2901, %v3030
  %v3156 = vadd.f32 %v2902, %v3031
  %v3157 = vadd.f32 %v2903, %v3032
  %v3158 = vadd.f32 %v2904, %v3033
  %v3159 = vadd.f32 %v2905, %v3034
  %v3160 = vadd.f32 %v2906, %v3035
  %v3161 = vadd.f32 %v2907, %v3036
  %v3162 = vadd.f32 %v2908, %v3037
  %v3163 = vadd.f32 %v2909, %v3038
  %v3164 = vadd.f32 %v2910, %v3039
  %v3165 = vadd.f32 %v2911, %v3040
  %v3166 = vadd.f32 %v2912, %v3041
  %v3167 = vadd.f32 %v2913, %v3042
  %v3168 = vadd.f32 %v2914, %v3043
  %v3169 = vadd.f32 %v2915, %v3044
  %v3170 = vadd.f32 %v2916, %v3045
  %v3171 = vadd.f32 %v2917, %v3046
  %v3172 = vadd.f32 %v2918, %v3047
  %v3173 = vadd.f32 %v2919, %v3048
  %v3174 = vadd.f32 %v2920, %v3049
  %v3175 = vadd.f32 %v2921, %v3050
  %v3176 = vadd.f32 %v2922, %v3051
  %v3177 = vadd.f32 %v2923, %v3052
  %v3178 = vadd.f32 %v2924, %v3053
  %v3179 = vadd.f32 %v2925, %v3054
  %v3180 = vadd.f32 %v2926, %v3055
  %v3181 = vadd.f32 %v2927, %v3056
  %v3182 = vadd.f32 %v2928, %v3057
  %v3183 = vadd.f32 %v2929, %v3058
  %v3184 = vadd.f32 %v2930, %v3059
  %v3185 = vadd.f32 %v2931, %v3060
  %v3186 = vadd.f32 %v2932, %v3061
  %v3187 = vadd.f32 %v2933, %v3062
  %v3188 = vadd.f32 %v2934, %v3063
  %v3189 = vadd.f32 %v2935, %v3064
  %v3190 = vadd.f32 %v2936, %v3065
  %v3191 = vadd.f32 %v2937, %v3066
  %v3192 = vadd.f32 %v2938, %v3067
  %v3193 = vadd.f32 %v2939, %v3068
  %v3194 = vadd.f32 %v2940, %v3069
  %v3195 = vadd.f32 %v2941, %v3070
  %v3196 = vadd.f32 %v2942, %v3071
  %v3197 = vadd.f32 %v2943, %v3072
  %v3198 = vadd.f32 %v2944, %v3073
  %v3199 = vadd.f32 %v2945, %v3074
  %v3200 = vadd.f32 %v2946, %v3075
  %v3201 = vadd.f32 %v2947, %v3076
  %v3202 = vadd.f32 %v2948, %v3077
  %v3203 = vadd.f32 %v2949, %v3078
  %v3204 = vadd.f32 %v2950, %v3079
  %v3205 = vadd.f32 %v2951, %v3080
  %v3206 = vadd.f32 %v2952, %v3081
  %v3207 = vadd.f32 %v2953, %v3082
  %v3208 = vadd.f32 %v2954, %v3083
  %v3209 = vadd.f32 %v2955, %v3084
  %v3210 = vadd.f32 %v2956, %v3085
  %v3211 = vadd.f32 %v2957, %v3086
  %v3212 = vadd.f32 %v2958, %v3087
  %v3213 = vadd.f32 %v2959, %v3088
  %v3214 = vadd.f32 %v2960, %v3089
  %v3215 = vadd.f32 %v2961, %v3090
  %v3216 = vadd.f32 %v2962, %v3091
  %v3217 = vadd.f32 %v2963, %v3092
  %v3218 = vadd.f32 %v2964, %v3093
  %v3219 = vadd.f32 %v2965, %v3094
  %v3220 = vadd.f32 %v2966, %v3095
  %v3221 = vadd.f32 %v2967, %v3096
  %v3222 = vadd.f32 %v2968, %v3097
  %v3223 = vadd.f32 %v2969, %v3098
  %v3224 = vadd.f32 %v2970, %v3099
  %v3225 = vadd.f32 %v2971, %v3100
  %v3226 = vadd.f32 %v2972, %v3101
  %v3227 = vadd.f32 %v2973, %v3102
  %v3228 = vadd.f32 %v2974, %v3103
  %v3229 = vadd.f32 %v2975, %v3104
  %v3230 = vadd.f32 %v2976, %v3105
  %v3231 = vadd.f32 %v2977, %v3106
  %v3232 = vadd.f32 %v2978, %v3107
  %v3233 = vadd.f32 %v2979, %v3108
  %v3234 = vadd.f32 %v2980, %v3109
  %3235 = vst.msk [vmem:[%s4] sm:$0xff] %vm393, %v3110
  %3236 = vst.msk [vmem:[%s4 + $0x8] sm:$0xff] %vm393, %v3111
  %3237 = vst.msk [vmem:[%s4 + $0x10] sm:$0xff] %vm393, %v3112
  %3238 = vst.msk [vmem:[%s4 + $0x18] sm:$0xff] %vm393, %v3113
  %3239 = vst.msk [vmem:[%s4 + $0x20] sm:$0xff] %vm393, %v3114
  %3240 = vst.msk [vmem:[%s4 + $0x28] sm:$0xff] %vm393, %v3115
  %3241 = vst.msk [vmem:[%s4 + $0x30] sm:$0xff] %vm393, %v3116
  %3242 = vst.msk [vmem:[%s4 + $0x38] sm:$0xff] %vm393, %v3117
  %3243 = vst.msk [vmem:[%s4 + $0x40] sm:$0xff] %vm393, %v3118
  %3244 = vst.msk [vmem:[%s4 + $0x48] sm:$0xff] %vm393, %v3119
  %3245 = vst.msk [vmem:[%s4 + $0x50] sm:$0xff] %vm393, %v3120
  %3246 = vst.msk [vmem:[%s4 + $0x58] sm:$0xff] %vm393, %v3121
  %3247 = vst.msk [vmem:[%s4 + $0x60] sm:$0xff] %vm393, %v3122
  %3248 = vst.msk [vmem:[%s4 + $0x68] sm:$0xff] %vm393, %v3123
  %3249 = vst.msk [vmem:[%s4 + $0x70] sm:$0xff] %vm393, %v3124
  %3250 = vst.msk [vmem:[%s4 + $0x78] sm:$0xff] %vm393, %v3125
  %3251 = vst.msk [vmem:[%s4 + $0x80] sm:$0xff] %vm393, %v3126
  %3252 = vst.msk [vmem:[%s4 + $0x88] sm:$0xff] %vm393, %v3127
  %3253 = vst.msk [vmem:[%s4 + $0x90] sm:$0xff] %vm393, %v3128
  %3254 = vst.msk [vmem:[%s4 + $0x98] sm:$0xff] %vm393, %v3129
  %3255 = vst.msk [vmem:[%s4 + $0xa0] sm:$0xff] %vm393, %v3130
  %3256 = vst.msk [vmem:[%s4 + $0xa8] sm:$0xff] %vm393, %v3131
  %3257 = vst.msk [vmem:[%s4 + $0xb0] sm:$0xff] %vm393, %v3132
  %3258 = vst.msk [vmem:[%s4 + $0xb8] sm:$0xff] %vm393, %v3133
  %3259 = vst.msk [vmem:[%s4 + $0xc0] sm:$0xff] %vm393, %v3134
  %3260 = vst.msk [vmem:[%s4 + $0xc8] sm:$0xff] %vm393, %v3135
  %3261 = vst.msk [vmem:[%s4 + $0xd0] sm:$0xff] %vm393, %v3136
  %3262 = vst.msk [vmem:[%s4 + $0xd8] sm:$0xff] %vm393, %v3137
  %3263 = vst.msk [vmem:[%s4 + $0xe0] sm:$0xff] %vm393, %v3138
  %3264 = vst.msk [vmem:[%s4 + $0xe8] sm:$0xff] %vm393, %v3139
  %3265 = vst.msk [vmem:[%s4 + $0xf0] sm:$0xff] %vm393, %v3140
  %3266 = vst.msk [vmem:[%s4 + $0xf8] sm:$0xff] %vm393, %v3141
  %3267 = vst.msk [vmem:[%s4 + $0x100] sm:$0xff] %vm393, %v3142
  %3268 = vst.msk [vmem:[%s4 + $0x108] sm:$0xff] %vm393, %v3143
  %3269 = vst.msk [vmem:[%s4 + $0x110] sm:$0xff] %vm393, %v3144
  %3270 = vst.msk [vmem:[%s4 + $0x118] sm:$0xff] %vm393, %v3145
  %3271 = vst.msk [vmem:[%s4 + $0x120] sm:$0xff] %vm393, %v3146
  %3272 = vst.msk [vmem:[%s4 + $0x128] sm:$0xff] %vm393, %v3147
  %3273 = vst.msk [vmem:[%s4 + $0x130] sm:$0xff] %vm393, %v3148
  %3274 = vst.msk [vmem:[%s4 + $0x138] sm:$0xff] %vm393, %v3149
  %3275 = vst.msk [vmem:[%s4 + $0x140] sm:$0xff] %vm393, %v3150
  %3276 = vst.msk [vmem:[%s4 + $0x148] sm:$0xff] %vm393, %v3151
  %3277 = vst.msk [vmem:[%s4 + $0x150] sm:$0xff] %vm393, %v3152
  %3278 = vst.msk [vmem:[%s4 + $0x158] sm:$0xff] %vm393, %v3153
  %3279 = vst.msk [vmem:[%s4 + $0x160] sm:$0xff] %vm393, %v3154
  %3280 = vst.msk [vmem:[%s4 + $0x168] sm:$0xff] %vm393, %v3155
  %3281 = vst.msk [vmem:[%s4 + $0x170] sm:$0xff] %vm393, %v3156
  %3282 = vst.msk [vmem:[%s4 + $0x178] sm:$0xff] %vm393, %v3157
  %3283 = vst.msk [vmem:[%s4 + $0x180] sm:$0xff] %vm393, %v3158
  %3284 = vst.msk [vmem:[%s4 + $0x188] sm:$0xff] %vm393, %v3159
  %3285 = vst.msk [vmem:[%s4 + $0x190] sm:$0xff] %vm393, %v3160
  %3286 = vst.msk [vmem:[%s4 + $0x198] sm:$0xff] %vm393, %v3161
  %3287 = vst.msk [vmem:[%s4 + $0x1a0] sm:$0xff] %vm393, %v3162
  %3288 = vst.msk [vmem:[%s4 + $0x1a8] sm:$0xff] %vm393, %v3163
  %3289 = vst.msk [vmem:[%s4 + $0x1b0] sm:$0xff] %vm393, %v3164
  %3290 = vst.msk [vmem:[%s4 + $0x1b8] sm:$0xff] %vm393, %v3165
  %3291 = vst.msk [vmem:[%s4 + $0x1c0] sm:$0xff] %vm393, %v3166
  %3292 = vst.msk [vmem:[%s4 + $0x1c8] sm:$0xff] %vm393, %v3167
  %3293 = vst.msk [vmem:[%s4 + $0x1d0] sm:$0xff] %vm393, %v3168
  %3294 = vst.msk [vmem:[%s4 + $0x1d8] sm:$0xff] %vm393, %v3169
  %3295 = vst.msk [vmem:[%s4 + $0x1e0] sm:$0xff] %vm393, %v3170
  %3296 = vst.msk [vmem:[%s4 + $0x1e8] sm:$0xff] %vm393, %v3171
  %3297 = vst.msk [vmem:[%s4 + $0x1f0] sm:$0xff] %vm393, %v3172
  %3298 = vst.msk [vmem:[%s4 + $0x1f8] sm:$0xff] %vm393, %v3173
  %3299 = vst.msk [vmem:[%s4 + $0x200] sm:$0xff] %vm393, %v3174
  %3300 = vst.msk [vmem:[%s4 + $0x208] sm:$0xff] %vm393, %v3175
  %3301 = vst.msk [vmem:[%s4 + $0x210] sm:$0xff] %vm393, %v3176
  %3302 = vst.msk [vmem:[%s4 + $0x218] sm:$0xff] %vm393, %v3177
  %3303 = vst.msk [vmem:[%s4 + $0x220] sm:$0xff] %vm393, %v3178
  %3304 = vst.msk [vmem:[%s4 + $0x228] sm:$0xff] %vm393, %v3179
  %3305 = vst.msk [vmem:[%s4 + $0x230] sm:$0xff] %vm393, %v3180
  %3306 = vst.msk [vmem:[%s4 + $0x238] sm:$0xff] %vm393, %v3181
  %3307 = vst.msk [vmem:[%s4 + $0x240] sm:$0xff] %vm393, %v3182
  %3308 = vst.msk [vmem:[%s4 + $0x248] sm:$0xff] %vm393, %v3183
  %3309 = vst.msk [vmem:[%s4 + $0x250] sm:$0xff] %vm393, %v3184
  %3310 = vst.msk [vmem:[%s4 + $0x258] sm:$0xff] %vm393, %v3185
  %3311 = vst.msk [vmem:[%s4 + $0x260] sm:$0xff] %vm393, %v3186
  %3312 = vst.msk [vmem:[%s4 + $0x268] sm:$0xff] %vm393, %v3187
  %3313 = vst.msk [vmem:[%s4 + $0x270] sm:$0xff] %vm393, %v3188
  %3314 = vst.msk [vmem:[%s4 + $0x278] sm:$0xff] %vm393, %v3189
  %3315 = vst.msk [vmem:[%s4 + $0x280] sm:$0xff] %vm393, %v3190
  %3316 = vst.msk [vmem:[%s4 + $0x288] sm:$0xff] %vm393, %v3191
  %3317 = vst.msk [vmem:[%s4 + $0x290] sm:$0xff] %vm393, %v3192
  %3318 = vst.msk [vmem:[%s4 + $0x298] sm:$0xff] %vm393, %v3193
  %3319 = vst.msk [vmem:[%s4 + $0x2a0] sm:$0xff] %vm393, %v3194
  %3320 = vst.msk [vmem:[%s4 + $0x2a8] sm:$0xff] %vm393, %v3195
  %3321 = vst.msk [vmem:[%s4 + $0x2b0] sm:$0xff] %vm393, %v3196
  %3322 = vst.msk [vmem:[%s4 + $0x2b8] sm:$0xff] %vm393, %v3197
  %3323 = vst.msk [vmem:[%s4 + $0x2c0] sm:$0xff] %vm393, %v3198
  %3324 = vst.msk [vmem:[%s4 + $0x2c8] sm:$0xff] %vm393, %v3199
  %3325 = vst.msk [vmem:[%s4 + $0x2d0] sm:$0xff] %vm393, %v3200
  %3326 = vst.msk [vmem:[%s4 + $0x2d8] sm:$0xff] %vm393, %v3201
  %3327 = vst.msk [vmem:[%s4 + $0x2e0] sm:$0xff] %vm393, %v3202
  %3328 = vst.msk [vmem:[%s4 + $0x2e8] sm:$0xff] %vm393, %v3203
  %3329 = vst.msk [vmem:[%s4 + $0x2f0] sm:$0xff] %vm393, %v3204
  %3330 = vst.msk [vmem:[%s4 + $0x2f8] sm:$0xff] %vm393, %v3205
  %3331 = vst.msk [vmem:[%s4 + $0x300] sm:$0xff] %vm393, %v3206
  %3332 = vst.msk [vmem:[%s4 + $0x308] sm:$0xff] %vm393, %v3207
  %3333 = vst.msk [vmem:[%s4 + $0x310] sm:$0xff] %vm393, %v3208
  %3334 = vst.msk [vmem:[%s4 + $0x318] sm:$0xff] %vm393, %v3209
  %3335 = vst.msk [vmem:[%s4 + $0x320] sm:$0xff] %vm393, %v3210
  %3336 = vst.msk [vmem:[%s4 + $0x328] sm:$0xff] %vm393, %v3211
  %3337 = vst.msk [vmem:[%s4 + $0x330] sm:$0xff] %vm393, %v3212
  %3338 = vst.msk [vmem:[%s4 + $0x338] sm:$0xff] %vm393, %v3213
  %3339 = vst.msk [vmem:[%s4 + $0x340] sm:$0xff] %vm393, %v3214
  %3340 = vst.msk [vmem:[%s4 + $0x348] sm:$0xff] %vm393, %v3215
  %3341 = vst.msk [vmem:[%s4 + $0x350] sm:$0xff] %vm393, %v3216
  %3342 = vst.msk [vmem:[%s4 + $0x358] sm:$0xff] %vm393, %v3217
  %3343 = vst.msk [vmem:[%s4 + $0x360] sm:$0xff] %vm393, %v3218
  %3344 = vst.msk [vmem:[%s4 + $0x368] sm:$0xff] %vm393, %v3219
  %3345 = vst.msk [vmem:[%s4 + $0x370] sm:$0xff] %vm393, %v3220
  %3346 = vst.msk [vmem:[%s4 + $0x378] sm:$0xff] %vm393, %v3221
  %3347 = vst.msk [vmem:[%s4 + $0x380] sm:$0xff] %vm393, %v3222
  %3348 = vst.msk [vmem:[%s4 + $0x388] sm:$0xff] %vm393, %v3223
  %3349 = vst.msk [vmem:[%s4 + $0x390] sm:$0xff] %vm393, %v3224
  %3350 = vst.msk [vmem:[%s4 + $0x398] sm:$0xff] %vm393, %v3225
  %3351 = vst.msk [vmem:[%s4 + $0x3a0] sm:$0xff] %vm393, %v3226
  %3352 = vst.msk [vmem:[%s4 + $0x3a8] sm:$0xff] %vm393, %v3227
  %3353 = vst.msk [vmem:[%s4 + $0x3b0] sm:$0xff] %vm393, %v3228
  %3354 = vst.msk [vmem:[%s4 + $0x3b8] sm:$0xff] %vm393, %v3229
  %3355 = vst.msk [vmem:[%s4 + $0x3c0] sm:$0xff] %vm393, %v3230
  %3356 = vst.msk [vmem:[%s4 + $0x3c8] sm:$0xff] %vm393, %v3231
  %3357 = vst.msk [vmem:[%s4 + $0x3d0] sm:$0xff] %vm393, %v3232
  %3358 = vst.msk [vmem:[%s4 + $0x3d8] sm:$0xff] %vm393, %v3233
  %3359 = vst.msk [vmem:[%s4 + $0x3e0] sm:$0xff] %vm393, %v3234
  // Predicated region
  $region18: #{attention_module.1} parent=0 // pred_check
    _
  $region19: #{attention_module.1} parent=0 // pred_check_branch
    %3361 = sbr.rel (0) target = $region21
  $region20: #{attention_module.1} parent=0 // pred_region
    _
  $region21: #{attention_module.1} parent=0 // pred_fallthru
    _
  // Predicated region
  $region22: #{attention_module.1} parent=0 // pred_check
    _
  $region23: #{attention_module.1} parent=0 // pred_check_branch
    %3363 = sbr.rel (0) target = $region25
  $region24: #{attention_module.1} parent=0 // pred_region
    _
  $region25: #{attention_module.1} parent=0 // pred_fallthru
    _

</llo_original>
